<compile_context>
chip_gen: v6e
topology: v6e:2x2x1
jax: 0.10.0
libtpu: 0.0.40
codegen_flags: <defaults>
</compile_context>

<pallas_src>
import jax
import jax.numpy as jnp
from jax.experimental import pallas as pl
from jax.experimental.pallas import tpu as pltpu

LANE = 128
SUBLANE = 8


def _round_up(x, m):
    return ((x + m - 1) // m) * m


def _vmem_capacity_bytes():
    try:
        return int(pltpu.get_tpu_info().vmem_capacity_bytes)
    except Exception:
        return 64 * 1024 * 1024  # assume the smallest (v7x) if the query fails


def _pick_tile_h(H, W_pad, cin_p, cmid_p, cout_p, compute_dtype, out_dtype,
                 vmem_bytes, max_tile_h=None):
    """Largest divisor of H whose working set fits a conservative VMEM budget."""
    budget = int(vmem_bytes * 0.40)
    cb = jnp.dtype(compute_dtype).itemsize
    ob = jnp.dtype(out_dtype).itemsize
    w_bytes = 2 * 9 * (cin_p * cmid_p + cmid_p * cout_p) * cb  # weights, 2x buf

    def fits(th):
        m1 = (th + 2) * W_pad
        m2 = th * W_pad
        s1 = (th + 5) * W_pad
        xbuf = 2 * s1 * cin_p * cb                     # double-buffered slab
        mbuf = 2 * m1 * LANE * 4 // SUBLANE            # mask (lane-padded)
        hbuf = (th + 3) * W_pad * cmid_p * cb          # intermediate scratch
        outb = 2 * m2 * cout_p * ob                    # double-buffered out
        vals = (m1 * cmid_p + m2 * cout_p) * 4 \
            + 2 * m1 * max(cin_p, cmid_p) * cb         # live values / spills
        return w_bytes + xbuf + mbuf + hbuf + outb + vals <= budget

    cap = H if max_tile_h is None else min(int(max_tile_h), H)
    best = 1  # always correct fallback
    for th in range(1, cap + 1):
        if H % th == 0 and fits(th):
            best = th
    return best


def double_conv(x_nchw, params, *, compute_dtype=jnp.bfloat16, max_tile_h=None):
    """Forward pass matching DoubleConv.forward. Input/output are NCHW."""
    w1, b1, w2, b2 = params
    B, Cin, H, W = x_nchw.shape
    Cmid = w1.shape[-1]
    Cout = w2.shape[-1]
    out_dtype = x_nchw.dtype

    cin_p = _round_up(Cin, LANE)
    cmid_p = _round_up(Cmid, LANE)
    cout_p = _round_up(Cout, LANE)
    W_pad = _round_up(W + 4, SUBLANE)  # 2-col left halo + >=2-col right pad

    vmem_bytes = _vmem_capacity_bytes()
    TH = _pick_tile_h(H, W_pad, cin_p, cmid_p, cout_p, compute_dtype, out_dtype,
                      vmem_bytes, max_tile_h=max_tile_h)
    n_tiles = H // TH
    S1 = (TH + 5) * W_pad   # flattened input-slab rows (2-row top / 3-row bottom halo)
    M1 = (TH + 2) * W_pad   # flattened intermediate frame rows (1-row halo each side)
    M2 = TH * W_pad         # flattened output frame rows

    # ---- wrapper-side layout: NCHW -> NHWC, pads, bf16, halo'd slabs --------
    x = jnp.transpose(x_nchw, (0, 2, 3, 1)).astype(compute_dtype)
    xp = jnp.pad(x, ((0, 0), (2, 3), (2, W_pad - W - 2), (0, cin_p - Cin)))
    row_idx = (jnp.arange(n_tiles) * TH)[:, None] + jnp.arange(TH + 5)[None, :]
    xslabs = xp[:, row_idx]                       # (B, n_tiles, TH+5, W_pad, cin_p)
    xslabs = xslabs.reshape(B, n_tiles, S1, cin_p)

    # Per-tile validity mask for the intermediate frame: zero where conv2 must
    # see padding (image row/col out of range) or frame-garbage columns.
    rows_img = jnp.arange(n_tiles)[:, None] * TH - 1 + jnp.arange(TH + 2)[None, :]
    row_ok = (rows_img >= 0) & (rows_img < H)                     # (n_tiles, TH+2)
    cols = jnp.arange(W_pad)
    col_ok = (cols >= 1) & (cols <= W)                            # (W_pad,)
    mask = (row_ok[:, :, None] & col_ok[None, None, :]).astype(jnp.float32)
    mask = mask.reshape(n_tiles, M1, 1)

    w1p = jnp.pad(w1, ((0, 0), (0, 0), (0, cin_p - Cin),
                       (0, cmid_p - Cmid))).astype(compute_dtype)
    w2p = jnp.pad(w2, ((0, 0), (0, 0), (0, cmid_p - Cmid),
                       (0, cout_p - Cout))).astype(compute_dtype)
    b1p = jnp.pad(b1, (0, cmid_p - Cmid)).astype(jnp.float32).reshape(1, cmid_p)
    b2p = jnp.pad(b2, (0, cout_p - Cout)).astype(jnp.float32).reshape(1, cout_p)

    def kernel(x_ref, m_ref, w1_ref, b1_ref, w2_ref, b2_ref, o_ref, hbuf):
        # x_ref : (1, 1, S1, cin_p)   flattened halo'd input slab
        # m_ref : (1, M1, 1)          validity mask for the intermediate frame
        # w*_ref: (3, 3, C, C')       bf16 weights ; b*_ref: (1, C') f32 bias
        # o_ref : (1, 1, M2, cout_p)  flattened output frame
        # hbuf  : ((TH+3)*W_pad, cmid_p) VMEM scratch for the intermediate

        # ---- conv1: 9 shifted 2-D matmuls over the flattened slab ----------
        acc1 = jnp.zeros((M1, cmid_p), jnp.float32)
        for kh in range(3):
            for kw in range(3):
                off = kh * W_pad + kw
                patch = x_ref[0, 0, off:off + M1, :]
                acc1 = acc1 + jnp.dot(patch, w1_ref[kh, kw],
                                      preferred_element_type=jnp.float32)
        h = jnp.maximum(acc1 + b1_ref[...], 0.0) * m_ref[0]
        hbuf[0:M1, :] = h.astype(hbuf.dtype)
        hbuf[M1:, :] = jnp.zeros((W_pad, cmid_p), hbuf.dtype)  # overflow rows

        # ---- conv2: same trick over the masked intermediate ----------------
        acc2 = jnp.zeros((M2, cout_p), jnp.float32)
        for kh in range(3):
            for kw in range(3):
                off = kh * W_pad + kw
                patch = hbuf[off:off + M2, :]
                acc2 = acc2 + jnp.dot(patch, w2_ref[kh, kw],
                                      preferred_element_type=jnp.float32)
        out = jnp.maximum(acc2 + b2_ref[...], 0.0)
        o_ref[0, 0] = out.astype(o_ref.dtype)

    out = pl.pallas_call(
        kernel,
        out_shape=jax.ShapeDtypeStruct((B, n_tiles, M2, cout_p), out_dtype),
        grid=(B, n_tiles),
        in_specs=[
            pl.BlockSpec((1, 1, S1, cin_p), lambda b, i: (b, i, 0, 0)),
            pl.BlockSpec((1, M1, 1), lambda b, i: (i, 0, 0)),
            pl.BlockSpec((3, 3, cin_p, cmid_p), lambda b, i: (0, 0, 0, 0)),
            pl.BlockSpec((1, cmid_p), lambda b, i: (0, 0)),
            pl.BlockSpec((3, 3, cmid_p, cout_p), lambda b, i: (0, 0, 0, 0)),
            pl.BlockSpec((1, cout_p), lambda b, i: (0, 0)),
        ],
        out_specs=pl.BlockSpec((1, 1, M2, cout_p), lambda b, i: (b, i, 0, 0)),
        scratch_shapes=[pltpu.VMEM(((TH + 3) * W_pad, cmid_p), compute_dtype)],
        compiler_params=pltpu.CompilerParams(
            dimension_semantics=("parallel", "parallel"),
            vmem_limit_bytes=int(vmem_bytes * 0.75),
        ),
    )(xslabs, mask, w1p, b1p, w2p, b2p)

    out = out.reshape(B, H, W_pad, cout_p)[:, :, :W, :Cout]  # drop pad cols/chans
    return jnp.transpose(out, (0, 3, 1, 2))                  # NHWC -> NCHW


def init_params(key, in_channels, out_channels, dtype=jnp.float32):
    """Synthetic init. Weights stored as (kh, kw, Cin, Cout) for the NHWC kernel."""
    k1, k2, k3, k4 = jax.random.split(key, 4)
    fan1 = in_channels * 9
    fan2 = out_channels * 9
    w1 = jax.random.uniform(k1, (3, 3, in_channels, out_channels), dtype,
                            minval=-1.0, maxval=1.0) / jnp.sqrt(fan1)
    b1 = jax.random.uniform(k2, (out_channels,), dtype,
                            minval=-1.0, maxval=1.0) / jnp.sqrt(fan1)
    w2 = jax.random.uniform(k3, (3, 3, out_channels, out_channels), dtype,
                            minval=-1.0, maxval=1.0) / jnp.sqrt(fan2)
    b2 = jax.random.uniform(k4, (out_channels,), dtype,
                            minval=-1.0, maxval=1.0) / jnp.sqrt(fan2)
    return w1, b1, w2, b2


def _reference(x_nchw, params, compute_dtype=jnp.bfloat16):
    """Pure-JAX reference with the same bf16-in / f32-accum recipe."""
    w1, b1, w2, b2 = params

    def conv_relu(x, w, b):
        y = jax.lax.conv_general_dilated(
            x.astype(compute_dtype), w.astype(compute_dtype),
            window_strides=(1, 1), padding=((1, 1), (1, 1)),
            dimension_numbers=("NCHW", "HWIO", "NCHW"),
            preferred_element_type=jnp.float32)
        return jax.nn.relu(y + b.astype(jnp.float32)[None, :, None, None])

    h = conv_relu(x_nchw, w1, b1)
    y = conv_relu(h, w2, b2)   # h is cast to bf16 inside, like the kernel's hbuf
    return y.astype(x_nchw.dtype)


if __name__ == "__main__":
    key = jax.random.PRNGKey(0)
    kx, kp = jax.random.split(key)

    B, C_in, C_out, H, W = 2, 4, 8, 16, 16
    x = jax.random.normal(kx, (B, C_in, H, W), dtype=jnp.float32)
    params = init_params(kp, C_in, C_out)

    # max_tile_h=8 forces a (B, 2) grid so the halo / boundary-mask path runs.
    run = jax.jit(lambda xx: double_conv(xx, params, max_tile_h=8))
    out = jax.block_until_ready(run(x))
    ref = jax.block_until_ready(_reference(x, params))

    assert out.shape == (B, C_out, H, W)
    err = float(jnp.max(jnp.abs(out - ref)))
    assert jnp.allclose(out, ref, atol=1e-2, rtol=1e-2), err

    print("KERNEL_OK")
</pallas_src>

<mosaic_0001>
module attributes {stable_mosaic.version = 11 : i64} {
  func.func @kernel(%arg0: i32, %arg1: i32, %arg2: memref<1x1x312x128xbf16, #tpu.memory_space<vmem>>, %arg3: memref<1x240x1xf32, #tpu.memory_space<vmem>>, %arg4: memref<3x3x128x128xbf16, #tpu.memory_space<vmem>>, %arg5: memref<1x128xf32, #tpu.memory_space<vmem>>, %arg6: memref<3x3x128x128xbf16, #tpu.memory_space<vmem>>, %arg7: memref<1x128xf32, #tpu.memory_space<vmem>>, %arg8: memref<1x1x192x128xf32, #tpu.memory_space<vmem>>, %arg9: memref<264x128xbf16, #tpu.memory_space<vmem>>) attributes {dimension_semantics = [#tpu.dimension_semantics<parallel>, #tpu.dimension_semantics<parallel>], iteration_bounds = array<i64: 2, 2>, scalar_prefetch = 0 : i64, scratch_operands = 1 : i64, tpu.core_type = #tpu.core_type<tc>, window_params = [{transform_indices = @transform_0, window_bounds = array<i64: 1, 1, 312, 128>}, {transform_indices = @transform_1, window_bounds = array<i64: 1, 240, 1>}, {pipeline_mode = #tpu.pipeline_mode<synchronous>, transform_indices = @transform_2, window_bounds = array<i64: 3, 3, 128, 128>}, {pipeline_mode = #tpu.pipeline_mode<synchronous>, transform_indices = @transform_3, window_bounds = array<i64: 1, 128>}, {pipeline_mode = #tpu.pipeline_mode<synchronous>, transform_indices = @transform_4, window_bounds = array<i64: 3, 3, 128, 128>}, {pipeline_mode = #tpu.pipeline_mode<synchronous>, transform_indices = @transform_5, window_bounds = array<i64: 1, 128>}, {transform_indices = @transform_6, window_bounds = array<i64: 1, 1, 192, 128>}]} {
    %cst = arith.constant 0.000000e+00 : f32
    %0 = vector.broadcast %cst : f32 to vector<240x128xf32>
    %c0 = arith.constant 0 : index
    %c0_0 = arith.constant 0 : index
    %c0_1 = arith.constant 0 : index
    %c0_2 = arith.constant 0 : index
    %1 = vector.load %arg2[%c0, %c0_0, %c0_1, %c0_2] : memref<1x1x312x128xbf16, #tpu.memory_space<vmem>>, vector<1x1x240x128xbf16>
    %2 = vector.shape_cast %1 : vector<1x1x240x128xbf16> to vector<240x128xbf16>
    %c0_3 = arith.constant 0 : index
    %c0_4 = arith.constant 0 : index
    %c0_5 = arith.constant 0 : index
    %c0_6 = arith.constant 0 : index
    %3 = vector.load %arg4[%c0_3, %c0_4, %c0_5, %c0_6] : memref<3x3x128x128xbf16, #tpu.memory_space<vmem>>, vector<1x1x128x128xbf16>
    %4 = vector.shape_cast %3 : vector<1x1x128x128xbf16> to vector<128x128xbf16>
    %cst_7 = arith.constant dense<0.000000e+00> : vector<240x128xf32>
    %5 = tpu.matmul %2, %4, %cst_7 {dimension_numbers = #tpu.dot_dimension_numbers<[1], [0], [0], [1], [0, 0, 1, 1], [], []>} : vector<240x128xbf16>, vector<128x128xbf16>, vector<240x128xf32> -> vector<240x128xf32>
    %6 = arith.addf %0, %5 : vector<240x128xf32>
    %c0_8 = arith.constant 0 : index
    %c0_9 = arith.constant 0 : index
    %c1 = arith.constant 1 : index
    %c0_10 = arith.constant 0 : index
    %7 = vector.load %arg2[%c0_8, %c0_9, %c1, %c0_10] : memref<1x1x312x128xbf16, #tpu.memory_space<vmem>>, vector<1x1x240x128xbf16>
    %8 = vector.shape_cast %7 : vector<1x1x240x128xbf16> to vector<240x128xbf16>
    %c0_11 = arith.constant 0 : index
    %c1_12 = arith.constant 1 : index
    %c0_13 = arith.constant 0 : index
    %c0_14 = arith.constant 0 : index
    %9 = vector.load %arg4[%c0_11, %c1_12, %c0_13, %c0_14] : memref<3x3x128x128xbf16, #tpu.memory_space<vmem>>, vector<1x1x128x128xbf16>
    %10 = vector.shape_cast %9 : vector<1x1x128x128xbf16> to vector<128x128xbf16>
    %cst_15 = arith.constant dense<0.000000e+00> : vector<240x128xf32>
    %11 = tpu.matmul %8, %10, %cst_15 {dimension_numbers = #tpu.dot_dimension_numbers<[1], [0], [0], [1], [0, 0, 1, 1], [], []>} : vector<240x128xbf16>, vector<128x128xbf16>, vector<240x128xf32> -> vector<240x128xf32>
    %12 = arith.addf %6, %11 : vector<240x128xf32>
    %c0_16 = arith.constant 0 : index
    %c0_17 = arith.constant 0 : index
    %c2 = arith.constant 2 : index
    %c0_18 = arith.constant 0 : index
    %13 = vector.load %arg2[%c0_16, %c0_17, %c2, %c0_18] : memref<1x1x312x128xbf16, #tpu.memory_space<vmem>>, vector<1x1x240x128xbf16>
    %14 = vector.shape_cast %13 : vector<1x1x240x128xbf16> to vector<240x128xbf16>
    %c0_19 = arith.constant 0 : index
    %c2_20 = arith.constant 2 : index
    %c0_21 = arith.constant 0 : index
    %c0_22 = arith.constant 0 : index
    %15 = vector.load %arg4[%c0_19, %c2_20, %c0_21, %c0_22] : memref<3x3x128x128xbf16, #tpu.memory_space<vmem>>, vector<1x1x128x128xbf16>
    %16 = vector.shape_cast %15 : vector<1x1x128x128xbf16> to vector<128x128xbf16>
    %cst_23 = arith.constant dense<0.000000e+00> : vector<240x128xf32>
    %17 = tpu.matmul %14, %16, %cst_23 {dimension_numbers = #tpu.dot_dimension_numbers<[1], [0], [0], [1], [0, 0, 1, 1], [], []>} : vector<240x128xbf16>, vector<128x128xbf16>, vector<240x128xf32> -> vector<240x128xf32>
    %18 = arith.addf %12, %17 : vector<240x128xf32>
    %c0_24 = arith.constant 0 : index
    %c0_25 = arith.constant 0 : index
    %c24 = arith.constant 24 : index
    %c0_26 = arith.constant 0 : index
    %19 = vector.load %arg2[%c0_24, %c0_25, %c24, %c0_26] : memref<1x1x312x128xbf16, #tpu.memory_space<vmem>>, vector<1x1x240x128xbf16>
    %20 = vector.shape_cast %19 : vector<1x1x240x128xbf16> to vector<240x128xbf16>
    %c1_27 = arith.constant 1 : index
    %c0_28 = arith.constant 0 : index
    %c0_29 = arith.constant 0 : index
    %c0_30 = arith.constant 0 : index
    %21 = vector.load %arg4[%c1_27, %c0_28, %c0_29, %c0_30] : memref<3x3x128x128xbf16, #tpu.memory_space<vmem>>, vector<1x1x128x128xbf16>
    %22 = vector.shape_cast %21 : vector<1x1x128x128xbf16> to vector<128x128xbf16>
    %cst_31 = arith.constant dense<0.000000e+00> : vector<240x128xf32>
    %23 = tpu.matmul %20, %22, %cst_31 {dimension_numbers = #tpu.dot_dimension_numbers<[1], [0], [0], [1], [0, 0, 1, 1], [], []>} : vector<240x128xbf16>, vector<128x128xbf16>, vector<240x128xf32> -> vector<240x128xf32>
    %24 = arith.addf %18, %23 : vector<240x128xf32>
    %c0_32 = arith.constant 0 : index
    %c0_33 = arith.constant 0 : index
    %c25 = arith.constant 25 : index
    %c0_34 = arith.constant 0 : index
    %25 = vector.load %arg2[%c0_32, %c0_33, %c25, %c0_34] : memref<1x1x312x128xbf16, #tpu.memory_space<vmem>>, vector<1x1x240x128xbf16>
    %26 = vector.shape_cast %25 : vector<1x1x240x128xbf16> to vector<240x128xbf16>
    %c1_35 = arith.constant 1 : index
    %c1_36 = arith.constant 1 : index
    %c0_37 = arith.constant 0 : index
    %c0_38 = arith.constant 0 : index
    %27 = vector.load %arg4[%c1_35, %c1_36, %c0_37, %c0_38] : memref<3x3x128x128xbf16, #tpu.memory_space<vmem>>, vector<1x1x128x128xbf16>
    %28 = vector.shape_cast %27 : vector<1x1x128x128xbf16> to vector<128x128xbf16>
    %cst_39 = arith.constant dense<0.000000e+00> : vector<240x128xf32>
    %29 = tpu.matmul %26, %28, %cst_39 {dimension_numbers = #tpu.dot_dimension_numbers<[1], [0], [0], [1], [0, 0, 1, 1], [], []>} : vector<240x128xbf16>, vector<128x128xbf16>, vector<240x128xf32> -> vector<240x128xf32>
    %30 = arith.addf %24, %29 : vector<240x128xf32>
    %c0_40 = arith.constant 0 : index
    %c0_41 = arith.constant 0 : index
    %c26 = arith.constant 26 : index
    %c0_42 = arith.constant 0 : index
    %31 = vector.load %arg2[%c0_40, %c0_41, %c26, %c0_42] : memref<1x1x312x128xbf16, #tpu.memory_space<vmem>>, vector<1x1x240x128xbf16>
    %32 = vector.shape_cast %31 : vector<1x1x240x128xbf16> to vector<240x128xbf16>
    %c1_43 = arith.constant 1 : index
    %c2_44 = arith.constant 2 : index
    %c0_45 = arith.constant 0 : index
    %c0_46 = arith.constant 0 : index
    %33 = vector.load %arg4[%c1_43, %c2_44, %c0_45, %c0_46] : memref<3x3x128x128xbf16, #tpu.memory_space<vmem>>, vector<1x1x128x128xbf16>
    %34 = vector.shape_cast %33 : vector<1x1x128x128xbf16> to vector<128x128xbf16>
    %cst_47 = arith.constant dense<0.000000e+00> : vector<240x128xf32>
    %35 = tpu.matmul %32, %34, %cst_47 {dimension_numbers = #tpu.dot_dimension_numbers<[1], [0], [0], [1], [0, 0, 1, 1], [], []>} : vector<240x128xbf16>, vector<128x128xbf16>, vector<240x128xf32> -> vector<240x128xf32>
    %36 = arith.addf %30, %35 : vector<240x128xf32>
    %c0_48 = arith.constant 0 : index
    %c0_49 = arith.constant 0 : index
    %c48 = arith.constant 48 : index
    %c0_50 = arith.constant 0 : index
    %37 = vector.load %arg2[%c0_48, %c0_49, %c48, %c0_50] : memref<1x1x312x128xbf16, #tpu.memory_space<vmem>>, vector<1x1x240x128xbf16>
    %38 = vector.shape_cast %37 : vector<1x1x240x128xbf16> to vector<240x128xbf16>
    %c2_51 = arith.constant 2 : index
    %c0_52 = arith.constant 0 : index
    %c0_53 = arith.constant 0 : index
    %c0_54 = arith.constant 0 : index
    %39 = vector.load %arg4[%c2_51, %c0_52, %c0_53, %c0_54] : memref<3x3x128x128xbf16, #tpu.memory_space<vmem>>, vector<1x1x128x128xbf16>
    %40 = vector.shape_cast %39 : vector<1x1x128x128xbf16> to vector<128x128xbf16>
    %cst_55 = arith.constant dense<0.000000e+00> : vector<240x128xf32>
    %41 = tpu.matmul %38, %40, %cst_55 {dimension_numbers = #tpu.dot_dimension_numbers<[1], [0], [0], [1], [0, 0, 1, 1], [], []>} : vector<240x128xbf16>, vector<128x128xbf16>, vector<240x128xf32> -> vector<240x128xf32>
    %42 = arith.addf %36, %41 : vector<240x128xf32>
    %c0_56 = arith.constant 0 : index
    %c0_57 = arith.constant 0 : index
    %c49 = arith.constant 49 : index
    %c0_58 = arith.constant 0 : index
    %43 = vector.load %arg2[%c0_56, %c0_57, %c49, %c0_58] : memref<1x1x312x128xbf16, #tpu.memory_space<vmem>>, vector<1x1x240x128xbf16>
    %44 = vector.shape_cast %43 : vector<1x1x240x128xbf16> to vector<240x128xbf16>
    %c2_59 = arith.constant 2 : index
    %c1_60 = arith.constant 1 : index
    %c0_61 = arith.constant 0 : index
    %c0_62 = arith.constant 0 : index
    %45 = vector.load %arg4[%c2_59, %c1_60, %c0_61, %c0_62] : memref<3x3x128x128xbf16, #tpu.memory_space<vmem>>, vector<1x1x128x128xbf16>
    %46 = vector.shape_cast %45 : vector<1x1x128x128xbf16> to vector<128x128xbf16>
    %cst_63 = arith.constant dense<0.000000e+00> : vector<240x128xf32>
    %47 = tpu.matmul %44, %46, %cst_63 {dimension_numbers = #tpu.dot_dimension_numbers<[1], [0], [0], [1], [0, 0, 1, 1], [], []>} : vector<240x128xbf16>, vector<128x128xbf16>, vector<240x128xf32> -> vector<240x128xf32>
    %48 = arith.addf %42, %47 : vector<240x128xf32>
    %c0_64 = arith.constant 0 : index
    %c0_65 = arith.constant 0 : index
    %c50 = arith.constant 50 : index
    %c0_66 = arith.constant 0 : index
    %49 = vector.load %arg2[%c0_64, %c0_65, %c50, %c0_66] : memref<1x1x312x128xbf16, #tpu.memory_space<vmem>>, vector<1x1x240x128xbf16>
    %50 = vector.shape_cast %49 : vector<1x1x240x128xbf16> to vector<240x128xbf16>
    %c2_67 = arith.constant 2 : index
    %c2_68 = arith.constant 2 : index
    %c0_69 = arith.constant 0 : index
    %c0_70 = arith.constant 0 : index
    %51 = vector.load %arg4[%c2_67, %c2_68, %c0_69, %c0_70] : memref<3x3x128x128xbf16, #tpu.memory_space<vmem>>, vector<1x1x128x128xbf16>
    %52 = vector.shape_cast %51 : vector<1x1x128x128xbf16> to vector<128x128xbf16>
    %cst_71 = arith.constant dense<0.000000e+00> : vector<240x128xf32>
    %53 = tpu.matmul %50, %52, %cst_71 {dimension_numbers = #tpu.dot_dimension_numbers<[1], [0], [0], [1], [0, 0, 1, 1], [], []>} : vector<240x128xbf16>, vector<128x128xbf16>, vector<240x128xf32> -> vector<240x128xf32>
    %54 = arith.addf %48, %53 : vector<240x128xf32>
    %c0_72 = arith.constant 0 : index
    %c0_73 = arith.constant 0 : index
    %55 = vector.load %arg5[%c0_72, %c0_73] : memref<1x128xf32, #tpu.memory_space<vmem>>, vector<1x128xf32>
    %56 = vector.broadcast %55 : vector<1x128xf32> to vector<240x128xf32>
    %57 = arith.addf %54, %56 : vector<240x128xf32>
    %cst_74 = arith.constant 0.000000e+00 : f32
    %58 = vector.broadcast %cst_74 : f32 to vector<240x128xf32>
    %59 = arith.maximumf %57, %58 : vector<240x128xf32>
    %c0_75 = arith.constant 0 : index
    %c0_76 = arith.constant 0 : index
    %c0_77 = arith.constant 0 : index
    %60 = vector.load %arg3[%c0_75, %c0_76, %c0_77] : memref<1x240x1xf32, #tpu.memory_space<vmem>>, vector<1x240x1xf32>
    %61 = vector.shape_cast %60 : vector<1x240x1xf32> to vector<240x1xf32>
    %62 = vector.broadcast %61 : vector<240x1xf32> to vector<240x128xf32>
    %63 = arith.mulf %59, %62 : vector<240x128xf32>
    %64 = arith.truncf %63 : vector<240x128xf32> to vector<240x128xbf16>
    %c0_78 = arith.constant 0 : index
    %c0_79 = arith.constant 0 : index
    %65 = vector.load %arg9[%c0_78, %c0_79] : memref<264x128xbf16, #tpu.memory_space<vmem>>, vector<240x128xbf16>
    tpu.vector_store %arg9[%c0_78, %c0_79], %64 {strides = array<i32>} : memref<264x128xbf16, #tpu.memory_space<vmem>>, vector<240x128xbf16>,
    %cst_80 = arith.constant 0.000000e+00 : bf16
    %66 = vector.broadcast %cst_80 : bf16 to vector<24x128xbf16>
    %c240 = arith.constant 240 : index
    %c0_81 = arith.constant 0 : index
    %67 = vector.load %arg9[%c240, %c0_81] : memref<264x128xbf16, #tpu.memory_space<vmem>>, vector<24x128xbf16>
    tpu.vector_store %arg9[%c240, %c0_81], %66 {strides = array<i32>} : memref<264x128xbf16, #tpu.memory_space<vmem>>, vector<24x128xbf16>,
    %cst_82 = arith.constant 0.000000e+00 : f32
    %68 = vector.broadcast %cst_82 : f32 to vector<192x128xf32>
    %c0_83 = arith.constant 0 : index
    %c0_84 = arith.constant 0 : index
    %69 = vector.load %arg9[%c0_83, %c0_84] : memref<264x128xbf16, #tpu.memory_space<vmem>>, vector<192x128xbf16>
    %c0_85 = arith.constant 0 : index
    %c0_86 = arith.constant 0 : index
    %c0_87 = arith.constant 0 : index
    %c0_88 = arith.constant 0 : index
    %70 = vector.load %arg6[%c0_85, %c0_86, %c0_87, %c0_88] : memref<3x3x128x128xbf16, #tpu.memory_space<vmem>>, vector<1x1x128x128xbf16>
    %71 = vector.shape_cast %70 : vector<1x1x128x128xbf16> to vector<128x128xbf16>
    %cst_89 = arith.constant dense<0.000000e+00> : vector<192x128xf32>
    %72 = tpu.matmul %69, %71, %cst_89 {dimension_numbers = #tpu.dot_dimension_numbers<[1], [0], [0], [1], [0, 0, 1, 1], [], []>} : vector<192x128xbf16>, vector<128x128xbf16>, vector<192x128xf32> -> vector<192x128xf32>
    %73 = arith.addf %68, %72 : vector<192x128xf32>
    %c1_90 = arith.constant 1 : index
    %c0_91 = arith.constant 0 : index
    %74 = vector.load %arg9[%c1_90, %c0_91] : memref<264x128xbf16, #tpu.memory_space<vmem>>, vector<192x128xbf16>
    %c0_92 = arith.constant 0 : index
    %c1_93 = arith.constant 1 : index
    %c0_94 = arith.constant 0 : index
    %c0_95 = arith.constant 0 : index
    %75 = vector.load %arg6[%c0_92, %c1_93, %c0_94, %c0_95] : memref<3x3x128x128xbf16, #tpu.memory_space<vmem>>, vector<1x1x128x128xbf16>
    %76 = vector.shape_cast %75 : vector<1x1x128x128xbf16> to vector<128x128xbf16>
    %cst_96 = arith.constant dense<0.000000e+00> : vector<192x128xf32>
    %77 = tpu.matmul %74, %76, %cst_96 {dimension_numbers = #tpu.dot_dimension_numbers<[1], [0], [0], [1], [0, 0, 1, 1], [], []>} : vector<192x128xbf16>, vector<128x128xbf16>, vector<192x128xf32> -> vector<192x128xf32>
    %78 = arith.addf %73, %77 : vector<192x128xf32>
    %c2_97 = arith.constant 2 : index
    %c0_98 = arith.constant 0 : index
    %79 = vector.load %arg9[%c2_97, %c0_98] : memref<264x128xbf16, #tpu.memory_space<vmem>>, vector<192x128xbf16>
    %c0_99 = arith.constant 0 : index
    %c2_100 = arith.constant 2 : index
    %c0_101 = arith.constant 0 : index
    %c0_102 = arith.constant 0 : index
    %80 = vector.load %arg6[%c0_99, %c2_100, %c0_101, %c0_102] : memref<3x3x128x128xbf16, #tpu.memory_space<vmem>>, vector<1x1x128x128xbf16>
    %81 = vector.shape_cast %80 : vector<1x1x128x128xbf16> to vector<128x128xbf16>
    %cst_103 = arith.constant dense<0.000000e+00> : vector<192x128xf32>
    %82 = tpu.matmul %79, %81, %cst_103 {dimension_numbers = #tpu.dot_dimension_numbers<[1], [0], [0], [1], [0, 0, 1, 1], [], []>} : vector<192x128xbf16>, vector<128x128xbf16>, vector<192x128xf32> -> vector<192x128xf32>
    %83 = arith.addf %78, %82 : vector<192x128xf32>
    %c24_104 = arith.constant 24 : index
    %c0_105 = arith.constant 0 : index
    %84 = vector.load %arg9[%c24_104, %c0_105] : memref<264x128xbf16, #tpu.memory_space<vmem>>, vector<192x128xbf16>
    %c1_106 = arith.constant 1 : index
    %c0_107 = arith.constant 0 : index
    %c0_108 = arith.constant 0 : index
    %c0_109 = arith.constant 0 : index
    %85 = vector.load %arg6[%c1_106, %c0_107, %c0_108, %c0_109] : memref<3x3x128x128xbf16, #tpu.memory_space<vmem>>, vector<1x1x128x128xbf16>
    %86 = vector.shape_cast %85 : vector<1x1x128x128xbf16> to vector<128x128xbf16>
    %cst_110 = arith.constant dense<0.000000e+00> : vector<192x128xf32>
    %87 = tpu.matmul %84, %86, %cst_110 {dimension_numbers = #tpu.dot_dimension_numbers<[1], [0], [0], [1], [0, 0, 1, 1], [], []>} : vector<192x128xbf16>, vector<128x128xbf16>, vector<192x128xf32> -> vector<192x128xf32>
    %88 = arith.addf %83, %87 : vector<192x128xf32>
    %c25_111 = arith.constant 25 : index
    %c0_112 = arith.constant 0 : index
    %89 = vector.load %arg9[%c25_111, %c0_112] : memref<264x128xbf16, #tpu.memory_space<vmem>>, vector<192x128xbf16>
    %c1_113 = arith.constant 1 : index
    %c1_114 = arith.constant 1 : index
    %c0_115 = arith.constant 0 : index
    %c0_116 = arith.constant 0 : index
    %90 = vector.load %arg6[%c1_113, %c1_114, %c0_115, %c0_116] : memref<3x3x128x128xbf16, #tpu.memory_space<vmem>>, vector<1x1x128x128xbf16>
    %91 = vector.shape_cast %90 : vector<1x1x128x128xbf16> to vector<128x128xbf16>
    %cst_117 = arith.constant dense<0.000000e+00> : vector<192x128xf32>
    %92 = tpu.matmul %89, %91, %cst_117 {dimension_numbers = #tpu.dot_dimension_numbers<[1], [0], [0], [1], [0, 0, 1, 1], [], []>} : vector<192x128xbf16>, vector<128x128xbf16>, vector<192x128xf32> -> vector<192x128xf32>
    %93 = arith.addf %88, %92 : vector<192x128xf32>
    %c26_118 = arith.constant 26 : index
    %c0_119 = arith.constant 0 : index
    %94 = vector.load %arg9[%c26_118, %c0_119] : memref<264x128xbf16, #tpu.memory_space<vmem>>, vector<192x128xbf16>
    %c1_120 = arith.constant 1 : index
    %c2_121 = arith.constant 2 : index
    %c0_122 = arith.constant 0 : index
    %c0_123 = arith.constant 0 : index
    %95 = vector.load %arg6[%c1_120, %c2_121, %c0_122, %c0_123] : memref<3x3x128x128xbf16, #tpu.memory_space<vmem>>, vector<1x1x128x128xbf16>
    %96 = vector.shape_cast %95 : vector<1x1x128x128xbf16> to vector<128x128xbf16>
    %cst_124 = arith.constant dense<0.000000e+00> : vector<192x128xf32>
    %97 = tpu.matmul %94, %96, %cst_124 {dimension_numbers = #tpu.dot_dimension_numbers<[1], [0], [0], [1], [0, 0, 1, 1], [], []>} : vector<192x128xbf16>, vector<128x128xbf16>, vector<192x128xf32> -> vector<192x128xf32>
    %98 = arith.addf %93, %97 : vector<192x128xf32>
    %c48_125 = arith.constant 48 : index
    %c0_126 = arith.constant 0 : index
    %99 = vector.load %arg9[%c48_125, %c0_126] : memref<264x128xbf16, #tpu.memory_space<vmem>>, vector<192x128xbf16>
    %c2_127 = arith.constant 2 : index
    %c0_128 = arith.constant 0 : index
    %c0_129 = arith.constant 0 : index
    %c0_130 = arith.constant 0 : index
    %100 = vector.load %arg6[%c2_127, %c0_128, %c0_129, %c0_130] : memref<3x3x128x128xbf16, #tpu.memory_space<vmem>>, vector<1x1x128x128xbf16>
    %101 = vector.shape_cast %100 : vector<1x1x128x128xbf16> to vector<128x128xbf16>
    %cst_131 = arith.constant dense<0.000000e+00> : vector<192x128xf32>
    %102 = tpu.matmul %99, %101, %cst_131 {dimension_numbers = #tpu.dot_dimension_numbers<[1], [0], [0], [1], [0, 0, 1, 1], [], []>} : vector<192x128xbf16>, vector<128x128xbf16>, vector<192x128xf32> -> vector<192x128xf32>
    %103 = arith.addf %98, %102 : vector<192x128xf32>
    %c49_132 = arith.constant 49 : index
    %c0_133 = arith.constant 0 : index
    %104 = vector.load %arg9[%c49_132, %c0_133] : memref<264x128xbf16, #tpu.memory_space<vmem>>, vector<192x128xbf16>
    %c2_134 = arith.constant 2 : index
    %c1_135 = arith.constant 1 : index
    %c0_136 = arith.constant 0 : index
    %c0_137 = arith.constant 0 : index
    %105 = vector.load %arg6[%c2_134, %c1_135, %c0_136, %c0_137] : memref<3x3x128x128xbf16, #tpu.memory_space<vmem>>, vector<1x1x128x128xbf16>
    %106 = vector.shape_cast %105 : vector<1x1x128x128xbf16> to vector<128x128xbf16>
    %cst_138 = arith.constant dense<0.000000e+00> : vector<192x128xf32>
    %107 = tpu.matmul %104, %106, %cst_138 {dimension_numbers = #tpu.dot_dimension_numbers<[1], [0], [0], [1], [0, 0, 1, 1], [], []>} : vector<192x128xbf16>, vector<128x128xbf16>, vector<192x128xf32> -> vector<192x128xf32>
    %108 = arith.addf %103, %107 : vector<192x128xf32>
    %c50_139 = arith.constant 50 : index
    %c0_140 = arith.constant 0 : index
    %109 = vector.load %arg9[%c50_139, %c0_140] : memref<264x128xbf16, #tpu.memory_space<vmem>>, vector<192x128xbf16>
    %c2_141 = arith.constant 2 : index
    %c2_142 = arith.constant 2 : index
    %c0_143 = arith.constant 0 : index
    %c0_144 = arith.constant 0 : index
    %110 = vector.load %arg6[%c2_141, %c2_142, %c0_143, %c0_144] : memref<3x3x128x128xbf16, #tpu.memory_space<vmem>>, vector<1x1x128x128xbf16>
    %111 = vector.shape_cast %110 : vector<1x1x128x128xbf16> to vector<128x128xbf16>
    %cst_145 = arith.constant dense<0.000000e+00> : vector<192x128xf32>
    %112 = tpu.matmul %109, %111, %cst_145 {dimension_numbers = #tpu.dot_dimension_numbers<[1], [0], [0], [1], [0, 0, 1, 1], [], []>} : vector<192x128xbf16>, vector<128x128xbf16>, vector<192x128xf32> -> vector<192x128xf32>
    %113 = arith.addf %108, %112 : vector<192x128xf32>
    %c0_146 = arith.constant 0 : index
    %c0_147 = arith.constant 0 : index
    %114 = vector.load %arg7[%c0_146, %c0_147] : memref<1x128xf32, #tpu.memory_space<vmem>>, vector<1x128xf32>
    %115 = vector.broadcast %114 : vector<1x128xf32> to vector<192x128xf32>
    %116 = arith.addf %113, %115 : vector<192x128xf32>
    %cst_148 = arith.constant 0.000000e+00 : f32
    %117 = vector.broadcast %cst_148 : f32 to vector<192x128xf32>
    %118 = arith.maximumf %116, %117 : vector<192x128xf32>
    %c0_149 = arith.constant 0 : index
    %c0_150 = arith.constant 0 : index
    %c0_151 = arith.constant 0 : index
    %c0_152 = arith.constant 0 : index
    %119 = vector.load %arg8[%c0_149, %c0_150, %c0_151, %c0_152] : memref<1x1x192x128xf32, #tpu.memory_space<vmem>>, vector<1x1x192x128xf32>
    %120 = vector.shape_cast %119 : vector<1x1x192x128xf32> to vector<192x128xf32>
    %121 = vector.shape_cast %118 : vector<192x128xf32> to vector<1x1x192x128xf32>
    tpu.vector_store %arg8[%c0_149, %c0_150, %c0_151, %c0_152], %121 {strides = array<i32>} : memref<1x1x192x128xf32, #tpu.memory_space<vmem>>, vector<1x1x192x128xf32>,
    return
  }
  func.func @transform_0(%arg0: i32, %arg1: i32) -> (i32, i32, i32, i32) {
    %c0_i32 = arith.constant 0 : i32
    %c0_i32_0 = arith.constant 0 : i32
    %c0_i32_1 = arith.constant 0 : i32
    return %arg0, %arg1, %c0_i32, %c0_i32_0 : i32, i32, i32, i32
  }
  func.func @transform_1(%arg0: i32, %arg1: i32) -> (i32, i32, i32) {
    %c0_i32 = arith.constant 0 : i32
    %c0_i32_0 = arith.constant 0 : i32
    %c0_i32_1 = arith.constant 0 : i32
    return %arg1, %c0_i32, %c0_i32_0 : i32, i32, i32
  }
  func.func @transform_2(%arg0: i32, %arg1: i32) -> (i32, i32, i32, i32) {
    %c0_i32 = arith.constant 0 : i32
    %c0_i32_0 = arith.constant 0 : i32
    %c0_i32_1 = arith.constant 0 : i32
    %c0_i32_2 = arith.constant 0 : i32
    %c0_i32_3 = arith.constant 0 : i32
    return %c0_i32, %c0_i32_0, %c0_i32_1, %c0_i32_2 : i32, i32, i32, i32
  }
  func.func @transform_3(%arg0: i32, %arg1: i32) -> (i32, i32) {
    %c0_i32 = arith.constant 0 : i32
    %c0_i32_0 = arith.constant 0 : i32
    %c0_i32_1 = arith.constant 0 : i32
    return %c0_i32, %c0_i32_0 : i32, i32
  }
  func.func @transform_4(%arg0: i32, %arg1: i32) -> (i32, i32, i32, i32) {
    %c0_i32 = arith.constant 0 : i32
    %c0_i32_0 = arith.constant 0 : i32
    %c0_i32_1 = arith.constant 0 : i32
    %c0_i32_2 = arith.constant 0 : i32
    %c0_i32_3 = arith.constant 0 : i32
    return %c0_i32, %c0_i32_0, %c0_i32_1, %c0_i32_2 : i32, i32, i32, i32
  }
  func.func @transform_5(%arg0: i32, %arg1: i32) -> (i32, i32) {
    %c0_i32 = arith.constant 0 : i32
    %c0_i32_0 = arith.constant 0 : i32
    %c0_i32_1 = arith.constant 0 : i32
    return %c0_i32, %c0_i32_0 : i32, i32
  }
  func.func @transform_6(%arg0: i32, %arg1: i32) -> (i32, i32, i32, i32) {
    %c0_i32 = arith.constant 0 : i32
    %c0_i32_0 = arith.constant 0 : i32
    %c0_i32_1 = arith.constant 0 : i32
    return %arg0, %arg1, %c0_i32, %c0_i32_0 : i32, i32, i32, i32
  }
}

</mosaic_0001>

<llo_original>
// kernel: _lambda_.1
$region0: #{_lambda_.1}
  #allocation0 [shape = 'u32[]', space=smem, size = 0x4, offset = 0x4, fixed_abs, tag = 'smem constant byte address 0x4 - core index']
  #allocation1 [shape = 'u32[144,128]{1,0:T(1,128)}', space=vmem, size = 0x12000, scoped, tag = 'internal scratch']
  #allocation2 [shape = 'bf16[264,128]{1,0:T(8,128)(2,1)}', space=vmem, size = 0x10800, scoped, tag = 'scratch operand']
  %s0 = inlined_call_operand.vmem [shape: bf16[2,2,312,128], index: 0, kind: input, shape index: {}]
  %s1 = inlined_call_operand.vmem [shape: f32[2,240,1], index: 1, kind: input, shape index: {}]
  %s2 = inlined_call_operand.vmem [shape: bf16[3,3,128,128], index: 2, kind: input, shape index: {}]
  %s3 = inlined_call_operand.vmem [shape: f32[1,128], index: 3, kind: input, shape index: {}]
  %s4 = inlined_call_operand.vmem [shape: bf16[3,3,128,128], index: 4, kind: input, shape index: {}]
  %s5 = inlined_call_operand.vmem [shape: f32[1,128], index: 5, kind: input, shape index: {}]
  %s6 = inlined_call_operand.vmem [shape: f32[2,2,192,128], index: 6, kind: output, shape index: {}]
  %s7 = sld [smem:[#allocation0]]
  $region57: #{_lambda_.1} parent=0
    _
  %s9 = ssub.s32 1, %s7
  %s10 = scalar_select 0, %s9, %s7
  loop: start=0, step=1, limit=6
  $region2: #{_lambda_.1} parent=0 // loop_pre_header
    _
  $region3: #{_lambda_.1} parent=0 // loop_header
    %s12 = sphi 0, %s16
    %p13 = scmp.ge.s32.totalorder %s12, 6
    %s19 = sphi 0, %s31
    %s20 = sphi 0, %s27
    %s21 = sphi 0, %s19
    %s22 = sphi 0, %s20
    %s23 = sphi 0, %s21
    %s24 = sphi 0, %s22
    %s36 = sphi 0, %s38
    %s39 = sphi 0, %s36
    %s40 = sphi 0, %s39
    %s56 = sphi 0, %s40
    %s62 = sphi 0, %s64
    %s65 = sphi 0, %s62
    %s66 = sphi 0, %s65
    %s82 = sphi 0, %s66
    %s86 = sphi 0, %s86
    %s88 = sphi 0, %s86
    %s89 = sphi 0, %s88
    %s103 = sphi 0, %s89
    %s107 = sphi 0, %s107
    %s109 = sphi 0, %s107
    %s110 = sphi 0, %s109
    %s124 = sphi 0, %s110
    %s128 = sphi 0, %s128
    %s130 = sphi 0, %s128
    %s131 = sphi 0, %s130
    %s145 = sphi 0, %s131
    %s149 = sphi 0, %s149
    %s151 = sphi 0, %s149
    %s152 = sphi 0, %s151
    %s166 = sphi 0, %s152
    %s174 = sphi 0, %s176
    %s177 = sphi 0, %s174
    %s178 = sphi 0, %s177
    %s194 = sphi 0, %s178
  $region4: #{_lambda_.1} parent=0 // loop_header_branch
    %15 = sbr.rel (%p13) target = $region8
  $region5: #{_lambda_.1} parent=0 // loop_body
    %s17 = ssub.s32 %s12, 1
    %s18 = ssub.s32 %s12, 2
    %s25 = sadd.s32 1, %s20
    %p26 = scmp.ge.s32.totalorder %s25, 2
    %s27 = scalar_select %p26, 0, %s25
    %s28 = sadd.s32 1, %s19
    %s29 = scalar_select %p26, %s28, %s19
    %p30 = scmp.ge.s32.totalorder %s29, 2
    %s31 = scalar_select %p30, 0, %s29
    %s32 = ssub.s32 %s19, %s31
    %s33 = ssub.s32 %s20, %s27
    %s34 = sor.u32 %s32, %s33
    %p35 = scmp.eq.s32.totalorder %s34, 0
    %s37 = sadd.s32 %s36, 1
    %s38 = scalar_select %p35, %s36, %s37
    %p41 = pneg %p35
    %p42 = scmp.eq.s32.totalorder %s12, 3
    %p43 = por %p41, %p42
    %p44 = scmp.ne.s32.totalorder %s36, %s39
    %p45 = scmp.eq.s32.totalorder %s12, 0
    %p46 = por %p44, %p45
    %p47 = scmp.ne.s32.totalorder %s36, %s39
    %p48 = scmp.eq.s32.totalorder %s17, 3
    %p49 = por %p47, %p48
    %p50 = scmp.ne.s32.totalorder %s39, %s40
    %p51 = scmp.eq.s32.totalorder %s17, 0
    %p52 = por %p50, %p51
    %p53 = scmp.ne.s32.totalorder %s39, %s40
    %p54 = scmp.eq.s32.totalorder %s18, 3
    %p55 = por %p53, %p54
    %p57 = scmp.ne.s32.totalorder %s40, %s56
    %p58 = scmp.eq.s32.totalorder %s18, 0
    %p59 = por %p57, %p58
    %s60 = ssub.s32 %s20, %s27
    %p61 = scmp.eq.s32.totalorder %s60, 0
    %s63 = sadd.s32 %s62, 1
    %s64 = scalar_select %p61, %s62, %s63
    %p67 = pneg %p61
    %p68 = scmp.eq.s32.totalorder %s12, 3
    %p69 = por %p67, %p68
    %p70 = scmp.ne.s32.totalorder %s62, %s65
    %p71 = scmp.eq.s32.totalorder %s12, 0
    %p72 = por %p70, %p71
    %p73 = scmp.ne.s32.totalorder %s62, %s65
    %p74 = scmp.eq.s32.totalorder %s17, 3
    %p75 = por %p73, %p74
    %p76 = scmp.ne.s32.totalorder %s65, %s66
    %p77 = scmp.eq.s32.totalorder %s17, 0
    %p78 = por %p76, %p77
    %p79 = scmp.ne.s32.totalorder %s65, %s66
    %p80 = scmp.eq.s32.totalorder %s18, 3
    %p81 = por %p79, %p80
    %p83 = scmp.ne.s32.totalorder %s66, %s82
    %p84 = scmp.eq.s32.totalorder %s18, 0
    %p85 = por %p83, %p84
    %s87 = sadd.s32 %s86, 1
    %p90 = scmp.eq.s32.totalorder %s12, 3
    %p91 = scmp.ne.s32.totalorder %s86, %s88
    %p92 = scmp.eq.s32.totalorder %s12, 0
    %p93 = por %p91, %p92
    %p94 = scmp.ne.s32.totalorder %s86, %s88
    %p95 = scmp.eq.s32.totalorder %s17, 3
    %p96 = por %p94, %p95
    %p97 = scmp.ne.s32.totalorder %s88, %s89
    %p98 = scmp.eq.s32.totalorder %s17, 0
    %p99 = por %p97, %p98
    %p100 = scmp.ne.s32.totalorder %s88, %s89
    %p101 = scmp.eq.s32.totalorder %s18, 3
    %p102 = por %p100, %p101
    %p104 = scmp.ne.s32.totalorder %s89, %s103
    %p105 = scmp.eq.s32.totalorder %s18, 0
    %p106 = por %p104, %p105
    %s108 = sadd.s32 %s107, 1
    %p111 = scmp.eq.s32.totalorder %s12, 3
    %p112 = scmp.ne.s32.totalorder %s107, %s109
    %p113 = scmp.eq.s32.totalorder %s12, 0
    %p114 = por %p112, %p113
    %p115 = scmp.ne.s32.totalorder %s107, %s109
    %p116 = scmp.eq.s32.totalorder %s17, 3
    %p117 = por %p115, %p116
    %p118 = scmp.ne.s32.totalorder %s109, %s110
    %p119 = scmp.eq.s32.totalorder %s17, 0
    %p120 = por %p118, %p119
    %p121 = scmp.ne.s32.totalorder %s109, %s110
    %p122 = scmp.eq.s32.totalorder %s18, 3
    %p123 = por %p121, %p122
    %p125 = scmp.ne.s32.totalorder %s110, %s124
    %p126 = scmp.eq.s32.totalorder %s18, 0
    %p127 = por %p125, %p126
    %s129 = sadd.s32 %s128, 1
    %p132 = scmp.eq.s32.totalorder %s12, 3
    %p133 = scmp.ne.s32.totalorder %s128, %s130
    %p134 = scmp.eq.s32.totalorder %s12, 0
    %p135 = por %p133, %p134
    %p136 = scmp.ne.s32.totalorder %s128, %s130
    %p137 = scmp.eq.s32.totalorder %s17, 3
    %p138 = por %p136, %p137
    %p139 = scmp.ne.s32.totalorder %s130, %s131
    %p140 = scmp.eq.s32.totalorder %s17, 0
    %p141 = por %p139, %p140
    %p142 = scmp.ne.s32.totalorder %s130, %s131
    %p143 = scmp.eq.s32.totalorder %s18, 3
    %p144 = por %p142, %p143
    %p146 = scmp.ne.s32.totalorder %s131, %s145
    %p147 = scmp.eq.s32.totalorder %s18, 0
    %p148 = por %p146, %p147
    %s150 = sadd.s32 %s149, 1
    %p153 = scmp.eq.s32.totalorder %s12, 3
    %p154 = scmp.ne.s32.totalorder %s149, %s151
    %p155 = scmp.eq.s32.totalorder %s12, 0
    %p156 = por %p154, %p155
    %p157 = scmp.ne.s32.totalorder %s149, %s151
    %p158 = scmp.eq.s32.totalorder %s17, 3
    %p159 = por %p157, %p158
    %p160 = scmp.ne.s32.totalorder %s151, %s152
    %p161 = scmp.eq.s32.totalorder %s17, 0
    %p162 = por %p160, %p161
    %p163 = scmp.ne.s32.totalorder %s151, %s152
    %p164 = scmp.eq.s32.totalorder %s18, 3
    %p165 = por %p163, %p164
    %p167 = scmp.ne.s32.totalorder %s152, %s166
    %p168 = scmp.eq.s32.totalorder %s18, 0
    %p169 = por %p167, %p168
    %s170 = ssub.s32 %s19, %s31
    %s171 = ssub.s32 %s20, %s27
    %s172 = sor.u32 %s170, %s171
    %p173 = scmp.eq.s32.totalorder %s172, 0
    %s175 = sadd.s32 %s174, 1
    %s176 = scalar_select %p173, %s174, %s175
    %p179 = pneg %p173
    %p180 = scmp.eq.s32.totalorder %s12, 3
    %p181 = por %p179, %p180
    %p182 = scmp.ne.s32.totalorder %s174, %s177
    %p183 = scmp.eq.s32.totalorder %s12, 0
    %p184 = por %p182, %p183
    %p185 = scmp.ne.s32.totalorder %s174, %s177
    %p186 = scmp.eq.s32.totalorder %s17, 3
    %p187 = por %p185, %p186
    %p188 = scmp.ne.s32.totalorder %s177, %s178
    %p189 = scmp.eq.s32.totalorder %s17, 0
    %p190 = por %p188, %p189
    %p191 = scmp.ne.s32.totalorder %s177, %s178
    %p192 = scmp.eq.s32.totalorder %s18, 3
    %p193 = por %p191, %p192
    %p195 = scmp.ne.s32.totalorder %s178, %s194
    %p196 = scmp.eq.s32.totalorder %s18, 0
    %p197 = por %p195, %p196
    %p198 = scmp.le.s32.totalorder 1, %s12
    %p199 = scmp.lt.s32.totalorder %s12, 5
    %p200 = pnand %p198, %p199
    %p201 = pneg %p200
    // Predicated region
    $region9: #{_lambda_.1} parent=5 // pred_check
      _
    $region10: #{_lambda_.1} parent=5 // pred_check_branch
      %203 = sbr.rel (%p200) target = $region12
    $region11: #{_lambda_.1} parent=5 // pred_region
      %s204 = ssub.s32 %s12, 1
      // Predicated region
      $region13: #{_lambda_.1} parent=11 // pred_check
        %p205 = pneg %p99
      $region14: #{_lambda_.1} parent=11 // pred_check_branch
        %207 = sbr.rel (%p205) target = $region16
      $region15: #{_lambda_.1} parent=11 // pred_region
        _
      $region16: #{_lambda_.1} parent=11 // pred_fallthru
        _
      // Predicated region
      $region17: #{_lambda_.1} parent=11 // pred_check
        %p208 = pneg %p120
      $region18: #{_lambda_.1} parent=11 // pred_check_branch
        %210 = sbr.rel (%p208) target = $region20
      $region19: #{_lambda_.1} parent=11 // pred_region
        _
      $region20: #{_lambda_.1} parent=11 // pred_fallthru
        _
      // Predicated region
      $region21: #{_lambda_.1} parent=11 // pred_check
        %p211 = pneg %p141
      $region22: #{_lambda_.1} parent=11 // pred_check_branch
        %213 = sbr.rel (%p211) target = $region24
      $region23: #{_lambda_.1} parent=11 // pred_region
        _
      $region24: #{_lambda_.1} parent=11 // pred_fallthru
        _
      // Predicated region
      $region25: #{_lambda_.1} parent=11 // pred_check
        %p214 = pneg %p162
      $region26: #{_lambda_.1} parent=11 // pred_check_branch
        %216 = sbr.rel (%p214) target = $region28
      $region27: #{_lambda_.1} parent=11 // pred_region
        _
      $region28: #{_lambda_.1} parent=11 // pred_fallthru
        _
    $region12: #{_lambda_.1} parent=5 // pred_fallthru
      _
    %p217 = scmp.lt.s32.totalorder %s12, 4
    // Predicated region
    $region29: #{_lambda_.1} parent=5 // pred_check
      %p218 = pneg %p217
    $region30: #{_lambda_.1} parent=5 // pred_check_branch
      %220 = sbr.rel (%p218) target = $region32
    $region31: #{_lambda_.1} parent=5 // pred_region
      // Predicated region
      $region33: #{_lambda_.1} parent=31 // pred_check
        %p221 = pneg %p46
      $region34: #{_lambda_.1} parent=31 // pred_check_branch
        %223 = sbr.rel (%p221) target = $region36
      $region35: #{_lambda_.1} parent=31 // pred_region
        %p224 = scmp.lt.s32.totalorder %s19, 1
        %s225 = scalar_select %p224, %s19, 1
        %p226 = scmp.lt.s32.totalorder %s20, 1
        %s227 = scalar_select %p226, %s20, 1
        %s228 = smul.addr %s227, 39
        %s229 = smul.addr %s225, 78
        %s230 = sadd.s32 %s228, %s229
        %s231 = smul.addr %s230, 4
        %s232 = scalar_lea.vmem %s0, %s231
      $region36: #{_lambda_.1} parent=31 // pred_fallthru
        _
      // Predicated region
      $region37: #{_lambda_.1} parent=31 // pred_check
        %p233 = pneg %p72
      $region38: #{_lambda_.1} parent=31 // pred_check_branch
        %235 = sbr.rel (%p233) target = $region40
      $region39: #{_lambda_.1} parent=31 // pred_region
        %p236 = scmp.lt.s32.totalorder %s20, 1
        %s237 = scalar_select %p236, %s20, 1
        %s238 = smul.addr %s237, 30
        %s239 = smul.addr %s238, 8
        %s240 = scalar_lea.vmem %s1, %s239
      $region40: #{_lambda_.1} parent=31 // pred_fallthru
        _
    $region32: #{_lambda_.1} parent=5 // pred_fallthru
      _
    %p241 = scmp.le.s32.totalorder 1, %s12
    %p242 = scmp.lt.s32.totalorder %s12, 5
    %p243 = pnand %p241, %p242
    %p244 = pneg %p243
    // Predicated region
    $region41: #{_lambda_.1} parent=5 // pred_check
      _
    $region42: #{_lambda_.1} parent=5 // pred_check_branch
      %246 = sbr.rel (%p243) target = $region44
    $region43: #{_lambda_.1} parent=5 // pred_region
      %s247 = ssub.s32 %s12, 1
      %p248 = scmp.lt.s32.totalorder %s21, 1
      %s249 = scalar_select %p248, %s21, 1
      %p250 = scmp.lt.s32.totalorder %s22, 1
      %s251 = scalar_select %p250, %s22, 1
      %s252 = smul.addr %s251, 39
      %s253 = smul.addr %s249, 78
      %s254 = sadd.s32 %s252, %s253
      %s255 = smul.addr %s254, 4
      %s256 = scalar_lea.vmem %s0, %s255
      %p257 = pneg %p52
      %p258 = pneg %p49
      %p259 = scmp.lt.s32.totalorder %s22, 1
      %s260 = scalar_select %p259, %s22, 1
      %s261 = smul.addr %s260, 30
      %s262 = smul.addr %s261, 8
      %s263 = scalar_lea.vmem %s1, %s262
      %p264 = pneg %p78
      %p265 = pneg %p75
      %p266 = pneg %p99
      %p267 = pneg %p96
      %p268 = pneg %p120
      %p269 = pneg %p117
      %p270 = pneg %p141
      %p271 = pneg %p138
      %p272 = pneg %p162
      %p273 = pneg %p159
      %p274 = pneg %p190
      %p275 = pneg %p187
      %p276 = scmp.lt.s32.totalorder %s21, 1
      %s277 = scalar_select %p276, %s21, 1
      %p278 = scmp.lt.s32.totalorder %s22, 1
      %s279 = scalar_select %p278, %s22, 1
      %s280 = smul.addr %s279, 24
      %s281 = smul.addr %s277, 48
      %s282 = sadd.s32 %s280, %s281
      %s283 = smul.addr %s282, 8
      %s284 = scalar_lea.vmem %s6, %s283
      %p285 = scmp.lt.s32.totalorder %s21, 1
      %s286 = scalar_select %p285, %s21, 1
      %p287 = scmp.lt.s32.totalorder %s22, 1
      %s288 = scalar_select %p287, %s22, 1
      %s289 = smul.addr %s288, 39
      %s290 = smul.addr %s286, 78
      %s291 = sadd.s32 %s289, %s290
      %s292 = smul.addr %s291, 4
      %s293 = scalar_lea.vmem %s0, %s292
      %p294 = scmp.lt.s32.totalorder %s22, 1
      %s295 = scalar_select %p294, %s22, 1
      %s296 = smul.addr %s295, 30
      %s297 = smul.addr %s296, 8
      %s298 = scalar_lea.vmem %s1, %s297
      %p299 = scmp.lt.s32.totalorder %s21, 1
      %s300 = scalar_select %p299, %s21, 1
      %p301 = scmp.lt.s32.totalorder %s22, 1
      %s302 = scalar_select %p301, %s22, 1
      %s303 = smul.addr %s302, 24
      %s304 = smul.addr %s300, 48
      %s305 = sadd.s32 %s303, %s304
      %s306 = smul.addr %s305, 8
      %s307 = scalar_lea.vmem %s6, %s306
      %v309 = vld [vmem:[%s293] sm:$0xf]
      %v310 = vld [vmem:[%s293 + $0x4] sm:$0xf]
      %v311 = vld [vmem:[%s293 + $0x8] sm:$0xf]
      %v312 = vld [vmem:[%s293 + $0xc] sm:$0xf]
      %v313 = vld [vmem:[%s293 + $0x10] sm:$0xf]
      %v314 = vld [vmem:[%s293 + $0x14] sm:$0xf]
      %v315 = vld [vmem:[%s293 + $0x18] sm:$0xf]
      %v316 = vld [vmem:[%s293 + $0x1c] sm:$0xf]
      %v317 = vld [vmem:[%s293 + $0x20] sm:$0xf]
      %v318 = vld [vmem:[%s293 + $0x24] sm:$0xf]
      %v319 = vld [vmem:[%s293 + $0x28] sm:$0xf]
      %v320 = vld [vmem:[%s293 + $0x2c] sm:$0xf]
      %v321 = vld [vmem:[%s293 + $0x30] sm:$0xf]
      %v322 = vld [vmem:[%s293 + $0x34] sm:$0xf]
      %v323 = vld [vmem:[%s293 + $0x38] sm:$0xf]
      %v324 = vld [vmem:[%s293 + $0x3c] sm:$0xf]
      %v325 = vld [vmem:[%s293 + $0x40] sm:$0xf]
      %v326 = vld [vmem:[%s293 + $0x44] sm:$0xf]
      %v327 = vld [vmem:[%s293 + $0x48] sm:$0xf]
      %v328 = vld [vmem:[%s293 + $0x4c] sm:$0xf]
      %v329 = vld [vmem:[%s293 + $0x50] sm:$0xf]
      %v330 = vld [vmem:[%s293 + $0x54] sm:$0xf]
      %v331 = vld [vmem:[%s293 + $0x58] sm:$0xf]
      %v332 = vld [vmem:[%s293 + $0x5c] sm:$0xf]
      %v333 = vld [vmem:[%s293 + $0x60] sm:$0xf]
      %v334 = vld [vmem:[%s293 + $0x64] sm:$0xf]
      %v335 = vld [vmem:[%s293 + $0x68] sm:$0xf]
      %v336 = vld [vmem:[%s293 + $0x6c] sm:$0xf]
      %v337 = vld [vmem:[%s293 + $0x70] sm:$0xf]
      %v338 = vld [vmem:[%s293 + $0x74] sm:$0xf]
      %v339 = vld [vmem:[%s2] sm:$0xf]
      %v340 = vld [vmem:[%s2 + $0x4] sm:$0xf]
      %v341 = vld [vmem:[%s2 + $0x8] sm:$0xf]
      %v342 = vld [vmem:[%s2 + $0xc] sm:$0xf]
      %v343 = vld [vmem:[%s2 + $0x10] sm:$0xf]
      %v344 = vld [vmem:[%s2 + $0x14] sm:$0xf]
      %v345 = vld [vmem:[%s2 + $0x18] sm:$0xf]
      %v346 = vld [vmem:[%s2 + $0x1c] sm:$0xf]
      %v347 = vld [vmem:[%s2 + $0x20] sm:$0xf]
      %v348 = vld [vmem:[%s2 + $0x24] sm:$0xf]
      %v349 = vld [vmem:[%s2 + $0x28] sm:$0xf]
      %v350 = vld [vmem:[%s2 + $0x2c] sm:$0xf]
      %v351 = vld [vmem:[%s2 + $0x30] sm:$0xf]
      %v352 = vld [vmem:[%s2 + $0x34] sm:$0xf]
      %v353 = vld [vmem:[%s2 + $0x38] sm:$0xf]
      %v354 = vld [vmem:[%s2 + $0x3c] sm:$0xf]
      %v355 = vld [vmem:[%s293 + $0x78] sm:$0x1]
      %s356 = scalar_lea.vmem %s2, 64
      %v357 = vld [vmem:[%s356] sm:$0xf]
      %v358 = vld [vmem:[%s356 + $0x4] sm:$0xf]
      %v359 = vld [vmem:[%s356 + $0x8] sm:$0xf]
      %v360 = vld [vmem:[%s356 + $0xc] sm:$0xf]
      %v361 = vld [vmem:[%s356 + $0x10] sm:$0xf]
      %v362 = vld [vmem:[%s356 + $0x14] sm:$0xf]
      %v363 = vld [vmem:[%s356 + $0x18] sm:$0xf]
      %v364 = vld [vmem:[%s356 + $0x1c] sm:$0xf]
      %v365 = vld [vmem:[%s356 + $0x20] sm:$0xf]
      %v366 = vld [vmem:[%s356 + $0x24] sm:$0xf]
      %v367 = vld [vmem:[%s356 + $0x28] sm:$0xf]
      %v368 = vld [vmem:[%s356 + $0x2c] sm:$0xf]
      %v369 = vld [vmem:[%s356 + $0x30] sm:$0xf]
      %v370 = vld [vmem:[%s356 + $0x34] sm:$0xf]
      %v371 = vld [vmem:[%s356 + $0x38] sm:$0xf]
      %v372 = vld [vmem:[%s356 + $0x3c] sm:$0xf]
      %v404 = vunpack.c.l.b16 %v309
      %v405 = vunpack.c.l.b16 %v310
      %v406 = vunpack.c.l.b16 %v311
      %v407 = vunpack.c.l.b16 %v312
      %v408 = vunpack.c.l.b16 %v313
      %v409 = vunpack.c.l.b16 %v314
      %v410 = vunpack.c.l.b16 %v315
      %v411 = vunpack.c.l.b16 %v316
      %v412 = vunpack.c.l.b16 %v317
      %v413 = vunpack.c.l.b16 %v318
      %v414 = vunpack.c.l.b16 %v319
      %v415 = vunpack.c.l.b16 %v320
      %v416 = vunpack.c.l.b16 %v321
      %v417 = vunpack.c.l.b16 %v322
      %v418 = vunpack.c.l.b16 %v323
      %v419 = vunpack.c.l.b16 %v324
      %v420 = vunpack.c.l.b16 %v325
      %v421 = vunpack.c.l.b16 %v326
      %v422 = vunpack.c.l.b16 %v327
      %v423 = vunpack.c.l.b16 %v328
      %v424 = vunpack.c.l.b16 %v329
      %v425 = vunpack.c.l.b16 %v330
      %v426 = vunpack.c.l.b16 %v331
      %v427 = vunpack.c.l.b16 %v332
      %v428 = vunpack.c.l.b16 %v333
      %v429 = vunpack.c.l.b16 %v334
      %v430 = vunpack.c.l.b16 %v335
      %v431 = vunpack.c.l.b16 %v336
      %v432 = vunpack.c.l.b16 %v337
      %v433 = vunpack.c.l.b16 %v338
      %v434 = vunpack.c.l.b16 %v355
      %v435 = vpack.c.b16 %v405, %v404
      %v436 = vpack.c.b16 %v407, %v406
      %v437 = vpack.c.b16 %v409, %v408
      %v438 = vpack.c.b16 %v411, %v410
      %v439 = vpack.c.b16 %v413, %v412
      %v440 = vpack.c.b16 %v415, %v414
      %v441 = vpack.c.b16 %v417, %v416
      %v442 = vpack.c.b16 %v419, %v418
      %v443 = vpack.c.b16 %v421, %v420
      %v444 = vpack.c.b16 %v423, %v422
      %v445 = vpack.c.b16 %v425, %v424
      %v446 = vpack.c.b16 %v427, %v426
      %v447 = vpack.c.b16 %v429, %v428
      %v448 = vpack.c.b16 %v431, %v430
      %v449 = vpack.c.b16 %v433, %v432
      %v450 = vpack.c.b16 %v434, %v434
      %vm451 = vsmask.f32 7424
      %v453 = vshrl.u32 %v435, 16
      %v455 = vshll.u32 %v435, 16
      %v457 = vrot.slane %v455, 1
      %v458 = vor.u32 %v453, %v457
      %v460 = vshll.u32 %v436, 16
      %v462 = vrot.slane %v460, 1
      %v463 = vsel %vm451, %v458, %v462
      %v464 = vshrl.u32 %v436, 16
      %v466 = vor.u32 %v464, %v462
      %v468 = vshll.u32 %v437, 16
      %v470 = vrot.slane %v468, 1
      %v471 = vsel %vm451, %v466, %v470
      %v472 = vshrl.u32 %v437, 16
      %v474 = vor.u32 %v472, %v470
      %v476 = vshll.u32 %v438, 16
      %v478 = vrot.slane %v476, 1
      %v479 = vsel %vm451, %v474, %v478
      %v480 = vshrl.u32 %v438, 16
      %v482 = vor.u32 %v480, %v478
      %v484 = vshll.u32 %v439, 16
      %v486 = vrot.slane %v484, 1
      %v487 = vsel %vm451, %v482, %v486
      %v488 = vshrl.u32 %v439, 16
      %v490 = vor.u32 %v488, %v486
      %v492 = vshll.u32 %v440, 16
      %v494 = vrot.slane %v492, 1
      %v495 = vsel %vm451, %v490, %v494
      %v496 = vshrl.u32 %v440, 16
      %v498 = vor.u32 %v496, %v494
      %v500 = vshll.u32 %v441, 16
      %v502 = vrot.slane %v500, 1
      %v503 = vsel %vm451, %v498, %v502
      %v504 = vshrl.u32 %v441, 16
      %v506 = vor.u32 %v504, %v502
      %v508 = vshll.u32 %v442, 16
      %v510 = vrot.slane %v508, 1
      %v511 = vsel %vm451, %v506, %v510
      %v512 = vshrl.u32 %v442, 16
      %v514 = vor.u32 %v512, %v510
      %v516 = vshll.u32 %v443, 16
      %v518 = vrot.slane %v516, 1
      %v519 = vsel %vm451, %v514, %v518
      %v520 = vshrl.u32 %v443, 16
      %v522 = vor.u32 %v520, %v518
      %v524 = vshll.u32 %v444, 16
      %v526 = vrot.slane %v524, 1
      %v527 = vsel %vm451, %v522, %v526
      %v528 = vshrl.u32 %v444, 16
      %v530 = vor.u32 %v528, %v526
      %v532 = vshll.u32 %v445, 16
      %v534 = vrot.slane %v532, 1
      %v535 = vsel %vm451, %v530, %v534
      %v536 = vshrl.u32 %v445, 16
      %v538 = vor.u32 %v536, %v534
      %v540 = vshll.u32 %v446, 16
      %v542 = vrot.slane %v540, 1
      %v543 = vsel %vm451, %v538, %v542
      %v544 = vshrl.u32 %v446, 16
      %v546 = vor.u32 %v544, %v542
      %v548 = vshll.u32 %v447, 16
      %v550 = vrot.slane %v548, 1
      %v551 = vsel %vm451, %v546, %v550
      %v552 = vshrl.u32 %v447, 16
      %v554 = vor.u32 %v552, %v550
      %v556 = vshll.u32 %v448, 16
      %v558 = vrot.slane %v556, 1
      %v559 = vsel %vm451, %v554, %v558
      %v560 = vshrl.u32 %v448, 16
      %v562 = vor.u32 %v560, %v558
      %v564 = vshll.u32 %v449, 16
      %v566 = vrot.slane %v564, 1
      %v567 = vsel %vm451, %v562, %v566
      %v568 = vshrl.u32 %v449, 16
      %v570 = vor.u32 %v568, %v566
      %v572 = vshll.u32 %v450, 16
      %v574 = vrot.slane %v572, 1
      %v575 = vsel %vm451, %v570, %v574
      %v607 = vunpack.c.l.b16 %v357
      %v608 = vunpack.c.l.b16 %v358
      %v609 = vunpack.c.l.b16 %v359
      %v610 = vunpack.c.l.b16 %v360
      %v611 = vunpack.c.l.b16 %v361
      %v612 = vunpack.c.l.b16 %v362
      %v613 = vunpack.c.l.b16 %v363
      %v614 = vunpack.c.l.b16 %v364
      %v615 = vunpack.c.l.b16 %v365
      %v616 = vunpack.c.l.b16 %v366
      %v617 = vunpack.c.l.b16 %v367
      %v618 = vunpack.c.l.b16 %v368
      %v619 = vunpack.c.l.b16 %v369
      %v620 = vunpack.c.l.b16 %v370
      %v621 = vunpack.c.l.b16 %v371
      %v622 = vunpack.c.l.b16 %v372
      %v623 = vpack.c.b16 %v608, %v607
      %v624 = vpack.c.b16 %v610, %v609
      %v625 = vpack.c.b16 %v612, %v611
      %v626 = vpack.c.b16 %v614, %v613
      %v627 = vpack.c.b16 %v616, %v615
      %v628 = vpack.c.b16 %v618, %v617
      %v629 = vpack.c.b16 %v620, %v619
      %v630 = vpack.c.b16 %v622, %v621
      %639 = vmatprep.subr.bf16.mxu0 0
      %640 = vmatpush1.bf16.msra.mxu0 %v630
      %641 = vmatprep.subr.bf16.mxu0 0
      %642 = vmatpush1.bf16.msra.mxu0 %v629
      %643 = vmatprep.subr.bf16.mxu0 0
      %644 = vmatpush1.bf16.msra.mxu0 %v628
      %645 = vmatprep.subr.bf16.mxu0 0
      %646 = vmatpush1.bf16.msra.mxu0 %v627
      %647 = vmatprep.subr.bf16.mxu0 0
      %648 = vmatpush1.bf16.msra.mxu0 %v626
      %649 = vmatprep.subr.bf16.mxu0 0
      %650 = vmatpush1.bf16.msra.mxu0 %v625
      %651 = vmatprep.subr.bf16.mxu0 0
      %652 = vmatpush1.bf16.msra.mxu0 %v624
      %653 = vmatprep.subr.bf16.mxu0 0
      %654 = vmatpush1.bf16.msra.mxu0 %v623
      %655 = vmatprep.subr.bf16.mxu0 0
      %656 = vmatpush2.bf16.msra.mxu0 0
      %657 = vmatprep.subr.bf16.mxu0 0
      %658 = vmatpush2.bf16.msra.mxu0 0
      %659 = vmatprep.subr.bf16.mxu0 0
      %660 = vmatpush2.bf16.msra.mxu0 0
      %661 = vmatprep.subr.bf16.mxu0 0
      %662 = vmatpush2.bf16.msra.mxu0 0
      %663 = vmatprep.subr.bf16.mxu0 0
      %664 = vmatpush2.bf16.msra.mxu0 0
      %665 = vmatprep.subr.bf16.mxu0 0
      %666 = vmatpush2.bf16.msra.mxu0 0
      %667 = vmatprep.subr.bf16.mxu0 0
      %668 = vmatpush2.bf16.msra.mxu0 0
      %669 = vmatprep.subr.bf16.mxu0 0
      %670 = vmatpush2.bf16.msra.mxu0 0
      %671 = vmatprep.mubr.bf16.mxu0 0
      %672 = vmatmul.mubr.bf16.gmra.mxu0 %v463
      %v673 = vpop.f32.mrf.mxu0
      %v674 = vadd.f32 0.0, %v673
      %v675 = vpop.f32.mrf.mxu0
      %v676 = vpop.f32.mrf.mxu0
      %v677 = vadd.f32 0.0, %v676
      %v678 = vpop.f32.mrf.mxu0
      %679 = vmatprep.mubr.bf16.mxu0 0
      %680 = vmatmul.mubr.bf16.gmra.mxu0 %v471
      %v681 = vpop.f32.mrf.mxu0
      %v682 = vadd.f32 0.0, %v681
      %v683 = vpop.f32.mrf.mxu0
      %v684 = vpop.f32.mrf.mxu0
      %v685 = vadd.f32 0.0, %v684
      %v686 = vpop.f32.mrf.mxu0
      %687 = vmatprep.mubr.bf16.mxu0 0
      %688 = vmatmul.mubr.bf16.gmra.mxu0 %v479
      %v689 = vpop.f32.mrf.mxu0
      %v690 = vadd.f32 0.0, %v689
      %v691 = vpop.f32.mrf.mxu0
      %v692 = vpop.f32.mrf.mxu0
      %v693 = vadd.f32 0.0, %v692
      %v694 = vpop.f32.mrf.mxu0
      %695 = vmatprep.mubr.bf16.mxu0 0
      %696 = vmatmul.mubr.bf16.gmra.mxu0 %v487
      %v697 = vpop.f32.mrf.mxu0
      %v698 = vadd.f32 0.0, %v697
      %v699 = vpop.f32.mrf.mxu0
      %v700 = vpop.f32.mrf.mxu0
      %v701 = vadd.f32 0.0, %v700
      %v702 = vpop.f32.mrf.mxu0
      %703 = vmatprep.mubr.bf16.mxu0 0
      %704 = vmatmul.mubr.bf16.gmra.mxu0 %v495
      %v705 = vpop.f32.mrf.mxu0
      %v706 = vadd.f32 0.0, %v705
      %v707 = vpop.f32.mrf.mxu0
      %v708 = vpop.f32.mrf.mxu0
      %v709 = vadd.f32 0.0, %v708
      %v710 = vpop.f32.mrf.mxu0
      %711 = vmatprep.mubr.bf16.mxu0 0
      %712 = vmatmul.mubr.bf16.gmra.mxu0 %v503
      %v713 = vpop.f32.mrf.mxu0
      %v714 = vadd.f32 0.0, %v713
      %v715 = vpop.f32.mrf.mxu0
      %v716 = vpop.f32.mrf.mxu0
      %v717 = vadd.f32 0.0, %v716
      %v718 = vpop.f32.mrf.mxu0
      %719 = vmatprep.mubr.bf16.mxu0 0
      %720 = vmatmul.mubr.bf16.gmra.mxu0 %v511
      %v721 = vpop.f32.mrf.mxu0
      %v722 = vadd.f32 0.0, %v721
      %v723 = vpop.f32.mrf.mxu0
      %v724 = vpop.f32.mrf.mxu0
      %v725 = vadd.f32 0.0, %v724
      %v726 = vpop.f32.mrf.mxu0
      %727 = vmatprep.mubr.bf16.mxu0 0
      %728 = vmatmul.mubr.bf16.gmra.mxu0 %v519
      %v729 = vpop.f32.mrf.mxu0
      %v730 = vadd.f32 0.0, %v729
      %v731 = vpop.f32.mrf.mxu0
      %v732 = vpop.f32.mrf.mxu0
      %v733 = vadd.f32 0.0, %v732
      %v734 = vpop.f32.mrf.mxu0
      %735 = vmatprep.mubr.bf16.mxu0 0
      %736 = vmatmul.mubr.bf16.gmra.mxu0 %v527
      %v737 = vpop.f32.mrf.mxu0
      %v738 = vadd.f32 0.0, %v737
      %v739 = vpop.f32.mrf.mxu0
      %v740 = vpop.f32.mrf.mxu0
      %v741 = vadd.f32 0.0, %v740
      %v742 = vpop.f32.mrf.mxu0
      %743 = vmatprep.mubr.bf16.mxu0 0
      %744 = vmatmul.mubr.bf16.gmra.mxu0 %v535
      %v745 = vpop.f32.mrf.mxu0
      %v746 = vadd.f32 0.0, %v745
      %v747 = vpop.f32.mrf.mxu0
      %v748 = vpop.f32.mrf.mxu0
      %v749 = vadd.f32 0.0, %v748
      %v750 = vpop.f32.mrf.mxu0
      %751 = vmatprep.mubr.bf16.mxu0 0
      %752 = vmatmul.mubr.bf16.gmra.mxu0 %v543
      %v753 = vpop.f32.mrf.mxu0
      %v754 = vadd.f32 0.0, %v753
      %v755 = vpop.f32.mrf.mxu0
      %v756 = vpop.f32.mrf.mxu0
      %v757 = vadd.f32 0.0, %v756
      %v758 = vpop.f32.mrf.mxu0
      %759 = vmatprep.mubr.bf16.mxu0 0
      %760 = vmatmul.mubr.bf16.gmra.mxu0 %v551
      %v761 = vpop.f32.mrf.mxu0
      %v762 = vadd.f32 0.0, %v761
      %v763 = vpop.f32.mrf.mxu0
      %v764 = vpop.f32.mrf.mxu0
      %v765 = vadd.f32 0.0, %v764
      %v766 = vpop.f32.mrf.mxu0
      %767 = vmatprep.mubr.bf16.mxu0 0
      %768 = vmatmul.mubr.bf16.gmra.mxu0 %v559
      %v769 = vpop.f32.mrf.mxu0
      %v770 = vadd.f32 0.0, %v769
      %v771 = vpop.f32.mrf.mxu0
      %v772 = vpop.f32.mrf.mxu0
      %v773 = vadd.f32 0.0, %v772
      %v774 = vpop.f32.mrf.mxu0
      %775 = vmatprep.mubr.bf16.mxu0 0
      %776 = vmatmul.mubr.bf16.gmra.mxu0 %v567
      %v777 = vpop.f32.mrf.mxu0
      %v778 = vadd.f32 0.0, %v777
      %v779 = vpop.f32.mrf.mxu0
      %v780 = vpop.f32.mrf.mxu0
      %v781 = vadd.f32 0.0, %v780
      %v782 = vpop.f32.mrf.mxu0
      %783 = vmatprep.mubr.bf16.mxu0 0
      %784 = vmatmul.mubr.bf16.gmra.mxu0 %v575
      %v785 = vpop.f32.mrf.mxu0
      %v786 = vadd.f32 0.0, %v785
      %v787 = vpop.f32.mrf.mxu0
      %v788 = vpop.f32.mrf.mxu0
      %v789 = vadd.f32 0.0, %v788
      %v790 = vpop.f32.mrf.mxu0
      %791 = vdwg.mxu0
      %v823 = vunpack.c.l.b16 %v339
      %v824 = vunpack.c.l.b16 %v340
      %v825 = vunpack.c.l.b16 %v341
      %v826 = vunpack.c.l.b16 %v342
      %v827 = vunpack.c.l.b16 %v343
      %v828 = vunpack.c.l.b16 %v344
      %v829 = vunpack.c.l.b16 %v345
      %v830 = vunpack.c.l.b16 %v346
      %v831 = vunpack.c.l.b16 %v347
      %v832 = vunpack.c.l.b16 %v348
      %v833 = vunpack.c.l.b16 %v349
      %v834 = vunpack.c.l.b16 %v350
      %v835 = vunpack.c.l.b16 %v351
      %v836 = vunpack.c.l.b16 %v352
      %v837 = vunpack.c.l.b16 %v353
      %v838 = vunpack.c.l.b16 %v354
      %v839 = vpack.c.b16 %v824, %v823
      %v840 = vpack.c.b16 %v826, %v825
      %v841 = vpack.c.b16 %v828, %v827
      %v842 = vpack.c.b16 %v830, %v829
      %v843 = vpack.c.b16 %v832, %v831
      %v844 = vpack.c.b16 %v834, %v833
      %v845 = vpack.c.b16 %v836, %v835
      %v846 = vpack.c.b16 %v838, %v837
      %855 = vmatprep.subr.bf16.mxu0 0
      %856 = vmatpush1.bf16.msra.mxu0 %v846
      %857 = vmatprep.subr.bf16.mxu0 0
      %858 = vmatpush1.bf16.msra.mxu0 %v845
      %859 = vmatprep.subr.bf16.mxu0 0
      %860 = vmatpush1.bf16.msra.mxu0 %v844
      %861 = vmatprep.subr.bf16.mxu0 0
      %862 = vmatpush1.bf16.msra.mxu0 %v843
      %863 = vmatprep.subr.bf16.mxu0 0
      %864 = vmatpush1.bf16.msra.mxu0 %v842
      %865 = vmatprep.subr.bf16.mxu0 0
      %866 = vmatpush1.bf16.msra.mxu0 %v841
      %867 = vmatprep.subr.bf16.mxu0 0
      %868 = vmatpush1.bf16.msra.mxu0 %v840
      %869 = vmatprep.subr.bf16.mxu0 0
      %870 = vmatpush1.bf16.msra.mxu0 %v839
      %871 = vmatprep.subr.bf16.mxu0 0
      %872 = vmatpush2.bf16.msra.mxu0 0
      %873 = vmatprep.subr.bf16.mxu0 0
      %874 = vmatpush2.bf16.msra.mxu0 0
      %875 = vmatprep.subr.bf16.mxu0 0
      %876 = vmatpush2.bf16.msra.mxu0 0
      %877 = vmatprep.subr.bf16.mxu0 0
      %878 = vmatpush2.bf16.msra.mxu0 0
      %879 = vmatprep.subr.bf16.mxu0 0
      %880 = vmatpush2.bf16.msra.mxu0 0
      %881 = vmatprep.subr.bf16.mxu0 0
      %882 = vmatpush2.bf16.msra.mxu0 0
      %883 = vmatprep.subr.bf16.mxu0 0
      %884 = vmatpush2.bf16.msra.mxu0 0
      %885 = vmatprep.subr.bf16.mxu0 0
      %886 = vmatpush2.bf16.msra.mxu0 0
      %887 = vmatprep.mubr.bf16.mxu0 0
      %888 = vmatmul.mubr.bf16.gmra.mxu0 %v435
      %v889 = vpop.f32.mrf.mxu0
      %v890 = vadd.f32 %v674, %v889
      %v891 = vpop.f32.mrf.mxu0
      %v892 = vpop.f32.mrf.mxu0
      %v893 = vadd.f32 %v677, %v892
      %v894 = vpop.f32.mrf.mxu0
      %895 = vmatprep.mubr.bf16.mxu0 0
      %896 = vmatmul.mubr.bf16.gmra.mxu0 %v436
      %v897 = vpop.f32.mrf.mxu0
      %v898 = vadd.f32 %v682, %v897
      %v899 = vpop.f32.mrf.mxu0
      %v900 = vpop.f32.mrf.mxu0
      %v901 = vadd.f32 %v685, %v900
      %v902 = vpop.f32.mrf.mxu0
      %903 = vmatprep.mubr.bf16.mxu0 0
      %904 = vmatmul.mubr.bf16.gmra.mxu0 %v437
      %v905 = vpop.f32.mrf.mxu0
      %v906 = vadd.f32 %v690, %v905
      %v907 = vpop.f32.mrf.mxu0
      %v908 = vpop.f32.mrf.mxu0
      %v909 = vadd.f32 %v693, %v908
      %v910 = vpop.f32.mrf.mxu0
      %911 = vmatprep.mubr.bf16.mxu0 0
      %912 = vmatmul.mubr.bf16.gmra.mxu0 %v438
      %v913 = vpop.f32.mrf.mxu0
      %v914 = vadd.f32 %v698, %v913
      %v915 = vpop.f32.mrf.mxu0
      %v916 = vpop.f32.mrf.mxu0
      %v917 = vadd.f32 %v701, %v916
      %v918 = vpop.f32.mrf.mxu0
      %919 = vmatprep.mubr.bf16.mxu0 0
      %920 = vmatmul.mubr.bf16.gmra.mxu0 %v439
      %v921 = vpop.f32.mrf.mxu0
      %v922 = vadd.f32 %v706, %v921
      %v923 = vpop.f32.mrf.mxu0
      %v924 = vpop.f32.mrf.mxu0
      %v925 = vadd.f32 %v709, %v924
      %v926 = vpop.f32.mrf.mxu0
      %927 = vmatprep.mubr.bf16.mxu0 0
      %928 = vmatmul.mubr.bf16.gmra.mxu0 %v440
      %v929 = vpop.f32.mrf.mxu0
      %v930 = vadd.f32 %v714, %v929
      %v931 = vpop.f32.mrf.mxu0
      %v932 = vpop.f32.mrf.mxu0
      %v933 = vadd.f32 %v717, %v932
      %v934 = vpop.f32.mrf.mxu0
      %935 = vmatprep.mubr.bf16.mxu0 0
      %936 = vmatmul.mubr.bf16.gmra.mxu0 %v441
      %v937 = vpop.f32.mrf.mxu0
      %v938 = vadd.f32 %v722, %v937
      %v939 = vpop.f32.mrf.mxu0
      %v940 = vpop.f32.mrf.mxu0
      %v941 = vadd.f32 %v725, %v940
      %v942 = vpop.f32.mrf.mxu0
      %943 = vmatprep.mubr.bf16.mxu0 0
      %944 = vmatmul.mubr.bf16.gmra.mxu0 %v442
      %v945 = vpop.f32.mrf.mxu0
      %v946 = vadd.f32 %v730, %v945
      %v947 = vpop.f32.mrf.mxu0
      %v948 = vpop.f32.mrf.mxu0
      %v949 = vadd.f32 %v733, %v948
      %v950 = vpop.f32.mrf.mxu0
      %951 = vmatprep.mubr.bf16.mxu0 0
      %952 = vmatmul.mubr.bf16.gmra.mxu0 %v443
      %v953 = vpop.f32.mrf.mxu0
      %v954 = vadd.f32 %v738, %v953
      %v955 = vpop.f32.mrf.mxu0
      %v956 = vpop.f32.mrf.mxu0
      %v957 = vadd.f32 %v741, %v956
      %v958 = vpop.f32.mrf.mxu0
      %959 = vmatprep.mubr.bf16.mxu0 0
      %960 = vmatmul.mubr.bf16.gmra.mxu0 %v444
      %v961 = vpop.f32.mrf.mxu0
      %v962 = vadd.f32 %v746, %v961
      %v963 = vpop.f32.mrf.mxu0
      %v964 = vpop.f32.mrf.mxu0
      %v965 = vadd.f32 %v749, %v964
      %v966 = vpop.f32.mrf.mxu0
      %967 = vmatprep.mubr.bf16.mxu0 0
      %968 = vmatmul.mubr.bf16.gmra.mxu0 %v445
      %v969 = vpop.f32.mrf.mxu0
      %v970 = vadd.f32 %v754, %v969
      %v971 = vpop.f32.mrf.mxu0
      %v972 = vpop.f32.mrf.mxu0
      %v973 = vadd.f32 %v757, %v972
      %v974 = vpop.f32.mrf.mxu0
      %975 = vmatprep.mubr.bf16.mxu0 0
      %976 = vmatmul.mubr.bf16.gmra.mxu0 %v446
      %v977 = vpop.f32.mrf.mxu0
      %v978 = vadd.f32 %v762, %v977
      %v979 = vpop.f32.mrf.mxu0
      %v980 = vpop.f32.mrf.mxu0
      %v981 = vadd.f32 %v765, %v980
      %v982 = vpop.f32.mrf.mxu0
      %983 = vmatprep.mubr.bf16.mxu0 0
      %984 = vmatmul.mubr.bf16.gmra.mxu0 %v447
      %v985 = vpop.f32.mrf.mxu0
      %v986 = vadd.f32 %v770, %v985
      %v987 = vpop.f32.mrf.mxu0
      %v988 = vpop.f32.mrf.mxu0
      %v989 = vadd.f32 %v773, %v988
      %v990 = vpop.f32.mrf.mxu0
      %991 = vmatprep.mubr.bf16.mxu0 0
      %992 = vmatmul.mubr.bf16.gmra.mxu0 %v448
      %v993 = vpop.f32.mrf.mxu0
      %v994 = vadd.f32 %v778, %v993
      %v995 = vpop.f32.mrf.mxu0
      %v996 = vpop.f32.mrf.mxu0
      %v997 = vadd.f32 %v781, %v996
      %v998 = vpop.f32.mrf.mxu0
      %999 = vmatprep.mubr.bf16.mxu0 0
      %1000 = vmatmul.mubr.bf16.gmra.mxu0 %v449
      %v1001 = vpop.f32.mrf.mxu0
      %v1002 = vadd.f32 %v786, %v1001
      %v1003 = vpop.f32.mrf.mxu0
      %v1004 = vpop.f32.mrf.mxu0
      %v1005 = vadd.f32 %v789, %v1004
      %v1006 = vpop.f32.mrf.mxu0
      %1007 = vdwg.mxu0
      %v1008 = vld [vmem:[%s293] sm:$0xe]
      %s1009 = scalar_lea.vmem %s2, 128
      %v1010 = vld [vmem:[%s1009] sm:$0xf]
      %v1011 = vld [vmem:[%s1009 + $0x4] sm:$0xf]
      %v1012 = vld [vmem:[%s1009 + $0x8] sm:$0xf]
      %v1013 = vld [vmem:[%s1009 + $0xc] sm:$0xf]
      %v1014 = vld [vmem:[%s1009 + $0x10] sm:$0xf]
      %v1015 = vld [vmem:[%s1009 + $0x14] sm:$0xf]
      %v1016 = vld [vmem:[%s1009 + $0x18] sm:$0xf]
      %v1017 = vld [vmem:[%s1009 + $0x1c] sm:$0xf]
      %v1018 = vld [vmem:[%s1009 + $0x20] sm:$0xf]
      %v1019 = vld [vmem:[%s1009 + $0x24] sm:$0xf]
      %v1020 = vld [vmem:[%s1009 + $0x28] sm:$0xf]
      %v1021 = vld [vmem:[%s1009 + $0x2c] sm:$0xf]
      %v1022 = vld [vmem:[%s1009 + $0x30] sm:$0xf]
      %v1023 = vld [vmem:[%s1009 + $0x34] sm:$0xf]
      %v1024 = vld [vmem:[%s1009 + $0x38] sm:$0xf]
      %v1025 = vld [vmem:[%s1009 + $0x3c] sm:$0xf]
      %v1027 = vunpack.c.l.b16 %v1008
      %v1028 = vpack.c.b16 %v405, %v1027
      %vm1029 = vcmask 1046528
      %v1030 = vrot.slane %v1028, 1
      %v1031 = vrot.slane %v436, 1
      %v1032 = vsel %vm1029, %v1030, %v1031
      %v1033 = vrot.slane %v437, 1
      %v1034 = vsel %vm1029, %v1031, %v1033
      %v1035 = vrot.slane %v438, 1
      %v1036 = vsel %vm1029, %v1033, %v1035
      %v1037 = vrot.slane %v439, 1
      %v1038 = vsel %vm1029, %v1035, %v1037
      %v1039 = vrot.slane %v440, 1
      %v1040 = vsel %vm1029, %v1037, %v1039
      %v1041 = vrot.slane %v441, 1
      %v1042 = vsel %vm1029, %v1039, %v1041
      %v1043 = vrot.slane %v442, 1
      %v1044 = vsel %vm1029, %v1041, %v1043
      %v1045 = vrot.slane %v443, 1
      %v1046 = vsel %vm1029, %v1043, %v1045
      %v1047 = vrot.slane %v444, 1
      %v1048 = vsel %vm1029, %v1045, %v1047
      %v1049 = vrot.slane %v445, 1
      %v1050 = vsel %vm1029, %v1047, %v1049
      %v1051 = vrot.slane %v446, 1
      %v1052 = vsel %vm1029, %v1049, %v1051
      %v1053 = vrot.slane %v447, 1
      %v1054 = vsel %vm1029, %v1051, %v1053
      %v1055 = vrot.slane %v448, 1
      %v1056 = vsel %vm1029, %v1053, %v1055
      %v1057 = vrot.slane %v449, 1
      %v1058 = vsel %vm1029, %v1055, %v1057
      %v1059 = vrot.slane %v450, 1
      %v1060 = vsel %vm1029, %v1057, %v1059
      %v1092 = vunpack.c.l.b16 %v1010
      %v1093 = vunpack.c.l.b16 %v1011
      %v1094 = vunpack.c.l.b16 %v1012
      %v1095 = vunpack.c.l.b16 %v1013
      %v1096 = vunpack.c.l.b16 %v1014
      %v1097 = vunpack.c.l.b16 %v1015
      %v1098 = vunpack.c.l.b16 %v1016
      %v1099 = vunpack.c.l.b16 %v1017
      %v1100 = vunpack.c.l.b16 %v1018
      %v1101 = vunpack.c.l.b16 %v1019
      %v1102 = vunpack.c.l.b16 %v1020
      %v1103 = vunpack.c.l.b16 %v1021
      %v1104 = vunpack.c.l.b16 %v1022
      %v1105 = vunpack.c.l.b16 %v1023
      %v1106 = vunpack.c.l.b16 %v1024
      %v1107 = vunpack.c.l.b16 %v1025
      %v1108 = vpack.c.b16 %v1093, %v1092
      %v1109 = vpack.c.b16 %v1095, %v1094
      %v1110 = vpack.c.b16 %v1097, %v1096
      %v1111 = vpack.c.b16 %v1099, %v1098
      %v1112 = vpack.c.b16 %v1101, %v1100
      %v1113 = vpack.c.b16 %v1103, %v1102
      %v1114 = vpack.c.b16 %v1105, %v1104
      %v1115 = vpack.c.b16 %v1107, %v1106
      %1124 = vmatprep.subr.bf16.mxu0 0
      %1125 = vmatpush1.bf16.msra.mxu0 %v1115
      %1126 = vmatprep.subr.bf16.mxu0 0
      %1127 = vmatpush1.bf16.msra.mxu0 %v1114
      %1128 = vmatprep.subr.bf16.mxu0 0
      %1129 = vmatpush1.bf16.msra.mxu0 %v1113
      %1130 = vmatprep.subr.bf16.mxu0 0
      %1131 = vmatpush1.bf16.msra.mxu0 %v1112
      %1132 = vmatprep.subr.bf16.mxu0 0
      %1133 = vmatpush1.bf16.msra.mxu0 %v1111
      %1134 = vmatprep.subr.bf16.mxu0 0
      %1135 = vmatpush1.bf16.msra.mxu0 %v1110
      %1136 = vmatprep.subr.bf16.mxu0 0
      %1137 = vmatpush1.bf16.msra.mxu0 %v1109
      %1138 = vmatprep.subr.bf16.mxu0 0
      %1139 = vmatpush1.bf16.msra.mxu0 %v1108
      %1140 = vmatprep.subr.bf16.mxu0 0
      %1141 = vmatpush2.bf16.msra.mxu0 0
      %1142 = vmatprep.subr.bf16.mxu0 0
      %1143 = vmatpush2.bf16.msra.mxu0 0
      %1144 = vmatprep.subr.bf16.mxu0 0
      %1145 = vmatpush2.bf16.msra.mxu0 0
      %1146 = vmatprep.subr.bf16.mxu0 0
      %1147 = vmatpush2.bf16.msra.mxu0 0
      %1148 = vmatprep.subr.bf16.mxu0 0
      %1149 = vmatpush2.bf16.msra.mxu0 0
      %1150 = vmatprep.subr.bf16.mxu0 0
      %1151 = vmatpush2.bf16.msra.mxu0 0
      %1152 = vmatprep.subr.bf16.mxu0 0
      %1153 = vmatpush2.bf16.msra.mxu0 0
      %1154 = vmatprep.subr.bf16.mxu0 0
      %1155 = vmatpush2.bf16.msra.mxu0 0
      %1156 = vmatprep.mubr.bf16.mxu0 0
      %1157 = vmatmul.mubr.bf16.gmra.mxu0 %v1032
      %v1158 = vpop.f32.mrf.mxu0
      %v1159 = vadd.f32 0.0, %v1158
      %v1160 = vpop.f32.mrf.mxu0
      %v1161 = vpop.f32.mrf.mxu0
      %v1162 = vadd.f32 0.0, %v1161
      %v1163 = vpop.f32.mrf.mxu0
      %1164 = vmatprep.mubr.bf16.mxu0 0
      %1165 = vmatmul.mubr.bf16.gmra.mxu0 %v1034
      %v1166 = vpop.f32.mrf.mxu0
      %v1167 = vadd.f32 0.0, %v1166
      %v1168 = vpop.f32.mrf.mxu0
      %v1169 = vpop.f32.mrf.mxu0
      %v1170 = vadd.f32 0.0, %v1169
      %v1171 = vpop.f32.mrf.mxu0
      %1172 = vmatprep.mubr.bf16.mxu0 0
      %1173 = vmatmul.mubr.bf16.gmra.mxu0 %v1036
      %v1174 = vpop.f32.mrf.mxu0
      %v1175 = vadd.f32 0.0, %v1174
      %v1176 = vpop.f32.mrf.mxu0
      %v1177 = vpop.f32.mrf.mxu0
      %v1178 = vadd.f32 0.0, %v1177
      %v1179 = vpop.f32.mrf.mxu0
      %1180 = vmatprep.mubr.bf16.mxu0 0
      %1181 = vmatmul.mubr.bf16.gmra.mxu0 %v1038
      %v1182 = vpop.f32.mrf.mxu0
      %v1183 = vadd.f32 0.0, %v1182
      %v1184 = vpop.f32.mrf.mxu0
      %v1185 = vpop.f32.mrf.mxu0
      %v1186 = vadd.f32 0.0, %v1185
      %v1187 = vpop.f32.mrf.mxu0
      %1188 = vmatprep.mubr.bf16.mxu0 0
      %1189 = vmatmul.mubr.bf16.gmra.mxu0 %v1040
      %v1190 = vpop.f32.mrf.mxu0
      %v1191 = vadd.f32 0.0, %v1190
      %v1192 = vpop.f32.mrf.mxu0
      %v1193 = vpop.f32.mrf.mxu0
      %v1194 = vadd.f32 0.0, %v1193
      %v1195 = vpop.f32.mrf.mxu0
      %1196 = vmatprep.mubr.bf16.mxu0 0
      %1197 = vmatmul.mubr.bf16.gmra.mxu0 %v1042
      %v1198 = vpop.f32.mrf.mxu0
      %v1199 = vadd.f32 0.0, %v1198
      %v1200 = vpop.f32.mrf.mxu0
      %v1201 = vpop.f32.mrf.mxu0
      %v1202 = vadd.f32 0.0, %v1201
      %v1203 = vpop.f32.mrf.mxu0
      %1204 = vmatprep.mubr.bf16.mxu0 0
      %1205 = vmatmul.mubr.bf16.gmra.mxu0 %v1044
      %v1206 = vpop.f32.mrf.mxu0
      %v1207 = vadd.f32 0.0, %v1206
      %v1208 = vpop.f32.mrf.mxu0
      %v1209 = vpop.f32.mrf.mxu0
      %v1210 = vadd.f32 0.0, %v1209
      %v1211 = vpop.f32.mrf.mxu0
      %1212 = vmatprep.mubr.bf16.mxu0 0
      %1213 = vmatmul.mubr.bf16.gmra.mxu0 %v1046
      %v1214 = vpop.f32.mrf.mxu0
      %v1215 = vadd.f32 0.0, %v1214
      %v1216 = vpop.f32.mrf.mxu0
      %v1217 = vpop.f32.mrf.mxu0
      %v1218 = vadd.f32 0.0, %v1217
      %v1219 = vpop.f32.mrf.mxu0
      %1220 = vmatprep.mubr.bf16.mxu0 0
      %1221 = vmatmul.mubr.bf16.gmra.mxu0 %v1048
      %v1222 = vpop.f32.mrf.mxu0
      %v1223 = vadd.f32 0.0, %v1222
      %v1224 = vpop.f32.mrf.mxu0
      %v1225 = vpop.f32.mrf.mxu0
      %v1226 = vadd.f32 0.0, %v1225
      %v1227 = vpop.f32.mrf.mxu0
      %1228 = vmatprep.mubr.bf16.mxu0 0
      %1229 = vmatmul.mubr.bf16.gmra.mxu0 %v1050
      %v1230 = vpop.f32.mrf.mxu0
      %v1231 = vadd.f32 0.0, %v1230
      %v1232 = vpop.f32.mrf.mxu0
      %v1233 = vpop.f32.mrf.mxu0
      %v1234 = vadd.f32 0.0, %v1233
      %v1235 = vpop.f32.mrf.mxu0
      %1236 = vmatprep.mubr.bf16.mxu0 0
      %1237 = vmatmul.mubr.bf16.gmra.mxu0 %v1052
      %v1238 = vpop.f32.mrf.mxu0
      %v1239 = vadd.f32 0.0, %v1238
      %v1240 = vpop.f32.mrf.mxu0
      %v1241 = vpop.f32.mrf.mxu0
      %v1242 = vadd.f32 0.0, %v1241
      %v1243 = vpop.f32.mrf.mxu0
      %1244 = vmatprep.mubr.bf16.mxu0 0
      %1245 = vmatmul.mubr.bf16.gmra.mxu0 %v1054
      %v1246 = vpop.f32.mrf.mxu0
      %v1247 = vadd.f32 0.0, %v1246
      %v1248 = vpop.f32.mrf.mxu0
      %v1249 = vpop.f32.mrf.mxu0
      %v1250 = vadd.f32 0.0, %v1249
      %v1251 = vpop.f32.mrf.mxu0
      %1252 = vmatprep.mubr.bf16.mxu0 0
      %1253 = vmatmul.mubr.bf16.gmra.mxu0 %v1056
      %v1254 = vpop.f32.mrf.mxu0
      %v1255 = vadd.f32 0.0, %v1254
      %v1256 = vpop.f32.mrf.mxu0
      %v1257 = vpop.f32.mrf.mxu0
      %v1258 = vadd.f32 0.0, %v1257
      %v1259 = vpop.f32.mrf.mxu0
      %1260 = vmatprep.mubr.bf16.mxu0 0
      %1261 = vmatmul.mubr.bf16.gmra.mxu0 %v1058
      %v1262 = vpop.f32.mrf.mxu0
      %v1263 = vadd.f32 0.0, %v1262
      %v1264 = vpop.f32.mrf.mxu0
      %v1265 = vpop.f32.mrf.mxu0
      %v1266 = vadd.f32 0.0, %v1265
      %v1267 = vpop.f32.mrf.mxu0
      %1268 = vmatprep.mubr.bf16.mxu0 0
      %1269 = vmatmul.mubr.bf16.gmra.mxu0 %v1060
      %v1270 = vpop.f32.mrf.mxu0
      %v1271 = vadd.f32 0.0, %v1270
      %v1272 = vpop.f32.mrf.mxu0
      %v1273 = vpop.f32.mrf.mxu0
      %v1274 = vadd.f32 0.0, %v1273
      %v1275 = vpop.f32.mrf.mxu0
      %1276 = vdwg.mxu0
      %v1277 = vadd.f32 %v890, %v1159
      %v1278 = vadd.f32 %v893, %v1162
      %v1279 = vadd.f32 %v898, %v1167
      %v1280 = vadd.f32 %v901, %v1170
      %v1281 = vadd.f32 %v906, %v1175
      %v1282 = vadd.f32 %v909, %v1178
      %v1283 = vadd.f32 %v914, %v1183
      %v1284 = vadd.f32 %v917, %v1186
      %v1285 = vadd.f32 %v922, %v1191
      %v1286 = vadd.f32 %v925, %v1194
      %v1287 = vadd.f32 %v930, %v1199
      %v1288 = vadd.f32 %v933, %v1202
      %v1289 = vadd.f32 %v938, %v1207
      %v1290 = vadd.f32 %v941, %v1210
      %v1291 = vadd.f32 %v946, %v1215
      %v1292 = vadd.f32 %v949, %v1218
      %v1293 = vadd.f32 %v954, %v1223
      %v1294 = vadd.f32 %v957, %v1226
      %v1295 = vadd.f32 %v962, %v1231
      %v1296 = vadd.f32 %v965, %v1234
      %v1297 = vadd.f32 %v970, %v1239
      %v1298 = vadd.f32 %v973, %v1242
      %v1299 = vadd.f32 %v978, %v1247
      %v1300 = vadd.f32 %v981, %v1250
      %v1301 = vadd.f32 %v986, %v1255
      %v1302 = vadd.f32 %v989, %v1258
      %v1303 = vadd.f32 %v994, %v1263
      %v1304 = vadd.f32 %v997, %v1266
      %v1305 = vadd.f32 %v1002, %v1271
      %v1306 = vadd.f32 %v1005, %v1274
      %v1307 = vld [vmem:[%s293 + $0xc] sm:$0xf]
      %v1308 = vld [vmem:[%s293 + $0x10] sm:$0xf]
      %v1309 = vld [vmem:[%s293 + $0x14] sm:$0xf]
      %v1310 = vld [vmem:[%s293 + $0x18] sm:$0xf]
      %v1311 = vld [vmem:[%s293 + $0x1c] sm:$0xf]
      %v1312 = vld [vmem:[%s293 + $0x20] sm:$0xf]
      %v1313 = vld [vmem:[%s293 + $0x24] sm:$0xf]
      %v1314 = vld [vmem:[%s293 + $0x28] sm:$0xf]
      %v1315 = vld [vmem:[%s293 + $0x2c] sm:$0xf]
      %v1316 = vld [vmem:[%s293 + $0x30] sm:$0xf]
      %v1317 = vld [vmem:[%s293 + $0x34] sm:$0xf]
      %v1318 = vld [vmem:[%s293 + $0x38] sm:$0xf]
      %v1319 = vld [vmem:[%s293 + $0x3c] sm:$0xf]
      %v1320 = vld [vmem:[%s293 + $0x40] sm:$0xf]
      %v1321 = vld [vmem:[%s293 + $0x44] sm:$0xf]
      %v1322 = vld [vmem:[%s293 + $0x48] sm:$0xf]
      %v1323 = vld [vmem:[%s293 + $0x4c] sm:$0xf]
      %v1324 = vld [vmem:[%s293 + $0x50] sm:$0xf]
      %v1325 = vld [vmem:[%s293 + $0x54] sm:$0xf]
      %v1326 = vld [vmem:[%s293 + $0x58] sm:$0xf]
      %v1327 = vld [vmem:[%s293 + $0x5c] sm:$0xf]
      %v1328 = vld [vmem:[%s293 + $0x60] sm:$0xf]
      %v1329 = vld [vmem:[%s293 + $0x64] sm:$0xf]
      %v1330 = vld [vmem:[%s293 + $0x68] sm:$0xf]
      %v1331 = vld [vmem:[%s293 + $0x6c] sm:$0xf]
      %v1332 = vld [vmem:[%s293 + $0x70] sm:$0xf]
      %v1333 = vld [vmem:[%s293 + $0x74] sm:$0xf]
      %v1334 = vld [vmem:[%s293 + $0x78] sm:$0xf]
      %v1335 = vld [vmem:[%s293 + $0x7c] sm:$0xf]
      %v1336 = vld [vmem:[%s293 + $0x80] sm:$0xf]
      %s1337 = scalar_lea.vmem %s2, 192
      %v1338 = vld [vmem:[%s1337] sm:$0xf]
      %v1339 = vld [vmem:[%s1337 + $0x4] sm:$0xf]
      %v1340 = vld [vmem:[%s1337 + $0x8] sm:$0xf]
      %v1341 = vld [vmem:[%s1337 + $0xc] sm:$0xf]
      %v1342 = vld [vmem:[%s1337 + $0x10] sm:$0xf]
      %v1343 = vld [vmem:[%s1337 + $0x14] sm:$0xf]
      %v1344 = vld [vmem:[%s1337 + $0x18] sm:$0xf]
      %v1345 = vld [vmem:[%s1337 + $0x1c] sm:$0xf]
      %v1346 = vld [vmem:[%s1337 + $0x20] sm:$0xf]
      %v1347 = vld [vmem:[%s1337 + $0x24] sm:$0xf]
      %v1348 = vld [vmem:[%s1337 + $0x28] sm:$0xf]
      %v1349 = vld [vmem:[%s1337 + $0x2c] sm:$0xf]
      %v1350 = vld [vmem:[%s1337 + $0x30] sm:$0xf]
      %v1351 = vld [vmem:[%s1337 + $0x34] sm:$0xf]
      %v1352 = vld [vmem:[%s1337 + $0x38] sm:$0xf]
      %v1353 = vld [vmem:[%s1337 + $0x3c] sm:$0xf]
      %v1384 = vunpack.c.l.b16 %v1307
      %v1385 = vunpack.c.l.b16 %v1308
      %v1386 = vunpack.c.l.b16 %v1309
      %v1387 = vunpack.c.l.b16 %v1310
      %v1388 = vunpack.c.l.b16 %v1311
      %v1389 = vunpack.c.l.b16 %v1312
      %v1390 = vunpack.c.l.b16 %v1313
      %v1391 = vunpack.c.l.b16 %v1314
      %v1392 = vunpack.c.l.b16 %v1315
      %v1393 = vunpack.c.l.b16 %v1316
      %v1394 = vunpack.c.l.b16 %v1317
      %v1395 = vunpack.c.l.b16 %v1318
      %v1396 = vunpack.c.l.b16 %v1319
      %v1397 = vunpack.c.l.b16 %v1320
      %v1398 = vunpack.c.l.b16 %v1321
      %v1399 = vunpack.c.l.b16 %v1322
      %v1400 = vunpack.c.l.b16 %v1323
      %v1401 = vunpack.c.l.b16 %v1324
      %v1402 = vunpack.c.l.b16 %v1325
      %v1403 = vunpack.c.l.b16 %v1326
      %v1404 = vunpack.c.l.b16 %v1327
      %v1405 = vunpack.c.l.b16 %v1328
      %v1406 = vunpack.c.l.b16 %v1329
      %v1407 = vunpack.c.l.b16 %v1330
      %v1408 = vunpack.c.l.b16 %v1331
      %v1409 = vunpack.c.l.b16 %v1332
      %v1410 = vunpack.c.l.b16 %v1333
      %v1411 = vunpack.c.l.b16 %v1334
      %v1412 = vunpack.c.l.b16 %v1335
      %v1413 = vunpack.c.l.b16 %v1336
      %v1414 = vpack.c.b16 %v1385, %v1384
      %v1415 = vpack.c.b16 %v1387, %v1386
      %v1416 = vpack.c.b16 %v1389, %v1388
      %v1417 = vpack.c.b16 %v1391, %v1390
      %v1418 = vpack.c.b16 %v1393, %v1392
      %v1419 = vpack.c.b16 %v1395, %v1394
      %v1420 = vpack.c.b16 %v1397, %v1396
      %v1421 = vpack.c.b16 %v1399, %v1398
      %v1422 = vpack.c.b16 %v1401, %v1400
      %v1423 = vpack.c.b16 %v1403, %v1402
      %v1424 = vpack.c.b16 %v1405, %v1404
      %v1425 = vpack.c.b16 %v1407, %v1406
      %v1426 = vpack.c.b16 %v1409, %v1408
      %v1427 = vpack.c.b16 %v1411, %v1410
      %v1428 = vpack.c.b16 %v1413, %v1412
      %v1460 = vunpack.c.l.b16 %v1338
      %v1461 = vunpack.c.l.b16 %v1339
      %v1462 = vunpack.c.l.b16 %v1340
      %v1463 = vunpack.c.l.b16 %v1341
      %v1464 = vunpack.c.l.b16 %v1342
      %v1465 = vunpack.c.l.b16 %v1343
      %v1466 = vunpack.c.l.b16 %v1344
      %v1467 = vunpack.c.l.b16 %v1345
      %v1468 = vunpack.c.l.b16 %v1346
      %v1469 = vunpack.c.l.b16 %v1347
      %v1470 = vunpack.c.l.b16 %v1348
      %v1471 = vunpack.c.l.b16 %v1349
      %v1472 = vunpack.c.l.b16 %v1350
      %v1473 = vunpack.c.l.b16 %v1351
      %v1474 = vunpack.c.l.b16 %v1352
      %v1475 = vunpack.c.l.b16 %v1353
      %v1476 = vpack.c.b16 %v1461, %v1460
      %v1477 = vpack.c.b16 %v1463, %v1462
      %v1478 = vpack.c.b16 %v1465, %v1464
      %v1479 = vpack.c.b16 %v1467, %v1466
      %v1480 = vpack.c.b16 %v1469, %v1468
      %v1481 = vpack.c.b16 %v1471, %v1470
      %v1482 = vpack.c.b16 %v1473, %v1472
      %v1483 = vpack.c.b16 %v1475, %v1474
      %1492 = vmatprep.subr.bf16.mxu0 0
      %1493 = vmatpush1.bf16.msra.mxu0 %v1483
      %1494 = vmatprep.subr.bf16.mxu0 0
      %1495 = vmatpush1.bf16.msra.mxu0 %v1482
      %1496 = vmatprep.subr.bf16.mxu0 0
      %1497 = vmatpush1.bf16.msra.mxu0 %v1481
      %1498 = vmatprep.subr.bf16.mxu0 0
      %1499 = vmatpush1.bf16.msra.mxu0 %v1480
      %1500 = vmatprep.subr.bf16.mxu0 0
      %1501 = vmatpush1.bf16.msra.mxu0 %v1479
      %1502 = vmatprep.subr.bf16.mxu0 0
      %1503 = vmatpush1.bf16.msra.mxu0 %v1478
      %1504 = vmatprep.subr.bf16.mxu0 0
      %1505 = vmatpush1.bf16.msra.mxu0 %v1477
      %1506 = vmatprep.subr.bf16.mxu0 0
      %1507 = vmatpush1.bf16.msra.mxu0 %v1476
      %1508 = vmatprep.subr.bf16.mxu0 0
      %1509 = vmatpush2.bf16.msra.mxu0 0
      %1510 = vmatprep.subr.bf16.mxu0 0
      %1511 = vmatpush2.bf16.msra.mxu0 0
      %1512 = vmatprep.subr.bf16.mxu0 0
      %1513 = vmatpush2.bf16.msra.mxu0 0
      %1514 = vmatprep.subr.bf16.mxu0 0
      %1515 = vmatpush2.bf16.msra.mxu0 0
      %1516 = vmatprep.subr.bf16.mxu0 0
      %1517 = vmatpush2.bf16.msra.mxu0 0
      %1518 = vmatprep.subr.bf16.mxu0 0
      %1519 = vmatpush2.bf16.msra.mxu0 0
      %1520 = vmatprep.subr.bf16.mxu0 0
      %1521 = vmatpush2.bf16.msra.mxu0 0
      %1522 = vmatprep.subr.bf16.mxu0 0
      %1523 = vmatpush2.bf16.msra.mxu0 0
      %1524 = vmatprep.mubr.bf16.mxu0 0
      %1525 = vmatmul.mubr.bf16.gmra.mxu0 %v1414
      %v1526 = vpop.f32.mrf.mxu0
      %v1527 = vadd.f32 0.0, %v1526
      %v1528 = vpop.f32.mrf.mxu0
      %v1529 = vpop.f32.mrf.mxu0
      %v1530 = vadd.f32 0.0, %v1529
      %v1531 = vpop.f32.mrf.mxu0
      %1532 = vmatprep.mubr.bf16.mxu0 0
      %1533 = vmatmul.mubr.bf16.gmra.mxu0 %v1415
      %v1534 = vpop.f32.mrf.mxu0
      %v1535 = vadd.f32 0.0, %v1534
      %v1536 = vpop.f32.mrf.mxu0
      %v1537 = vpop.f32.mrf.mxu0
      %v1538 = vadd.f32 0.0, %v1537
      %v1539 = vpop.f32.mrf.mxu0
      %1540 = vmatprep.mubr.bf16.mxu0 0
      %1541 = vmatmul.mubr.bf16.gmra.mxu0 %v1416
      %v1542 = vpop.f32.mrf.mxu0
      %v1543 = vadd.f32 0.0, %v1542
      %v1544 = vpop.f32.mrf.mxu0
      %v1545 = vpop.f32.mrf.mxu0
      %v1546 = vadd.f32 0.0, %v1545
      %v1547 = vpop.f32.mrf.mxu0
      %1548 = vmatprep.mubr.bf16.mxu0 0
      %1549 = vmatmul.mubr.bf16.gmra.mxu0 %v1417
      %v1550 = vpop.f32.mrf.mxu0
      %v1551 = vadd.f32 0.0, %v1550
      %v1552 = vpop.f32.mrf.mxu0
      %v1553 = vpop.f32.mrf.mxu0
      %v1554 = vadd.f32 0.0, %v1553
      %v1555 = vpop.f32.mrf.mxu0
      %1556 = vmatprep.mubr.bf16.mxu0 0
      %1557 = vmatmul.mubr.bf16.gmra.mxu0 %v1418
      %v1558 = vpop.f32.mrf.mxu0
      %v1559 = vadd.f32 0.0, %v1558
      %v1560 = vpop.f32.mrf.mxu0
      %v1561 = vpop.f32.mrf.mxu0
      %v1562 = vadd.f32 0.0, %v1561
      %v1563 = vpop.f32.mrf.mxu0
      %1564 = vmatprep.mubr.bf16.mxu0 0
      %1565 = vmatmul.mubr.bf16.gmra.mxu0 %v1419
      %v1566 = vpop.f32.mrf.mxu0
      %v1567 = vadd.f32 0.0, %v1566
      %v1568 = vpop.f32.mrf.mxu0
      %v1569 = vpop.f32.mrf.mxu0
      %v1570 = vadd.f32 0.0, %v1569
      %v1571 = vpop.f32.mrf.mxu0
      %1572 = vmatprep.mubr.bf16.mxu0 0
      %1573 = vmatmul.mubr.bf16.gmra.mxu0 %v1420
      %v1574 = vpop.f32.mrf.mxu0
      %v1575 = vadd.f32 0.0, %v1574
      %v1576 = vpop.f32.mrf.mxu0
      %v1577 = vpop.f32.mrf.mxu0
      %v1578 = vadd.f32 0.0, %v1577
      %v1579 = vpop.f32.mrf.mxu0
      %1580 = vmatprep.mubr.bf16.mxu0 0
      %1581 = vmatmul.mubr.bf16.gmra.mxu0 %v1421
      %v1582 = vpop.f32.mrf.mxu0
      %v1583 = vadd.f32 0.0, %v1582
      %v1584 = vpop.f32.mrf.mxu0
      %v1585 = vpop.f32.mrf.mxu0
      %v1586 = vadd.f32 0.0, %v1585
      %v1587 = vpop.f32.mrf.mxu0
      %1588 = vmatprep.mubr.bf16.mxu0 0
      %1589 = vmatmul.mubr.bf16.gmra.mxu0 %v1422
      %v1590 = vpop.f32.mrf.mxu0
      %v1591 = vadd.f32 0.0, %v1590
      %v1592 = vpop.f32.mrf.mxu0
      %v1593 = vpop.f32.mrf.mxu0
      %v1594 = vadd.f32 0.0, %v1593
      %v1595 = vpop.f32.mrf.mxu0
      %1596 = vmatprep.mubr.bf16.mxu0 0
      %1597 = vmatmul.mubr.bf16.gmra.mxu0 %v1423
      %v1598 = vpop.f32.mrf.mxu0
      %v1599 = vadd.f32 0.0, %v1598
      %v1600 = vpop.f32.mrf.mxu0
      %v1601 = vpop.f32.mrf.mxu0
      %v1602 = vadd.f32 0.0, %v1601
      %v1603 = vpop.f32.mrf.mxu0
      %1604 = vmatprep.mubr.bf16.mxu0 0
      %1605 = vmatmul.mubr.bf16.gmra.mxu0 %v1424
      %v1606 = vpop.f32.mrf.mxu0
      %v1607 = vadd.f32 0.0, %v1606
      %v1608 = vpop.f32.mrf.mxu0
      %v1609 = vpop.f32.mrf.mxu0
      %v1610 = vadd.f32 0.0, %v1609
      %v1611 = vpop.f32.mrf.mxu0
      %1612 = vmatprep.mubr.bf16.mxu0 0
      %1613 = vmatmul.mubr.bf16.gmra.mxu0 %v1425
      %v1614 = vpop.f32.mrf.mxu0
      %v1615 = vadd.f32 0.0, %v1614
      %v1616 = vpop.f32.mrf.mxu0
      %v1617 = vpop.f32.mrf.mxu0
      %v1618 = vadd.f32 0.0, %v1617
      %v1619 = vpop.f32.mrf.mxu0
      %1620 = vmatprep.mubr.bf16.mxu0 0
      %1621 = vmatmul.mubr.bf16.gmra.mxu0 %v1426
      %v1622 = vpop.f32.mrf.mxu0
      %v1623 = vadd.f32 0.0, %v1622
      %v1624 = vpop.f32.mrf.mxu0
      %v1625 = vpop.f32.mrf.mxu0
      %v1626 = vadd.f32 0.0, %v1625
      %v1627 = vpop.f32.mrf.mxu0
      %1628 = vmatprep.mubr.bf16.mxu0 0
      %1629 = vmatmul.mubr.bf16.gmra.mxu0 %v1427
      %v1630 = vpop.f32.mrf.mxu0
      %v1631 = vadd.f32 0.0, %v1630
      %v1632 = vpop.f32.mrf.mxu0
      %v1633 = vpop.f32.mrf.mxu0
      %v1634 = vadd.f32 0.0, %v1633
      %v1635 = vpop.f32.mrf.mxu0
      %1636 = vmatprep.mubr.bf16.mxu0 0
      %1637 = vmatmul.mubr.bf16.gmra.mxu0 %v1428
      %v1638 = vpop.f32.mrf.mxu0
      %v1639 = vadd.f32 0.0, %v1638
      %v1640 = vpop.f32.mrf.mxu0
      %v1641 = vpop.f32.mrf.mxu0
      %v1642 = vadd.f32 0.0, %v1641
      %v1643 = vpop.f32.mrf.mxu0
      %1644 = vdwg.mxu0
      %v1645 = vadd.f32 %v1277, %v1527
      %v1646 = vadd.f32 %v1278, %v1530
      %v1647 = vadd.f32 %v1279, %v1535
      %v1648 = vadd.f32 %v1280, %v1538
      %v1649 = vadd.f32 %v1281, %v1543
      %v1650 = vadd.f32 %v1282, %v1546
      %v1651 = vadd.f32 %v1283, %v1551
      %v1652 = vadd.f32 %v1284, %v1554
      %v1653 = vadd.f32 %v1285, %v1559
      %v1654 = vadd.f32 %v1286, %v1562
      %v1655 = vadd.f32 %v1287, %v1567
      %v1656 = vadd.f32 %v1288, %v1570
      %v1657 = vadd.f32 %v1289, %v1575
      %v1658 = vadd.f32 %v1290, %v1578
      %v1659 = vadd.f32 %v1291, %v1583
      %v1660 = vadd.f32 %v1292, %v1586
      %v1661 = vadd.f32 %v1293, %v1591
      %v1662 = vadd.f32 %v1294, %v1594
      %v1663 = vadd.f32 %v1295, %v1599
      %v1664 = vadd.f32 %v1296, %v1602
      %v1665 = vadd.f32 %v1297, %v1607
      %v1666 = vadd.f32 %v1298, %v1610
      %v1667 = vadd.f32 %v1299, %v1615
      %v1668 = vadd.f32 %v1300, %v1618
      %v1669 = vadd.f32 %v1301, %v1623
      %v1670 = vadd.f32 %v1302, %v1626
      %v1671 = vadd.f32 %v1303, %v1631
      %v1672 = vadd.f32 %v1304, %v1634
      %v1673 = vadd.f32 %v1305, %v1639
      %v1674 = vadd.f32 %v1306, %v1642
      %v1675 = vld [vmem:[%s293 + $0xc] sm:$0xf]
      %v1676 = vld [vmem:[%s293 + $0x10] sm:$0xf]
      %v1677 = vld [vmem:[%s293 + $0x14] sm:$0xf]
      %v1678 = vld [vmem:[%s293 + $0x18] sm:$0xf]
      %v1679 = vld [vmem:[%s293 + $0x1c] sm:$0xf]
      %v1680 = vld [vmem:[%s293 + $0x20] sm:$0xf]
      %v1681 = vld [vmem:[%s293 + $0x24] sm:$0xf]
      %v1682 = vld [vmem:[%s293 + $0x28] sm:$0xf]
      %v1683 = vld [vmem:[%s293 + $0x2c] sm:$0xf]
      %v1684 = vld [vmem:[%s293 + $0x30] sm:$0xf]
      %v1685 = vld [vmem:[%s293 + $0x34] sm:$0xf]
      %v1686 = vld [vmem:[%s293 + $0x38] sm:$0xf]
      %v1687 = vld [vmem:[%s293 + $0x3c] sm:$0xf]
      %v1688 = vld [vmem:[%s293 + $0x40] sm:$0xf]
      %v1689 = vld [vmem:[%s293 + $0x44] sm:$0xf]
      %v1690 = vld [vmem:[%s293 + $0x48] sm:$0xf]
      %v1691 = vld [vmem:[%s293 + $0x4c] sm:$0xf]
      %v1692 = vld [vmem:[%s293 + $0x50] sm:$0xf]
      %v1693 = vld [vmem:[%s293 + $0x54] sm:$0xf]
      %v1694 = vld [vmem:[%s293 + $0x58] sm:$0xf]
      %v1695 = vld [vmem:[%s293 + $0x5c] sm:$0xf]
      %v1696 = vld [vmem:[%s293 + $0x60] sm:$0xf]
      %v1697 = vld [vmem:[%s293 + $0x64] sm:$0xf]
      %v1698 = vld [vmem:[%s293 + $0x68] sm:$0xf]
      %v1699 = vld [vmem:[%s293 + $0x6c] sm:$0xf]
      %v1700 = vld [vmem:[%s293 + $0x70] sm:$0xf]
      %v1701 = vld [vmem:[%s293 + $0x74] sm:$0xf]
      %v1702 = vld [vmem:[%s293 + $0x78] sm:$0xf]
      %v1703 = vld [vmem:[%s293 + $0x7c] sm:$0xf]
      %v1704 = vld [vmem:[%s293 + $0x80] sm:$0xf]
      %v1705 = vld [vmem:[%s293 + $0x84] sm:$0x1]
      %s1706 = scalar_lea.vmem %s2, 256
      %v1707 = vld [vmem:[%s1706] sm:$0xf]
      %v1708 = vld [vmem:[%s1706 + $0x4] sm:$0xf]
      %v1709 = vld [vmem:[%s1706 + $0x8] sm:$0xf]
      %v1710 = vld [vmem:[%s1706 + $0xc] sm:$0xf]
      %v1711 = vld [vmem:[%s1706 + $0x10] sm:$0xf]
      %v1712 = vld [vmem:[%s1706 + $0x14] sm:$0xf]
      %v1713 = vld [vmem:[%s1706 + $0x18] sm:$0xf]
      %v1714 = vld [vmem:[%s1706 + $0x1c] sm:$0xf]
      %v1715 = vld [vmem:[%s1706 + $0x20] sm:$0xf]
      %v1716 = vld [vmem:[%s1706 + $0x24] sm:$0xf]
      %v1717 = vld [vmem:[%s1706 + $0x28] sm:$0xf]
      %v1718 = vld [vmem:[%s1706 + $0x2c] sm:$0xf]
      %v1719 = vld [vmem:[%s1706 + $0x30] sm:$0xf]
      %v1720 = vld [vmem:[%s1706 + $0x34] sm:$0xf]
      %v1721 = vld [vmem:[%s1706 + $0x38] sm:$0xf]
      %v1722 = vld [vmem:[%s1706 + $0x3c] sm:$0xf]
      %v1754 = vunpack.c.l.b16 %v1675
      %v1755 = vunpack.c.l.b16 %v1676
      %v1756 = vunpack.c.l.b16 %v1677
      %v1757 = vunpack.c.l.b16 %v1678
      %v1758 = vunpack.c.l.b16 %v1679
      %v1759 = vunpack.c.l.b16 %v1680
      %v1760 = vunpack.c.l.b16 %v1681
      %v1761 = vunpack.c.l.b16 %v1682
      %v1762 = vunpack.c.l.b16 %v1683
      %v1763 = vunpack.c.l.b16 %v1684
      %v1764 = vunpack.c.l.b16 %v1685
      %v1765 = vunpack.c.l.b16 %v1686
      %v1766 = vunpack.c.l.b16 %v1687
      %v1767 = vunpack.c.l.b16 %v1688
      %v1768 = vunpack.c.l.b16 %v1689
      %v1769 = vunpack.c.l.b16 %v1690
      %v1770 = vunpack.c.l.b16 %v1691
      %v1771 = vunpack.c.l.b16 %v1692
      %v1772 = vunpack.c.l.b16 %v1693
      %v1773 = vunpack.c.l.b16 %v1694
      %v1774 = vunpack.c.l.b16 %v1695
      %v1775 = vunpack.c.l.b16 %v1696
      %v1776 = vunpack.c.l.b16 %v1697
      %v1777 = vunpack.c.l.b16 %v1698
      %v1778 = vunpack.c.l.b16 %v1699
      %v1779 = vunpack.c.l.b16 %v1700
      %v1780 = vunpack.c.l.b16 %v1701
      %v1781 = vunpack.c.l.b16 %v1702
      %v1782 = vunpack.c.l.b16 %v1703
      %v1783 = vunpack.c.l.b16 %v1704
      %v1784 = vunpack.c.l.b16 %v1705
      %v1785 = vpack.c.b16 %v1755, %v1754
      %v1786 = vpack.c.b16 %v1757, %v1756
      %v1787 = vpack.c.b16 %v1759, %v1758
      %v1788 = vpack.c.b16 %v1761, %v1760
      %v1789 = vpack.c.b16 %v1763, %v1762
      %v1790 = vpack.c.b16 %v1765, %v1764
      %v1791 = vpack.c.b16 %v1767, %v1766
      %v1792 = vpack.c.b16 %v1769, %v1768
      %v1793 = vpack.c.b16 %v1771, %v1770
      %v1794 = vpack.c.b16 %v1773, %v1772
      %v1795 = vpack.c.b16 %v1775, %v1774
      %v1796 = vpack.c.b16 %v1777, %v1776
      %v1797 = vpack.c.b16 %v1779, %v1778
      %v1798 = vpack.c.b16 %v1781, %v1780
      %v1799 = vpack.c.b16 %v1783, %v1782
      %v1800 = vpack.c.b16 %v1784, %v1784
      %v1802 = vshrl.u32 %v1785, 16
      %v1804 = vshll.u32 %v1785, 16
      %v1806 = vrot.slane %v1804, 1
      %v1807 = vor.u32 %v1802, %v1806
      %v1809 = vshll.u32 %v1786, 16
      %v1811 = vrot.slane %v1809, 1
      %v1812 = vsel %vm451, %v1807, %v1811
      %v1813 = vshrl.u32 %v1786, 16
      %v1815 = vor.u32 %v1813, %v1811
      %v1817 = vshll.u32 %v1787, 16
      %v1819 = vrot.slane %v1817, 1
      %v1820 = vsel %vm451, %v1815, %v1819
      %v1821 = vshrl.u32 %v1787, 16
      %v1823 = vor.u32 %v1821, %v1819
      %v1825 = vshll.u32 %v1788, 16
      %v1827 = vrot.slane %v1825, 1
      %v1828 = vsel %vm451, %v1823, %v1827
      %v1829 = vshrl.u32 %v1788, 16
      %v1831 = vor.u32 %v1829, %v1827
      %v1833 = vshll.u32 %v1789, 16
      %v1835 = vrot.slane %v1833, 1
      %v1836 = vsel %vm451, %v1831, %v1835
      %v1837 = vshrl.u32 %v1789, 16
      %v1839 = vor.u32 %v1837, %v1835
      %v1841 = vshll.u32 %v1790, 16
      %v1843 = vrot.slane %v1841, 1
      %v1844 = vsel %vm451, %v1839, %v1843
      %v1845 = vshrl.u32 %v1790, 16
      %v1847 = vor.u32 %v1845, %v1843
      %v1849 = vshll.u32 %v1791, 16
      %v1851 = vrot.slane %v1849, 1
      %v1852 = vsel %vm451, %v1847, %v1851
      %v1853 = vshrl.u32 %v1791, 16
      %v1855 = vor.u32 %v1853, %v1851
      %v1857 = vshll.u32 %v1792, 16
      %v1859 = vrot.slane %v1857, 1
      %v1860 = vsel %vm451, %v1855, %v1859
      %v1861 = vshrl.u32 %v1792, 16
      %v1863 = vor.u32 %v1861, %v1859
      %v1865 = vshll.u32 %v1793, 16
      %v1867 = vrot.slane %v1865, 1
      %v1868 = vsel %vm451, %v1863, %v1867
      %v1869 = vshrl.u32 %v1793, 16
      %v1871 = vor.u32 %v1869, %v1867
      %v1873 = vshll.u32 %v1794, 16
      %v1875 = vrot.slane %v1873, 1
      %v1876 = vsel %vm451, %v1871, %v1875
      %v1877 = vshrl.u32 %v1794, 16
      %v1879 = vor.u32 %v1877, %v1875
      %v1881 = vshll.u32 %v1795, 16
      %v1883 = vrot.slane %v1881, 1
      %v1884 = vsel %vm451, %v1879, %v1883
      %v1885 = vshrl.u32 %v1795, 16
      %v1887 = vor.u32 %v1885, %v1883
      %v1889 = vshll.u32 %v1796, 16
      %v1891 = vrot.slane %v1889, 1
      %v1892 = vsel %vm451, %v1887, %v1891
      %v1893 = vshrl.u32 %v1796, 16
      %v1895 = vor.u32 %v1893, %v1891
      %v1897 = vshll.u32 %v1797, 16
      %v1899 = vrot.slane %v1897, 1
      %v1900 = vsel %vm451, %v1895, %v1899
      %v1901 = vshrl.u32 %v1797, 16
      %v1903 = vor.u32 %v1901, %v1899
      %v1905 = vshll.u32 %v1798, 16
      %v1907 = vrot.slane %v1905, 1
      %v1908 = vsel %vm451, %v1903, %v1907
      %v1909 = vshrl.u32 %v1798, 16
      %v1911 = vor.u32 %v1909, %v1907
      %v1913 = vshll.u32 %v1799, 16
      %v1915 = vrot.slane %v1913, 1
      %v1916 = vsel %vm451, %v1911, %v1915
      %v1917 = vshrl.u32 %v1799, 16
      %v1919 = vor.u32 %v1917, %v1915
      %v1921 = vshll.u32 %v1800, 16
      %v1923 = vrot.slane %v1921, 1
      %v1924 = vsel %vm451, %v1919, %v1923
      %v1956 = vunpack.c.l.b16 %v1707
      %v1957 = vunpack.c.l.b16 %v1708
      %v1958 = vunpack.c.l.b16 %v1709
      %v1959 = vunpack.c.l.b16 %v1710
      %v1960 = vunpack.c.l.b16 %v1711
      %v1961 = vunpack.c.l.b16 %v1712
      %v1962 = vunpack.c.l.b16 %v1713
      %v1963 = vunpack.c.l.b16 %v1714
      %v1964 = vunpack.c.l.b16 %v1715
      %v1965 = vunpack.c.l.b16 %v1716
      %v1966 = vunpack.c.l.b16 %v1717
      %v1967 = vunpack.c.l.b16 %v1718
      %v1968 = vunpack.c.l.b16 %v1719
      %v1969 = vunpack.c.l.b16 %v1720
      %v1970 = vunpack.c.l.b16 %v1721
      %v1971 = vunpack.c.l.b16 %v1722
      %v1972 = vpack.c.b16 %v1957, %v1956
      %v1973 = vpack.c.b16 %v1959, %v1958
      %v1974 = vpack.c.b16 %v1961, %v1960
      %v1975 = vpack.c.b16 %v1963, %v1962
      %v1976 = vpack.c.b16 %v1965, %v1964
      %v1977 = vpack.c.b16 %v1967, %v1966
      %v1978 = vpack.c.b16 %v1969, %v1968
      %v1979 = vpack.c.b16 %v1971, %v1970
      %1988 = vmatprep.subr.bf16.mxu0 0
      %1989 = vmatpush1.bf16.msra.mxu0 %v1979
      %1990 = vmatprep.subr.bf16.mxu0 0
      %1991 = vmatpush1.bf16.msra.mxu0 %v1978
      %1992 = vmatprep.subr.bf16.mxu0 0
      %1993 = vmatpush1.bf16.msra.mxu0 %v1977
      %1994 = vmatprep.subr.bf16.mxu0 0
      %1995 = vmatpush1.bf16.msra.mxu0 %v1976
      %1996 = vmatprep.subr.bf16.mxu0 0
      %1997 = vmatpush1.bf16.msra.mxu0 %v1975
      %1998 = vmatprep.subr.bf16.mxu0 0
      %1999 = vmatpush1.bf16.msra.mxu0 %v1974
      %2000 = vmatprep.subr.bf16.mxu0 0
      %2001 = vmatpush1.bf16.msra.mxu0 %v1973
      %2002 = vmatprep.subr.bf16.mxu0 0
      %2003 = vmatpush1.bf16.msra.mxu0 %v1972
      %2004 = vmatprep.subr.bf16.mxu0 0
      %2005 = vmatpush2.bf16.msra.mxu0 0
      %2006 = vmatprep.subr.bf16.mxu0 0
      %2007 = vmatpush2.bf16.msra.mxu0 0
      %2008 = vmatprep.subr.bf16.mxu0 0
      %2009 = vmatpush2.bf16.msra.mxu0 0
      %2010 = vmatprep.subr.bf16.mxu0 0
      %2011 = vmatpush2.bf16.msra.mxu0 0
      %2012 = vmatprep.subr.bf16.mxu0 0
      %2013 = vmatpush2.bf16.msra.mxu0 0
      %2014 = vmatprep.subr.bf16.mxu0 0
      %2015 = vmatpush2.bf16.msra.mxu0 0
      %2016 = vmatprep.subr.bf16.mxu0 0
      %2017 = vmatpush2.bf16.msra.mxu0 0
      %2018 = vmatprep.subr.bf16.mxu0 0
      %2019 = vmatpush2.bf16.msra.mxu0 0
      %2020 = vmatprep.mubr.bf16.mxu0 0
      %2021 = vmatmul.mubr.bf16.gmra.mxu0 %v1812
      %v2022 = vpop.f32.mrf.mxu0
      %v2023 = vadd.f32 0.0, %v2022
      %v2024 = vpop.f32.mrf.mxu0
      %v2025 = vpop.f32.mrf.mxu0
      %v2026 = vadd.f32 0.0, %v2025
      %v2027 = vpop.f32.mrf.mxu0
      %2028 = vmatprep.mubr.bf16.mxu0 0
      %2029 = vmatmul.mubr.bf16.gmra.mxu0 %v1820
      %v2030 = vpop.f32.mrf.mxu0
      %v2031 = vadd.f32 0.0, %v2030
      %v2032 = vpop.f32.mrf.mxu0
      %v2033 = vpop.f32.mrf.mxu0
      %v2034 = vadd.f32 0.0, %v2033
      %v2035 = vpop.f32.mrf.mxu0
      %2036 = vmatprep.mubr.bf16.mxu0 0
      %2037 = vmatmul.mubr.bf16.gmra.mxu0 %v1828
      %v2038 = vpop.f32.mrf.mxu0
      %v2039 = vadd.f32 0.0, %v2038
      %v2040 = vpop.f32.mrf.mxu0
      %v2041 = vpop.f32.mrf.mxu0
      %v2042 = vadd.f32 0.0, %v2041
      %v2043 = vpop.f32.mrf.mxu0
      %2044 = vmatprep.mubr.bf16.mxu0 0
      %2045 = vmatmul.mubr.bf16.gmra.mxu0 %v1836
      %v2046 = vpop.f32.mrf.mxu0
      %v2047 = vadd.f32 0.0, %v2046
      %v2048 = vpop.f32.mrf.mxu0
      %v2049 = vpop.f32.mrf.mxu0
      %v2050 = vadd.f32 0.0, %v2049
      %v2051 = vpop.f32.mrf.mxu0
      %2052 = vmatprep.mubr.bf16.mxu0 0
      %2053 = vmatmul.mubr.bf16.gmra.mxu0 %v1844
      %v2054 = vpop.f32.mrf.mxu0
      %v2055 = vadd.f32 0.0, %v2054
      %v2056 = vpop.f32.mrf.mxu0
      %v2057 = vpop.f32.mrf.mxu0
      %v2058 = vadd.f32 0.0, %v2057
      %v2059 = vpop.f32.mrf.mxu0
      %2060 = vmatprep.mubr.bf16.mxu0 0
      %2061 = vmatmul.mubr.bf16.gmra.mxu0 %v1852
      %v2062 = vpop.f32.mrf.mxu0
      %v2063 = vadd.f32 0.0, %v2062
      %v2064 = vpop.f32.mrf.mxu0
      %v2065 = vpop.f32.mrf.mxu0
      %v2066 = vadd.f32 0.0, %v2065
      %v2067 = vpop.f32.mrf.mxu0
      %2068 = vmatprep.mubr.bf16.mxu0 0
      %2069 = vmatmul.mubr.bf16.gmra.mxu0 %v1860
      %v2070 = vpop.f32.mrf.mxu0
      %v2071 = vadd.f32 0.0, %v2070
      %v2072 = vpop.f32.mrf.mxu0
      %v2073 = vpop.f32.mrf.mxu0
      %v2074 = vadd.f32 0.0, %v2073
      %v2075 = vpop.f32.mrf.mxu0
      %2076 = vmatprep.mubr.bf16.mxu0 0
      %2077 = vmatmul.mubr.bf16.gmra.mxu0 %v1868
      %v2078 = vpop.f32.mrf.mxu0
      %v2079 = vadd.f32 0.0, %v2078
      %v2080 = vpop.f32.mrf.mxu0
      %v2081 = vpop.f32.mrf.mxu0
      %v2082 = vadd.f32 0.0, %v2081
      %v2083 = vpop.f32.mrf.mxu0
      %2084 = vmatprep.mubr.bf16.mxu0 0
      %2085 = vmatmul.mubr.bf16.gmra.mxu0 %v1876
      %v2086 = vpop.f32.mrf.mxu0
      %v2087 = vadd.f32 0.0, %v2086
      %v2088 = vpop.f32.mrf.mxu0
      %v2089 = vpop.f32.mrf.mxu0
      %v2090 = vadd.f32 0.0, %v2089
      %v2091 = vpop.f32.mrf.mxu0
      %2092 = vmatprep.mubr.bf16.mxu0 0
      %2093 = vmatmul.mubr.bf16.gmra.mxu0 %v1884
      %v2094 = vpop.f32.mrf.mxu0
      %v2095 = vadd.f32 0.0, %v2094
      %v2096 = vpop.f32.mrf.mxu0
      %v2097 = vpop.f32.mrf.mxu0
      %v2098 = vadd.f32 0.0, %v2097
      %v2099 = vpop.f32.mrf.mxu0
      %2100 = vmatprep.mubr.bf16.mxu0 0
      %2101 = vmatmul.mubr.bf16.gmra.mxu0 %v1892
      %v2102 = vpop.f32.mrf.mxu0
      %v2103 = vadd.f32 0.0, %v2102
      %v2104 = vpop.f32.mrf.mxu0
      %v2105 = vpop.f32.mrf.mxu0
      %v2106 = vadd.f32 0.0, %v2105
      %v2107 = vpop.f32.mrf.mxu0
      %2108 = vmatprep.mubr.bf16.mxu0 0
      %2109 = vmatmul.mubr.bf16.gmra.mxu0 %v1900
      %v2110 = vpop.f32.mrf.mxu0
      %v2111 = vadd.f32 0.0, %v2110
      %v2112 = vpop.f32.mrf.mxu0
      %v2113 = vpop.f32.mrf.mxu0
      %v2114 = vadd.f32 0.0, %v2113
      %v2115 = vpop.f32.mrf.mxu0
      %2116 = vmatprep.mubr.bf16.mxu0 0
      %2117 = vmatmul.mubr.bf16.gmra.mxu0 %v1908
      %v2118 = vpop.f32.mrf.mxu0
      %v2119 = vadd.f32 0.0, %v2118
      %v2120 = vpop.f32.mrf.mxu0
      %v2121 = vpop.f32.mrf.mxu0
      %v2122 = vadd.f32 0.0, %v2121
      %v2123 = vpop.f32.mrf.mxu0
      %2124 = vmatprep.mubr.bf16.mxu0 0
      %2125 = vmatmul.mubr.bf16.gmra.mxu0 %v1916
      %v2126 = vpop.f32.mrf.mxu0
      %v2127 = vadd.f32 0.0, %v2126
      %v2128 = vpop.f32.mrf.mxu0
      %v2129 = vpop.f32.mrf.mxu0
      %v2130 = vadd.f32 0.0, %v2129
      %v2131 = vpop.f32.mrf.mxu0
      %2132 = vmatprep.mubr.bf16.mxu0 0
      %2133 = vmatmul.mubr.bf16.gmra.mxu0 %v1924
      %v2134 = vpop.f32.mrf.mxu0
      %v2135 = vadd.f32 0.0, %v2134
      %v2136 = vpop.f32.mrf.mxu0
      %v2137 = vpop.f32.mrf.mxu0
      %v2138 = vadd.f32 0.0, %v2137
      %v2139 = vpop.f32.mrf.mxu0
      %2140 = vdwg.mxu0
      %v2141 = vadd.f32 %v1645, %v2023
      %v2142 = vadd.f32 %v1646, %v2026
      %v2143 = vadd.f32 %v1647, %v2031
      %v2144 = vadd.f32 %v1648, %v2034
      %v2145 = vadd.f32 %v1649, %v2039
      %v2146 = vadd.f32 %v1650, %v2042
      %v2147 = vadd.f32 %v1651, %v2047
      %v2148 = vadd.f32 %v1652, %v2050
      %v2149 = vadd.f32 %v1653, %v2055
      %v2150 = vadd.f32 %v1654, %v2058
      %v2151 = vadd.f32 %v1655, %v2063
      %v2152 = vadd.f32 %v1656, %v2066
      %v2153 = vadd.f32 %v1657, %v2071
      %v2154 = vadd.f32 %v1658, %v2074
      %v2155 = vadd.f32 %v1659, %v2079
      %v2156 = vadd.f32 %v1660, %v2082
      %v2157 = vadd.f32 %v1661, %v2087
      %v2158 = vadd.f32 %v1662, %v2090
      %v2159 = vadd.f32 %v1663, %v2095
      %v2160 = vadd.f32 %v1664, %v2098
      %v2161 = vadd.f32 %v1665, %v2103
      %v2162 = vadd.f32 %v1666, %v2106
      %v2163 = vadd.f32 %v1667, %v2111
      %v2164 = vadd.f32 %v1668, %v2114
      %v2165 = vadd.f32 %v1669, %v2119
      %v2166 = vadd.f32 %v1670, %v2122
      %v2167 = vadd.f32 %v1671, %v2127
      %v2168 = vadd.f32 %v1672, %v2130
      %v2169 = vadd.f32 %v1673, %v2135
      %v2170 = vadd.f32 %v1674, %v2138
      %v2171 = vld [vmem:[%s293 + $0xc] sm:$0xe]
      %s2172 = scalar_lea.vmem %s2, 320
      %v2173 = vld [vmem:[%s2172] sm:$0xf]
      %v2174 = vld [vmem:[%s2172 + $0x4] sm:$0xf]
      %v2175 = vld [vmem:[%s2172 + $0x8] sm:$0xf]
      %v2176 = vld [vmem:[%s2172 + $0xc] sm:$0xf]
      %v2177 = vld [vmem:[%s2172 + $0x10] sm:$0xf]
      %v2178 = vld [vmem:[%s2172 + $0x14] sm:$0xf]
      %v2179 = vld [vmem:[%s2172 + $0x18] sm:$0xf]
      %v2180 = vld [vmem:[%s2172 + $0x1c] sm:$0xf]
      %v2181 = vld [vmem:[%s2172 + $0x20] sm:$0xf]
      %v2182 = vld [vmem:[%s2172 + $0x24] sm:$0xf]
      %v2183 = vld [vmem:[%s2172 + $0x28] sm:$0xf]
      %v2184 = vld [vmem:[%s2172 + $0x2c] sm:$0xf]
      %v2185 = vld [vmem:[%s2172 + $0x30] sm:$0xf]
      %v2186 = vld [vmem:[%s2172 + $0x34] sm:$0xf]
      %v2187 = vld [vmem:[%s2172 + $0x38] sm:$0xf]
      %v2188 = vld [vmem:[%s2172 + $0x3c] sm:$0xf]
      %v2190 = vunpack.c.l.b16 %v2171
      %v2191 = vpack.c.b16 %v1755, %v2190
      %v2192 = vrot.slane %v2191, 1
      %v2193 = vrot.slane %v1786, 1
      %v2194 = vsel %vm1029, %v2192, %v2193
      %v2195 = vrot.slane %v1787, 1
      %v2196 = vsel %vm1029, %v2193, %v2195
      %v2197 = vrot.slane %v1788, 1
      %v2198 = vsel %vm1029, %v2195, %v2197
      %v2199 = vrot.slane %v1789, 1
      %v2200 = vsel %vm1029, %v2197, %v2199
      %v2201 = vrot.slane %v1790, 1
      %v2202 = vsel %vm1029, %v2199, %v2201
      %v2203 = vrot.slane %v1791, 1
      %v2204 = vsel %vm1029, %v2201, %v2203
      %v2205 = vrot.slane %v1792, 1
      %v2206 = vsel %vm1029, %v2203, %v2205
      %v2207 = vrot.slane %v1793, 1
      %v2208 = vsel %vm1029, %v2205, %v2207
      %v2209 = vrot.slane %v1794, 1
      %v2210 = vsel %vm1029, %v2207, %v2209
      %v2211 = vrot.slane %v1795, 1
      %v2212 = vsel %vm1029, %v2209, %v2211
      %v2213 = vrot.slane %v1796, 1
      %v2214 = vsel %vm1029, %v2211, %v2213
      %v2215 = vrot.slane %v1797, 1
      %v2216 = vsel %vm1029, %v2213, %v2215
      %v2217 = vrot.slane %v1798, 1
      %v2218 = vsel %vm1029, %v2215, %v2217
      %v2219 = vrot.slane %v1799, 1
      %v2220 = vsel %vm1029, %v2217, %v2219
      %v2221 = vrot.slane %v1800, 1
      %v2222 = vsel %vm1029, %v2219, %v2221
      %v2254 = vunpack.c.l.b16 %v2173
      %v2255 = vunpack.c.l.b16 %v2174
      %v2256 = vunpack.c.l.b16 %v2175
      %v2257 = vunpack.c.l.b16 %v2176
      %v2258 = vunpack.c.l.b16 %v2177
      %v2259 = vunpack.c.l.b16 %v2178
      %v2260 = vunpack.c.l.b16 %v2179
      %v2261 = vunpack.c.l.b16 %v2180
      %v2262 = vunpack.c.l.b16 %v2181
      %v2263 = vunpack.c.l.b16 %v2182
      %v2264 = vunpack.c.l.b16 %v2183
      %v2265 = vunpack.c.l.b16 %v2184
      %v2266 = vunpack.c.l.b16 %v2185
      %v2267 = vunpack.c.l.b16 %v2186
      %v2268 = vunpack.c.l.b16 %v2187
      %v2269 = vunpack.c.l.b16 %v2188
      %v2270 = vpack.c.b16 %v2255, %v2254
      %v2271 = vpack.c.b16 %v2257, %v2256
      %v2272 = vpack.c.b16 %v2259, %v2258
      %v2273 = vpack.c.b16 %v2261, %v2260
      %v2274 = vpack.c.b16 %v2263, %v2262
      %v2275 = vpack.c.b16 %v2265, %v2264
      %v2276 = vpack.c.b16 %v2267, %v2266
      %v2277 = vpack.c.b16 %v2269, %v2268
      %2286 = vmatprep.subr.bf16.mxu0 0
      %2287 = vmatpush1.bf16.msra.mxu0 %v2277
      %2288 = vmatprep.subr.bf16.mxu0 0
      %2289 = vmatpush1.bf16.msra.mxu0 %v2276
      %2290 = vmatprep.subr.bf16.mxu0 0
      %2291 = vmatpush1.bf16.msra.mxu0 %v2275
      %2292 = vmatprep.subr.bf16.mxu0 0
      %2293 = vmatpush1.bf16.msra.mxu0 %v2274
      %2294 = vmatprep.subr.bf16.mxu0 0
      %2295 = vmatpush1.bf16.msra.mxu0 %v2273
      %2296 = vmatprep.subr.bf16.mxu0 0
      %2297 = vmatpush1.bf16.msra.mxu0 %v2272
      %2298 = vmatprep.subr.bf16.mxu0 0
      %2299 = vmatpush1.bf16.msra.mxu0 %v2271
      %2300 = vmatprep.subr.bf16.mxu0 0
      %2301 = vmatpush1.bf16.msra.mxu0 %v2270
      %2302 = vmatprep.subr.bf16.mxu0 0
      %2303 = vmatpush2.bf16.msra.mxu0 0
      %2304 = vmatprep.subr.bf16.mxu0 0
      %2305 = vmatpush2.bf16.msra.mxu0 0
      %2306 = vmatprep.subr.bf16.mxu0 0
      %2307 = vmatpush2.bf16.msra.mxu0 0
      %2308 = vmatprep.subr.bf16.mxu0 0
      %2309 = vmatpush2.bf16.msra.mxu0 0
      %2310 = vmatprep.subr.bf16.mxu0 0
      %2311 = vmatpush2.bf16.msra.mxu0 0
      %2312 = vmatprep.subr.bf16.mxu0 0
      %2313 = vmatpush2.bf16.msra.mxu0 0
      %2314 = vmatprep.subr.bf16.mxu0 0
      %2315 = vmatpush2.bf16.msra.mxu0 0
      %2316 = vmatprep.subr.bf16.mxu0 0
      %2317 = vmatpush2.bf16.msra.mxu0 0
      %2318 = vmatprep.mubr.bf16.mxu0 0
      %2319 = vmatmul.mubr.bf16.gmra.mxu0 %v2194
      %v2320 = vpop.f32.mrf.mxu0
      %v2321 = vadd.f32 0.0, %v2320
      %v2322 = vpop.f32.mrf.mxu0
      %v2323 = vpop.f32.mrf.mxu0
      %v2324 = vadd.f32 0.0, %v2323
      %v2325 = vpop.f32.mrf.mxu0
      %2326 = vmatprep.mubr.bf16.mxu0 0
      %2327 = vmatmul.mubr.bf16.gmra.mxu0 %v2196
      %v2328 = vpop.f32.mrf.mxu0
      %v2329 = vadd.f32 0.0, %v2328
      %v2330 = vpop.f32.mrf.mxu0
      %v2331 = vpop.f32.mrf.mxu0
      %v2332 = vadd.f32 0.0, %v2331
      %v2333 = vpop.f32.mrf.mxu0
      %2334 = vmatprep.mubr.bf16.mxu0 0
      %2335 = vmatmul.mubr.bf16.gmra.mxu0 %v2198
      %v2336 = vpop.f32.mrf.mxu0
      %v2337 = vadd.f32 0.0, %v2336
      %v2338 = vpop.f32.mrf.mxu0
      %v2339 = vpop.f32.mrf.mxu0
      %v2340 = vadd.f32 0.0, %v2339
      %v2341 = vpop.f32.mrf.mxu0
      %2342 = vmatprep.mubr.bf16.mxu0 0
      %2343 = vmatmul.mubr.bf16.gmra.mxu0 %v2200
      %v2344 = vpop.f32.mrf.mxu0
      %v2345 = vadd.f32 0.0, %v2344
      %v2346 = vpop.f32.mrf.mxu0
      %v2347 = vpop.f32.mrf.mxu0
      %v2348 = vadd.f32 0.0, %v2347
      %v2349 = vpop.f32.mrf.mxu0
      %2350 = vmatprep.mubr.bf16.mxu0 0
      %2351 = vmatmul.mubr.bf16.gmra.mxu0 %v2202
      %v2352 = vpop.f32.mrf.mxu0
      %v2353 = vadd.f32 0.0, %v2352
      %v2354 = vpop.f32.mrf.mxu0
      %v2355 = vpop.f32.mrf.mxu0
      %v2356 = vadd.f32 0.0, %v2355
      %v2357 = vpop.f32.mrf.mxu0
      %2358 = vmatprep.mubr.bf16.mxu0 0
      %2359 = vmatmul.mubr.bf16.gmra.mxu0 %v2204
      %v2360 = vpop.f32.mrf.mxu0
      %v2361 = vadd.f32 0.0, %v2360
      %v2362 = vpop.f32.mrf.mxu0
      %v2363 = vpop.f32.mrf.mxu0
      %v2364 = vadd.f32 0.0, %v2363
      %v2365 = vpop.f32.mrf.mxu0
      %2366 = vmatprep.mubr.bf16.mxu0 0
      %2367 = vmatmul.mubr.bf16.gmra.mxu0 %v2206
      %v2368 = vpop.f32.mrf.mxu0
      %v2369 = vadd.f32 0.0, %v2368
      %v2370 = vpop.f32.mrf.mxu0
      %v2371 = vpop.f32.mrf.mxu0
      %v2372 = vadd.f32 0.0, %v2371
      %v2373 = vpop.f32.mrf.mxu0
      %2374 = vmatprep.mubr.bf16.mxu0 0
      %2375 = vmatmul.mubr.bf16.gmra.mxu0 %v2208
      %v2376 = vpop.f32.mrf.mxu0
      %v2377 = vadd.f32 0.0, %v2376
      %v2378 = vpop.f32.mrf.mxu0
      %v2379 = vpop.f32.mrf.mxu0
      %v2380 = vadd.f32 0.0, %v2379
      %v2381 = vpop.f32.mrf.mxu0
      %2382 = vmatprep.mubr.bf16.mxu0 0
      %2383 = vmatmul.mubr.bf16.gmra.mxu0 %v2210
      %v2384 = vpop.f32.mrf.mxu0
      %v2385 = vadd.f32 0.0, %v2384
      %v2386 = vpop.f32.mrf.mxu0
      %v2387 = vpop.f32.mrf.mxu0
      %v2388 = vadd.f32 0.0, %v2387
      %v2389 = vpop.f32.mrf.mxu0
      %2390 = vmatprep.mubr.bf16.mxu0 0
      %2391 = vmatmul.mubr.bf16.gmra.mxu0 %v2212
      %v2392 = vpop.f32.mrf.mxu0
      %v2393 = vadd.f32 0.0, %v2392
      %v2394 = vpop.f32.mrf.mxu0
      %v2395 = vpop.f32.mrf.mxu0
      %v2396 = vadd.f32 0.0, %v2395
      %v2397 = vpop.f32.mrf.mxu0
      %2398 = vmatprep.mubr.bf16.mxu0 0
      %2399 = vmatmul.mubr.bf16.gmra.mxu0 %v2214
      %v2400 = vpop.f32.mrf.mxu0
      %v2401 = vadd.f32 0.0, %v2400
      %v2402 = vpop.f32.mrf.mxu0
      %v2403 = vpop.f32.mrf.mxu0
      %v2404 = vadd.f32 0.0, %v2403
      %v2405 = vpop.f32.mrf.mxu0
      %2406 = vmatprep.mubr.bf16.mxu0 0
      %2407 = vmatmul.mubr.bf16.gmra.mxu0 %v2216
      %v2408 = vpop.f32.mrf.mxu0
      %v2409 = vadd.f32 0.0, %v2408
      %v2410 = vpop.f32.mrf.mxu0
      %v2411 = vpop.f32.mrf.mxu0
      %v2412 = vadd.f32 0.0, %v2411
      %v2413 = vpop.f32.mrf.mxu0
      %2414 = vmatprep.mubr.bf16.mxu0 0
      %2415 = vmatmul.mubr.bf16.gmra.mxu0 %v2218
      %v2416 = vpop.f32.mrf.mxu0
      %v2417 = vadd.f32 0.0, %v2416
      %v2418 = vpop.f32.mrf.mxu0
      %v2419 = vpop.f32.mrf.mxu0
      %v2420 = vadd.f32 0.0, %v2419
      %v2421 = vpop.f32.mrf.mxu0
      %2422 = vmatprep.mubr.bf16.mxu0 0
      %2423 = vmatmul.mubr.bf16.gmra.mxu0 %v2220
      %v2424 = vpop.f32.mrf.mxu0
      %v2425 = vadd.f32 0.0, %v2424
      %v2426 = vpop.f32.mrf.mxu0
      %v2427 = vpop.f32.mrf.mxu0
      %v2428 = vadd.f32 0.0, %v2427
      %v2429 = vpop.f32.mrf.mxu0
      %2430 = vmatprep.mubr.bf16.mxu0 0
      %2431 = vmatmul.mubr.bf16.gmra.mxu0 %v2222
      %v2432 = vpop.f32.mrf.mxu0
      %v2433 = vadd.f32 0.0, %v2432
      %v2434 = vpop.f32.mrf.mxu0
      %v2435 = vpop.f32.mrf.mxu0
      %v2436 = vadd.f32 0.0, %v2435
      %v2437 = vpop.f32.mrf.mxu0
      %2438 = vdwg.mxu0
      %v2439 = vadd.f32 %v2141, %v2321
      %v2440 = vadd.f32 %v2142, %v2324
      %v2441 = vadd.f32 %v2143, %v2329
      %v2442 = vadd.f32 %v2144, %v2332
      %v2443 = vadd.f32 %v2145, %v2337
      %v2444 = vadd.f32 %v2146, %v2340
      %v2445 = vadd.f32 %v2147, %v2345
      %v2446 = vadd.f32 %v2148, %v2348
      %v2447 = vadd.f32 %v2149, %v2353
      %v2448 = vadd.f32 %v2150, %v2356
      %v2449 = vadd.f32 %v2151, %v2361
      %v2450 = vadd.f32 %v2152, %v2364
      %v2451 = vadd.f32 %v2153, %v2369
      %v2452 = vadd.f32 %v2154, %v2372
      %v2453 = vadd.f32 %v2155, %v2377
      %v2454 = vadd.f32 %v2156, %v2380
      %v2455 = vadd.f32 %v2157, %v2385
      %v2456 = vadd.f32 %v2158, %v2388
      %v2457 = vadd.f32 %v2159, %v2393
      %v2458 = vadd.f32 %v2160, %v2396
      %v2459 = vadd.f32 %v2161, %v2401
      %v2460 = vadd.f32 %v2162, %v2404
      %v2461 = vadd.f32 %v2163, %v2409
      %v2462 = vadd.f32 %v2164, %v2412
      %v2463 = vadd.f32 %v2165, %v2417
      %v2464 = vadd.f32 %v2166, %v2420
      %v2465 = vadd.f32 %v2167, %v2425
      %v2466 = vadd.f32 %v2168, %v2428
      %v2467 = vadd.f32 %v2169, %v2433
      %v2468 = vadd.f32 %v2170, %v2436
      %v2469 = vld [vmem:[%s293 + $0x18] sm:$0xf]
      %v2470 = vld [vmem:[%s293 + $0x1c] sm:$0xf]
      %v2471 = vld [vmem:[%s293 + $0x20] sm:$0xf]
      %v2472 = vld [vmem:[%s293 + $0x24] sm:$0xf]
      %v2473 = vld [vmem:[%s293 + $0x28] sm:$0xf]
      %v2474 = vld [vmem:[%s293 + $0x2c] sm:$0xf]
      %v2475 = vld [vmem:[%s293 + $0x30] sm:$0xf]
      %v2476 = vld [vmem:[%s293 + $0x34] sm:$0xf]
      %v2477 = vld [vmem:[%s293 + $0x38] sm:$0xf]
      %v2478 = vld [vmem:[%s293 + $0x3c] sm:$0xf]
      %v2479 = vld [vmem:[%s293 + $0x40] sm:$0xf]
      %v2480 = vld [vmem:[%s293 + $0x44] sm:$0xf]
      %v2481 = vld [vmem:[%s293 + $0x48] sm:$0xf]
      %v2482 = vld [vmem:[%s293 + $0x4c] sm:$0xf]
      %v2483 = vld [vmem:[%s293 + $0x50] sm:$0xf]
      %v2484 = vld [vmem:[%s293 + $0x54] sm:$0xf]
      %v2485 = vld [vmem:[%s293 + $0x58] sm:$0xf]
      %v2486 = vld [vmem:[%s293 + $0x5c] sm:$0xf]
      %v2487 = vld [vmem:[%s293 + $0x60] sm:$0xf]
      %v2488 = vld [vmem:[%s293 + $0x64] sm:$0xf]
      %v2489 = vld [vmem:[%s293 + $0x68] sm:$0xf]
      %v2490 = vld [vmem:[%s293 + $0x6c] sm:$0xf]
      %v2491 = vld [vmem:[%s293 + $0x70] sm:$0xf]
      %v2492 = vld [vmem:[%s293 + $0x74] sm:$0xf]
      %v2493 = vld [vmem:[%s293 + $0x78] sm:$0xf]
      %v2494 = vld [vmem:[%s293 + $0x7c] sm:$0xf]
      %v2495 = vld [vmem:[%s293 + $0x80] sm:$0xf]
      %v2496 = vld [vmem:[%s293 + $0x84] sm:$0xf]
      %v2497 = vld [vmem:[%s293 + $0x88] sm:$0xf]
      %v2498 = vld [vmem:[%s293 + $0x8c] sm:$0xf]
      %s2499 = scalar_lea.vmem %s2, 384
      %v2500 = vld [vmem:[%s2499] sm:$0xf]
      %v2501 = vld [vmem:[%s2499 + $0x4] sm:$0xf]
      %v2502 = vld [vmem:[%s2499 + $0x8] sm:$0xf]
      %v2503 = vld [vmem:[%s2499 + $0xc] sm:$0xf]
      %v2504 = vld [vmem:[%s2499 + $0x10] sm:$0xf]
      %v2505 = vld [vmem:[%s2499 + $0x14] sm:$0xf]
      %v2506 = vld [vmem:[%s2499 + $0x18] sm:$0xf]
      %v2507 = vld [vmem:[%s2499 + $0x1c] sm:$0xf]
      %v2508 = vld [vmem:[%s2499 + $0x20] sm:$0xf]
      %v2509 = vld [vmem:[%s2499 + $0x24] sm:$0xf]
      %v2510 = vld [vmem:[%s2499 + $0x28] sm:$0xf]
      %v2511 = vld [vmem:[%s2499 + $0x2c] sm:$0xf]
      %v2512 = vld [vmem:[%s2499 + $0x30] sm:$0xf]
      %v2513 = vld [vmem:[%s2499 + $0x34] sm:$0xf]
      %v2514 = vld [vmem:[%s2499 + $0x38] sm:$0xf]
      %v2515 = vld [vmem:[%s2499 + $0x3c] sm:$0xf]
      %v2546 = vunpack.c.l.b16 %v2469
      %v2547 = vunpack.c.l.b16 %v2470
      %v2548 = vunpack.c.l.b16 %v2471
      %v2549 = vunpack.c.l.b16 %v2472
      %v2550 = vunpack.c.l.b16 %v2473
      %v2551 = vunpack.c.l.b16 %v2474
      %v2552 = vunpack.c.l.b16 %v2475
      %v2553 = vunpack.c.l.b16 %v2476
      %v2554 = vunpack.c.l.b16 %v2477
      %v2555 = vunpack.c.l.b16 %v2478
      %v2556 = vunpack.c.l.b16 %v2479
      %v2557 = vunpack.c.l.b16 %v2480
      %v2558 = vunpack.c.l.b16 %v2481
      %v2559 = vunpack.c.l.b16 %v2482
      %v2560 = vunpack.c.l.b16 %v2483
      %v2561 = vunpack.c.l.b16 %v2484
      %v2562 = vunpack.c.l.b16 %v2485
      %v2563 = vunpack.c.l.b16 %v2486
      %v2564 = vunpack.c.l.b16 %v2487
      %v2565 = vunpack.c.l.b16 %v2488
      %v2566 = vunpack.c.l.b16 %v2489
      %v2567 = vunpack.c.l.b16 %v2490
      %v2568 = vunpack.c.l.b16 %v2491
      %v2569 = vunpack.c.l.b16 %v2492
      %v2570 = vunpack.c.l.b16 %v2493
      %v2571 = vunpack.c.l.b16 %v2494
      %v2572 = vunpack.c.l.b16 %v2495
      %v2573 = vunpack.c.l.b16 %v2496
      %v2574 = vunpack.c.l.b16 %v2497
      %v2575 = vunpack.c.l.b16 %v2498
      %v2576 = vpack.c.b16 %v2547, %v2546
      %v2577 = vpack.c.b16 %v2549, %v2548
      %v2578 = vpack.c.b16 %v2551, %v2550
      %v2579 = vpack.c.b16 %v2553, %v2552
      %v2580 = vpack.c.b16 %v2555, %v2554
      %v2581 = vpack.c.b16 %v2557, %v2556
      %v2582 = vpack.c.b16 %v2559, %v2558
      %v2583 = vpack.c.b16 %v2561, %v2560
      %v2584 = vpack.c.b16 %v2563, %v2562
      %v2585 = vpack.c.b16 %v2565, %v2564
      %v2586 = vpack.c.b16 %v2567, %v2566
      %v2587 = vpack.c.b16 %v2569, %v2568
      %v2588 = vpack.c.b16 %v2571, %v2570
      %v2589 = vpack.c.b16 %v2573, %v2572
      %v2590 = vpack.c.b16 %v2575, %v2574
      %v2622 = vunpack.c.l.b16 %v2500
      %v2623 = vunpack.c.l.b16 %v2501
      %v2624 = vunpack.c.l.b16 %v2502
      %v2625 = vunpack.c.l.b16 %v2503
      %v2626 = vunpack.c.l.b16 %v2504
      %v2627 = vunpack.c.l.b16 %v2505
      %v2628 = vunpack.c.l.b16 %v2506
      %v2629 = vunpack.c.l.b16 %v2507
      %v2630 = vunpack.c.l.b16 %v2508
      %v2631 = vunpack.c.l.b16 %v2509
      %v2632 = vunpack.c.l.b16 %v2510
      %v2633 = vunpack.c.l.b16 %v2511
      %v2634 = vunpack.c.l.b16 %v2512
      %v2635 = vunpack.c.l.b16 %v2513
      %v2636 = vunpack.c.l.b16 %v2514
      %v2637 = vunpack.c.l.b16 %v2515
      %v2638 = vpack.c.b16 %v2623, %v2622
      %v2639 = vpack.c.b16 %v2625, %v2624
      %v2640 = vpack.c.b16 %v2627, %v2626
      %v2641 = vpack.c.b16 %v2629, %v2628
      %v2642 = vpack.c.b16 %v2631, %v2630
      %v2643 = vpack.c.b16 %v2633, %v2632
      %v2644 = vpack.c.b16 %v2635, %v2634
      %v2645 = vpack.c.b16 %v2637, %v2636
      %2654 = vmatprep.subr.bf16.mxu0 0
      %2655 = vmatpush1.bf16.msra.mxu0 %v2645
      %2656 = vmatprep.subr.bf16.mxu0 0
      %2657 = vmatpush1.bf16.msra.mxu0 %v2644
      %2658 = vmatprep.subr.bf16.mxu0 0
      %2659 = vmatpush1.bf16.msra.mxu0 %v2643
      %2660 = vmatprep.subr.bf16.mxu0 0
      %2661 = vmatpush1.bf16.msra.mxu0 %v2642
      %2662 = vmatprep.subr.bf16.mxu0 0
      %2663 = vmatpush1.bf16.msra.mxu0 %v2641
      %2664 = vmatprep.subr.bf16.mxu0 0
      %2665 = vmatpush1.bf16.msra.mxu0 %v2640
      %2666 = vmatprep.subr.bf16.mxu0 0
      %2667 = vmatpush1.bf16.msra.mxu0 %v2639
      %2668 = vmatprep.subr.bf16.mxu0 0
      %2669 = vmatpush1.bf16.msra.mxu0 %v2638
      %2670 = vmatprep.subr.bf16.mxu0 0
      %2671 = vmatpush2.bf16.msra.mxu0 0
      %2672 = vmatprep.subr.bf16.mxu0 0
      %2673 = vmatpush2.bf16.msra.mxu0 0
      %2674 = vmatprep.subr.bf16.mxu0 0
      %2675 = vmatpush2.bf16.msra.mxu0 0
      %2676 = vmatprep.subr.bf16.mxu0 0
      %2677 = vmatpush2.bf16.msra.mxu0 0
      %2678 = vmatprep.subr.bf16.mxu0 0
      %2679 = vmatpush2.bf16.msra.mxu0 0
      %2680 = vmatprep.subr.bf16.mxu0 0
      %2681 = vmatpush2.bf16.msra.mxu0 0
      %2682 = vmatprep.subr.bf16.mxu0 0
      %2683 = vmatpush2.bf16.msra.mxu0 0
      %2684 = vmatprep.subr.bf16.mxu0 0
      %2685 = vmatpush2.bf16.msra.mxu0 0
      %2686 = vmatprep.mubr.bf16.mxu0 0
      %2687 = vmatmul.mubr.bf16.gmra.mxu0 %v2576
      %v2688 = vpop.f32.mrf.mxu0
      %v2689 = vadd.f32 0.0, %v2688
      %v2690 = vpop.f32.mrf.mxu0
      %v2691 = vpop.f32.mrf.mxu0
      %v2692 = vadd.f32 0.0, %v2691
      %v2693 = vpop.f32.mrf.mxu0
      %2694 = vmatprep.mubr.bf16.mxu0 0
      %2695 = vmatmul.mubr.bf16.gmra.mxu0 %v2577
      %v2696 = vpop.f32.mrf.mxu0
      %v2697 = vadd.f32 0.0, %v2696
      %v2698 = vpop.f32.mrf.mxu0
      %v2699 = vpop.f32.mrf.mxu0
      %v2700 = vadd.f32 0.0, %v2699
      %v2701 = vpop.f32.mrf.mxu0
      %2702 = vmatprep.mubr.bf16.mxu0 0
      %2703 = vmatmul.mubr.bf16.gmra.mxu0 %v2578
      %v2704 = vpop.f32.mrf.mxu0
      %v2705 = vadd.f32 0.0, %v2704
      %v2706 = vpop.f32.mrf.mxu0
      %v2707 = vpop.f32.mrf.mxu0
      %v2708 = vadd.f32 0.0, %v2707
      %v2709 = vpop.f32.mrf.mxu0
      %2710 = vmatprep.mubr.bf16.mxu0 0
      %2711 = vmatmul.mubr.bf16.gmra.mxu0 %v2579
      %v2712 = vpop.f32.mrf.mxu0
      %v2713 = vadd.f32 0.0, %v2712
      %v2714 = vpop.f32.mrf.mxu0
      %v2715 = vpop.f32.mrf.mxu0
      %v2716 = vadd.f32 0.0, %v2715
      %v2717 = vpop.f32.mrf.mxu0
      %2718 = vmatprep.mubr.bf16.mxu0 0
      %2719 = vmatmul.mubr.bf16.gmra.mxu0 %v2580
      %v2720 = vpop.f32.mrf.mxu0
      %v2721 = vadd.f32 0.0, %v2720
      %v2722 = vpop.f32.mrf.mxu0
      %v2723 = vpop.f32.mrf.mxu0
      %v2724 = vadd.f32 0.0, %v2723
      %v2725 = vpop.f32.mrf.mxu0
      %2726 = vmatprep.mubr.bf16.mxu0 0
      %2727 = vmatmul.mubr.bf16.gmra.mxu0 %v2581
      %v2728 = vpop.f32.mrf.mxu0
      %v2729 = vadd.f32 0.0, %v2728
      %v2730 = vpop.f32.mrf.mxu0
      %v2731 = vpop.f32.mrf.mxu0
      %v2732 = vadd.f32 0.0, %v2731
      %v2733 = vpop.f32.mrf.mxu0
      %2734 = vmatprep.mubr.bf16.mxu0 0
      %2735 = vmatmul.mubr.bf16.gmra.mxu0 %v2582
      %v2736 = vpop.f32.mrf.mxu0
      %v2737 = vadd.f32 0.0, %v2736
      %v2738 = vpop.f32.mrf.mxu0
      %v2739 = vpop.f32.mrf.mxu0
      %v2740 = vadd.f32 0.0, %v2739
      %v2741 = vpop.f32.mrf.mxu0
      %2742 = vmatprep.mubr.bf16.mxu0 0
      %2743 = vmatmul.mubr.bf16.gmra.mxu0 %v2583
      %v2744 = vpop.f32.mrf.mxu0
      %v2745 = vadd.f32 0.0, %v2744
      %v2746 = vpop.f32.mrf.mxu0
      %v2747 = vpop.f32.mrf.mxu0
      %v2748 = vadd.f32 0.0, %v2747
      %v2749 = vpop.f32.mrf.mxu0
      %2750 = vmatprep.mubr.bf16.mxu0 0
      %2751 = vmatmul.mubr.bf16.gmra.mxu0 %v2584
      %v2752 = vpop.f32.mrf.mxu0
      %v2753 = vadd.f32 0.0, %v2752
      %v2754 = vpop.f32.mrf.mxu0
      %v2755 = vpop.f32.mrf.mxu0
      %v2756 = vadd.f32 0.0, %v2755
      %v2757 = vpop.f32.mrf.mxu0
      %2758 = vmatprep.mubr.bf16.mxu0 0
      %2759 = vmatmul.mubr.bf16.gmra.mxu0 %v2585
      %v2760 = vpop.f32.mrf.mxu0
      %v2761 = vadd.f32 0.0, %v2760
      %v2762 = vpop.f32.mrf.mxu0
      %v2763 = vpop.f32.mrf.mxu0
      %v2764 = vadd.f32 0.0, %v2763
      %v2765 = vpop.f32.mrf.mxu0
      %2766 = vmatprep.mubr.bf16.mxu0 0
      %2767 = vmatmul.mubr.bf16.gmra.mxu0 %v2586
      %v2768 = vpop.f32.mrf.mxu0
      %v2769 = vadd.f32 0.0, %v2768
      %v2770 = vpop.f32.mrf.mxu0
      %v2771 = vpop.f32.mrf.mxu0
      %v2772 = vadd.f32 0.0, %v2771
      %v2773 = vpop.f32.mrf.mxu0
      %2774 = vmatprep.mubr.bf16.mxu0 0
      %2775 = vmatmul.mubr.bf16.gmra.mxu0 %v2587
      %v2776 = vpop.f32.mrf.mxu0
      %v2777 = vadd.f32 0.0, %v2776
      %v2778 = vpop.f32.mrf.mxu0
      %v2779 = vpop.f32.mrf.mxu0
      %v2780 = vadd.f32 0.0, %v2779
      %v2781 = vpop.f32.mrf.mxu0
      %2782 = vmatprep.mubr.bf16.mxu0 0
      %2783 = vmatmul.mubr.bf16.gmra.mxu0 %v2588
      %v2784 = vpop.f32.mrf.mxu0
      %v2785 = vadd.f32 0.0, %v2784
      %v2786 = vpop.f32.mrf.mxu0
      %v2787 = vpop.f32.mrf.mxu0
      %v2788 = vadd.f32 0.0, %v2787
      %v2789 = vpop.f32.mrf.mxu0
      %2790 = vmatprep.mubr.bf16.mxu0 0
      %2791 = vmatmul.mubr.bf16.gmra.mxu0 %v2589
      %v2792 = vpop.f32.mrf.mxu0
      %v2793 = vadd.f32 0.0, %v2792
      %v2794 = vpop.f32.mrf.mxu0
      %v2795 = vpop.f32.mrf.mxu0
      %v2796 = vadd.f32 0.0, %v2795
      %v2797 = vpop.f32.mrf.mxu0
      %2798 = vmatprep.mubr.bf16.mxu0 0
      %2799 = vmatmul.mubr.bf16.gmra.mxu0 %v2590
      %v2800 = vpop.f32.mrf.mxu0
      %v2801 = vadd.f32 0.0, %v2800
      %v2802 = vpop.f32.mrf.mxu0
      %v2803 = vpop.f32.mrf.mxu0
      %v2804 = vadd.f32 0.0, %v2803
      %v2805 = vpop.f32.mrf.mxu0
      %2806 = vdwg.mxu0
      %v2807 = vadd.f32 %v2439, %v2689
      %v2808 = vadd.f32 %v2440, %v2692
      %v2809 = vadd.f32 %v2441, %v2697
      %v2810 = vadd.f32 %v2442, %v2700
      %v2811 = vadd.f32 %v2443, %v2705
      %v2812 = vadd.f32 %v2444, %v2708
      %v2813 = vadd.f32 %v2445, %v2713
      %v2814 = vadd.f32 %v2446, %v2716
      %v2815 = vadd.f32 %v2447, %v2721
      %v2816 = vadd.f32 %v2448, %v2724
      %v2817 = vadd.f32 %v2449, %v2729
      %v2818 = vadd.f32 %v2450, %v2732
      %v2819 = vadd.f32 %v2451, %v2737
      %v2820 = vadd.f32 %v2452, %v2740
      %v2821 = vadd.f32 %v2453, %v2745
      %v2822 = vadd.f32 %v2454, %v2748
      %v2823 = vadd.f32 %v2455, %v2753
      %v2824 = vadd.f32 %v2456, %v2756
      %v2825 = vadd.f32 %v2457, %v2761
      %v2826 = vadd.f32 %v2458, %v2764
      %v2827 = vadd.f32 %v2459, %v2769
      %v2828 = vadd.f32 %v2460, %v2772
      %v2829 = vadd.f32 %v2461, %v2777
      %v2830 = vadd.f32 %v2462, %v2780
      %v2831 = vadd.f32 %v2463, %v2785
      %v2832 = vadd.f32 %v2464, %v2788
      %v2833 = vadd.f32 %v2465, %v2793
      %v2834 = vadd.f32 %v2466, %v2796
      %v2835 = vadd.f32 %v2467, %v2801
      %v2836 = vadd.f32 %v2468, %v2804
      %v2837 = vld [vmem:[%s293 + $0x18] sm:$0xf]
      %v2838 = vld [vmem:[%s293 + $0x1c] sm:$0xf]
      %v2839 = vld [vmem:[%s293 + $0x20] sm:$0xf]
      %v2840 = vld [vmem:[%s293 + $0x24] sm:$0xf]
      %v2841 = vld [vmem:[%s293 + $0x28] sm:$0xf]
      %v2842 = vld [vmem:[%s293 + $0x2c] sm:$0xf]
      %v2843 = vld [vmem:[%s293 + $0x30] sm:$0xf]
      %v2844 = vld [vmem:[%s293 + $0x34] sm:$0xf]
      %v2845 = vld [vmem:[%s293 + $0x38] sm:$0xf]
      %v2846 = vld [vmem:[%s293 + $0x3c] sm:$0xf]
      %v2847 = vld [vmem:[%s293 + $0x40] sm:$0xf]
      %v2848 = vld [vmem:[%s293 + $0x44] sm:$0xf]
      %v2849 = vld [vmem:[%s293 + $0x48] sm:$0xf]
      %v2850 = vld [vmem:[%s293 + $0x4c] sm:$0xf]
      %v2851 = vld [vmem:[%s293 + $0x50] sm:$0xf]
      %v2852 = vld [vmem:[%s293 + $0x54] sm:$0xf]
      %v2853 = vld [vmem:[%s293 + $0x58] sm:$0xf]
      %v2854 = vld [vmem:[%s293 + $0x5c] sm:$0xf]
      %v2855 = vld [vmem:[%s293 + $0x60] sm:$0xf]
      %v2856 = vld [vmem:[%s293 + $0x64] sm:$0xf]
      %v2857 = vld [vmem:[%s293 + $0x68] sm:$0xf]
      %v2858 = vld [vmem:[%s293 + $0x6c] sm:$0xf]
      %v2859 = vld [vmem:[%s293 + $0x70] sm:$0xf]
      %v2860 = vld [vmem:[%s293 + $0x74] sm:$0xf]
      %v2861 = vld [vmem:[%s293 + $0x78] sm:$0xf]
      %v2862 = vld [vmem:[%s293 + $0x7c] sm:$0xf]
      %v2863 = vld [vmem:[%s293 + $0x80] sm:$0xf]
      %v2864 = vld [vmem:[%s293 + $0x84] sm:$0xf]
      %v2865 = vld [vmem:[%s293 + $0x88] sm:$0xf]
      %v2866 = vld [vmem:[%s293 + $0x8c] sm:$0xf]
      %v2867 = vld [vmem:[%s293 + $0x90] sm:$0x1]
      %s2868 = scalar_lea.vmem %s2, 448
      %v2869 = vld [vmem:[%s2868] sm:$0xf]
      %v2870 = vld [vmem:[%s2868 + $0x4] sm:$0xf]
      %v2871 = vld [vmem:[%s2868 + $0x8] sm:$0xf]
      %v2872 = vld [vmem:[%s2868 + $0xc] sm:$0xf]
      %v2873 = vld [vmem:[%s2868 + $0x10] sm:$0xf]
      %v2874 = vld [vmem:[%s2868 + $0x14] sm:$0xf]
      %v2875 = vld [vmem:[%s2868 + $0x18] sm:$0xf]
      %v2876 = vld [vmem:[%s2868 + $0x1c] sm:$0xf]
      %v2877 = vld [vmem:[%s2868 + $0x20] sm:$0xf]
      %v2878 = vld [vmem:[%s2868 + $0x24] sm:$0xf]
      %v2879 = vld [vmem:[%s2868 + $0x28] sm:$0xf]
      %v2880 = vld [vmem:[%s2868 + $0x2c] sm:$0xf]
      %v2881 = vld [vmem:[%s2868 + $0x30] sm:$0xf]
      %v2882 = vld [vmem:[%s2868 + $0x34] sm:$0xf]
      %v2883 = vld [vmem:[%s2868 + $0x38] sm:$0xf]
      %v2884 = vld [vmem:[%s2868 + $0x3c] sm:$0xf]
      %v2916 = vunpack.c.l.b16 %v2837
      %v2917 = vunpack.c.l.b16 %v2838
      %v2918 = vunpack.c.l.b16 %v2839
      %v2919 = vunpack.c.l.b16 %v2840
      %v2920 = vunpack.c.l.b16 %v2841
      %v2921 = vunpack.c.l.b16 %v2842
      %v2922 = vunpack.c.l.b16 %v2843
      %v2923 = vunpack.c.l.b16 %v2844
      %v2924 = vunpack.c.l.b16 %v2845
      %v2925 = vunpack.c.l.b16 %v2846
      %v2926 = vunpack.c.l.b16 %v2847
      %v2927 = vunpack.c.l.b16 %v2848
      %v2928 = vunpack.c.l.b16 %v2849
      %v2929 = vunpack.c.l.b16 %v2850
      %v2930 = vunpack.c.l.b16 %v2851
      %v2931 = vunpack.c.l.b16 %v2852
      %v2932 = vunpack.c.l.b16 %v2853
      %v2933 = vunpack.c.l.b16 %v2854
      %v2934 = vunpack.c.l.b16 %v2855
      %v2935 = vunpack.c.l.b16 %v2856
      %v2936 = vunpack.c.l.b16 %v2857
      %v2937 = vunpack.c.l.b16 %v2858
      %v2938 = vunpack.c.l.b16 %v2859
      %v2939 = vunpack.c.l.b16 %v2860
      %v2940 = vunpack.c.l.b16 %v2861
      %v2941 = vunpack.c.l.b16 %v2862
      %v2942 = vunpack.c.l.b16 %v2863
      %v2943 = vunpack.c.l.b16 %v2864
      %v2944 = vunpack.c.l.b16 %v2865
      %v2945 = vunpack.c.l.b16 %v2866
      %v2946 = vunpack.c.l.b16 %v2867
      %v2947 = vpack.c.b16 %v2917, %v2916
      %v2948 = vpack.c.b16 %v2919, %v2918
      %v2949 = vpack.c.b16 %v2921, %v2920
      %v2950 = vpack.c.b16 %v2923, %v2922
      %v2951 = vpack.c.b16 %v2925, %v2924
      %v2952 = vpack.c.b16 %v2927, %v2926
      %v2953 = vpack.c.b16 %v2929, %v2928
      %v2954 = vpack.c.b16 %v2931, %v2930
      %v2955 = vpack.c.b16 %v2933, %v2932
      %v2956 = vpack.c.b16 %v2935, %v2934
      %v2957 = vpack.c.b16 %v2937, %v2936
      %v2958 = vpack.c.b16 %v2939, %v2938
      %v2959 = vpack.c.b16 %v2941, %v2940
      %v2960 = vpack.c.b16 %v2943, %v2942
      %v2961 = vpack.c.b16 %v2945, %v2944
      %v2962 = vpack.c.b16 %v2946, %v2946
      %v2964 = vshrl.u32 %v2947, 16
      %v2966 = vshll.u32 %v2947, 16
      %v2968 = vrot.slane %v2966, 1
      %v2969 = vor.u32 %v2964, %v2968
      %v2971 = vshll.u32 %v2948, 16
      %v2973 = vrot.slane %v2971, 1
      %v2974 = vsel %vm451, %v2969, %v2973
      %v2975 = vshrl.u32 %v2948, 16
      %v2977 = vor.u32 %v2975, %v2973
      %v2979 = vshll.u32 %v2949, 16
      %v2981 = vrot.slane %v2979, 1
      %v2982 = vsel %vm451, %v2977, %v2981
      %v2983 = vshrl.u32 %v2949, 16
      %v2985 = vor.u32 %v2983, %v2981
      %v2987 = vshll.u32 %v2950, 16
      %v2989 = vrot.slane %v2987, 1
      %v2990 = vsel %vm451, %v2985, %v2989
      %v2991 = vshrl.u32 %v2950, 16
      %v2993 = vor.u32 %v2991, %v2989
      %v2995 = vshll.u32 %v2951, 16
      %v2997 = vrot.slane %v2995, 1
      %v2998 = vsel %vm451, %v2993, %v2997
      %v2999 = vshrl.u32 %v2951, 16
      %v3001 = vor.u32 %v2999, %v2997
      %v3003 = vshll.u32 %v2952, 16
      %v3005 = vrot.slane %v3003, 1
      %v3006 = vsel %vm451, %v3001, %v3005
      %v3007 = vshrl.u32 %v2952, 16
      %v3009 = vor.u32 %v3007, %v3005
      %v3011 = vshll.u32 %v2953, 16
      %v3013 = vrot.slane %v3011, 1
      %v3014 = vsel %vm451, %v3009, %v3013
      %v3015 = vshrl.u32 %v2953, 16
      %v3017 = vor.u32 %v3015, %v3013
      %v3019 = vshll.u32 %v2954, 16
      %v3021 = vrot.slane %v3019, 1
      %v3022 = vsel %vm451, %v3017, %v3021
      %v3023 = vshrl.u32 %v2954, 16
      %v3025 = vor.u32 %v3023, %v3021
      %v3027 = vshll.u32 %v2955, 16
      %v3029 = vrot.slane %v3027, 1
      %v3030 = vsel %vm451, %v3025, %v3029
      %v3031 = vshrl.u32 %v2955, 16
      %v3033 = vor.u32 %v3031, %v3029
      %v3035 = vshll.u32 %v2956, 16
      %v3037 = vrot.slane %v3035, 1
      %v3038 = vsel %vm451, %v3033, %v3037
      %v3039 = vshrl.u32 %v2956, 16
      %v3041 = vor.u32 %v3039, %v3037
      %v3043 = vshll.u32 %v2957, 16
      %v3045 = vrot.slane %v3043, 1
      %v3046 = vsel %vm451, %v3041, %v3045
      %v3047 = vshrl.u32 %v2957, 16
      %v3049 = vor.u32 %v3047, %v3045
      %v3051 = vshll.u32 %v2958, 16
      %v3053 = vrot.slane %v3051, 1
      %v3054 = vsel %vm451, %v3049, %v3053
      %v3055 = vshrl.u32 %v2958, 16
      %v3057 = vor.u32 %v3055, %v3053
      %v3059 = vshll.u32 %v2959, 16
      %v3061 = vrot.slane %v3059, 1
      %v3062 = vsel %vm451, %v3057, %v3061
      %v3063 = vshrl.u32 %v2959, 16
      %v3065 = vor.u32 %v3063, %v3061
      %v3067 = vshll.u32 %v2960, 16
      %v3069 = vrot.slane %v3067, 1
      %v3070 = vsel %vm451, %v3065, %v3069
      %v3071 = vshrl.u32 %v2960, 16
      %v3073 = vor.u32 %v3071, %v3069
      %v3075 = vshll.u32 %v2961, 16
      %v3077 = vrot.slane %v3075, 1
      %v3078 = vsel %vm451, %v3073, %v3077
      %v3079 = vshrl.u32 %v2961, 16
      %v3081 = vor.u32 %v3079, %v3077
      %v3083 = vshll.u32 %v2962, 16
      %v3085 = vrot.slane %v3083, 1
      %v3086 = vsel %vm451, %v3081, %v3085
      %v3118 = vunpack.c.l.b16 %v2869
      %v3119 = vunpack.c.l.b16 %v2870
      %v3120 = vunpack.c.l.b16 %v2871
      %v3121 = vunpack.c.l.b16 %v2872
      %v3122 = vunpack.c.l.b16 %v2873
      %v3123 = vunpack.c.l.b16 %v2874
      %v3124 = vunpack.c.l.b16 %v2875
      %v3125 = vunpack.c.l.b16 %v2876
      %v3126 = vunpack.c.l.b16 %v2877
      %v3127 = vunpack.c.l.b16 %v2878
      %v3128 = vunpack.c.l.b16 %v2879
      %v3129 = vunpack.c.l.b16 %v2880
      %v3130 = vunpack.c.l.b16 %v2881
      %v3131 = vunpack.c.l.b16 %v2882
      %v3132 = vunpack.c.l.b16 %v2883
      %v3133 = vunpack.c.l.b16 %v2884
      %v3134 = vpack.c.b16 %v3119, %v3118
      %v3135 = vpack.c.b16 %v3121, %v3120
      %v3136 = vpack.c.b16 %v3123, %v3122
      %v3137 = vpack.c.b16 %v3125, %v3124
      %v3138 = vpack.c.b16 %v3127, %v3126
      %v3139 = vpack.c.b16 %v3129, %v3128
      %v3140 = vpack.c.b16 %v3131, %v3130
      %v3141 = vpack.c.b16 %v3133, %v3132
      %3150 = vmatprep.subr.bf16.mxu0 0
      %3151 = vmatpush1.bf16.msra.mxu0 %v3141
      %3152 = vmatprep.subr.bf16.mxu0 0
      %3153 = vmatpush1.bf16.msra.mxu0 %v3140
      %3154 = vmatprep.subr.bf16.mxu0 0
      %3155 = vmatpush1.bf16.msra.mxu0 %v3139
      %3156 = vmatprep.subr.bf16.mxu0 0
      %3157 = vmatpush1.bf16.msra.mxu0 %v3138
      %3158 = vmatprep.subr.bf16.mxu0 0
      %3159 = vmatpush1.bf16.msra.mxu0 %v3137
      %3160 = vmatprep.subr.bf16.mxu0 0
      %3161 = vmatpush1.bf16.msra.mxu0 %v3136
      %3162 = vmatprep.subr.bf16.mxu0 0
      %3163 = vmatpush1.bf16.msra.mxu0 %v3135
      %3164 = vmatprep.subr.bf16.mxu0 0
      %3165 = vmatpush1.bf16.msra.mxu0 %v3134
      %3166 = vmatprep.subr.bf16.mxu0 0
      %3167 = vmatpush2.bf16.msra.mxu0 0
      %3168 = vmatprep.subr.bf16.mxu0 0
      %3169 = vmatpush2.bf16.msra.mxu0 0
      %3170 = vmatprep.subr.bf16.mxu0 0
      %3171 = vmatpush2.bf16.msra.mxu0 0
      %3172 = vmatprep.subr.bf16.mxu0 0
      %3173 = vmatpush2.bf16.msra.mxu0 0
      %3174 = vmatprep.subr.bf16.mxu0 0
      %3175 = vmatpush2.bf16.msra.mxu0 0
      %3176 = vmatprep.subr.bf16.mxu0 0
      %3177 = vmatpush2.bf16.msra.mxu0 0
      %3178 = vmatprep.subr.bf16.mxu0 0
      %3179 = vmatpush2.bf16.msra.mxu0 0
      %3180 = vmatprep.subr.bf16.mxu0 0
      %3181 = vmatpush2.bf16.msra.mxu0 0
      %3182 = vmatprep.mubr.bf16.mxu0 0
      %3183 = vmatmul.mubr.bf16.gmra.mxu0 %v2974
      %v3184 = vpop.f32.mrf.mxu0
      %v3185 = vadd.f32 0.0, %v3184
      %v3186 = vpop.f32.mrf.mxu0
      %v3187 = vpop.f32.mrf.mxu0
      %v3188 = vadd.f32 0.0, %v3187
      %v3189 = vpop.f32.mrf.mxu0
      %3190 = vmatprep.mubr.bf16.mxu0 0
      %3191 = vmatmul.mubr.bf16.gmra.mxu0 %v2982
      %v3192 = vpop.f32.mrf.mxu0
      %v3193 = vadd.f32 0.0, %v3192
      %v3194 = vpop.f32.mrf.mxu0
      %v3195 = vpop.f32.mrf.mxu0
      %v3196 = vadd.f32 0.0, %v3195
      %v3197 = vpop.f32.mrf.mxu0
      %3198 = vmatprep.mubr.bf16.mxu0 0
      %3199 = vmatmul.mubr.bf16.gmra.mxu0 %v2990
      %v3200 = vpop.f32.mrf.mxu0
      %v3201 = vadd.f32 0.0, %v3200
      %v3202 = vpop.f32.mrf.mxu0
      %v3203 = vpop.f32.mrf.mxu0
      %v3204 = vadd.f32 0.0, %v3203
      %v3205 = vpop.f32.mrf.mxu0
      %3206 = vmatprep.mubr.bf16.mxu0 0
      %3207 = vmatmul.mubr.bf16.gmra.mxu0 %v2998
      %v3208 = vpop.f32.mrf.mxu0
      %v3209 = vadd.f32 0.0, %v3208
      %v3210 = vpop.f32.mrf.mxu0
      %v3211 = vpop.f32.mrf.mxu0
      %v3212 = vadd.f32 0.0, %v3211
      %v3213 = vpop.f32.mrf.mxu0
      %3214 = vmatprep.mubr.bf16.mxu0 0
      %3215 = vmatmul.mubr.bf16.gmra.mxu0 %v3006
      %v3216 = vpop.f32.mrf.mxu0
      %v3217 = vadd.f32 0.0, %v3216
      %v3218 = vpop.f32.mrf.mxu0
      %v3219 = vpop.f32.mrf.mxu0
      %v3220 = vadd.f32 0.0, %v3219
      %v3221 = vpop.f32.mrf.mxu0
      %3222 = vmatprep.mubr.bf16.mxu0 0
      %3223 = vmatmul.mubr.bf16.gmra.mxu0 %v3014
      %v3224 = vpop.f32.mrf.mxu0
      %v3225 = vadd.f32 0.0, %v3224
      %v3226 = vpop.f32.mrf.mxu0
      %v3227 = vpop.f32.mrf.mxu0
      %v3228 = vadd.f32 0.0, %v3227
      %v3229 = vpop.f32.mrf.mxu0
      %3230 = vmatprep.mubr.bf16.mxu0 0
      %3231 = vmatmul.mubr.bf16.gmra.mxu0 %v3022
      %v3232 = vpop.f32.mrf.mxu0
      %v3233 = vadd.f32 0.0, %v3232
      %v3234 = vpop.f32.mrf.mxu0
      %v3235 = vpop.f32.mrf.mxu0
      %v3236 = vadd.f32 0.0, %v3235
      %v3237 = vpop.f32.mrf.mxu0
      %3238 = vmatprep.mubr.bf16.mxu0 0
      %3239 = vmatmul.mubr.bf16.gmra.mxu0 %v3030
      %v3240 = vpop.f32.mrf.mxu0
      %v3241 = vadd.f32 0.0, %v3240
      %v3242 = vpop.f32.mrf.mxu0
      %v3243 = vpop.f32.mrf.mxu0
      %v3244 = vadd.f32 0.0, %v3243
      %v3245 = vpop.f32.mrf.mxu0
      %3246 = vmatprep.mubr.bf16.mxu0 0
      %3247 = vmatmul.mubr.bf16.gmra.mxu0 %v3038
      %v3248 = vpop.f32.mrf.mxu0
      %v3249 = vadd.f32 0.0, %v3248
      %v3250 = vpop.f32.mrf.mxu0
      %v3251 = vpop.f32.mrf.mxu0
      %v3252 = vadd.f32 0.0, %v3251
      %v3253 = vpop.f32.mrf.mxu0
      %3254 = vmatprep.mubr.bf16.mxu0 0
      %3255 = vmatmul.mubr.bf16.gmra.mxu0 %v3046
      %v3256 = vpop.f32.mrf.mxu0
      %v3257 = vadd.f32 0.0, %v3256
      %v3258 = vpop.f32.mrf.mxu0
      %v3259 = vpop.f32.mrf.mxu0
      %v3260 = vadd.f32 0.0, %v3259
      %v3261 = vpop.f32.mrf.mxu0
      %3262 = vmatprep.mubr.bf16.mxu0 0
      %3263 = vmatmul.mubr.bf16.gmra.mxu0 %v3054
      %v3264 = vpop.f32.mrf.mxu0
      %v3265 = vadd.f32 0.0, %v3264
      %v3266 = vpop.f32.mrf.mxu0
      %v3267 = vpop.f32.mrf.mxu0
      %v3268 = vadd.f32 0.0, %v3267
      %v3269 = vpop.f32.mrf.mxu0
      %3270 = vmatprep.mubr.bf16.mxu0 0
      %3271 = vmatmul.mubr.bf16.gmra.mxu0 %v3062
      %v3272 = vpop.f32.mrf.mxu0
      %v3273 = vadd.f32 0.0, %v3272
      %v3274 = vpop.f32.mrf.mxu0
      %v3275 = vpop.f32.mrf.mxu0
      %v3276 = vadd.f32 0.0, %v3275
      %v3277 = vpop.f32.mrf.mxu0
      %3278 = vmatprep.mubr.bf16.mxu0 0
      %3279 = vmatmul.mubr.bf16.gmra.mxu0 %v3070
      %v3280 = vpop.f32.mrf.mxu0
      %v3281 = vadd.f32 0.0, %v3280
      %v3282 = vpop.f32.mrf.mxu0
      %v3283 = vpop.f32.mrf.mxu0
      %v3284 = vadd.f32 0.0, %v3283
      %v3285 = vpop.f32.mrf.mxu0
      %3286 = vmatprep.mubr.bf16.mxu0 0
      %3287 = vmatmul.mubr.bf16.gmra.mxu0 %v3078
      %v3288 = vpop.f32.mrf.mxu0
      %v3289 = vadd.f32 0.0, %v3288
      %v3290 = vpop.f32.mrf.mxu0
      %v3291 = vpop.f32.mrf.mxu0
      %v3292 = vadd.f32 0.0, %v3291
      %v3293 = vpop.f32.mrf.mxu0
      %3294 = vmatprep.mubr.bf16.mxu0 0
      %3295 = vmatmul.mubr.bf16.gmra.mxu0 %v3086
      %v3296 = vpop.f32.mrf.mxu0
      %v3297 = vadd.f32 0.0, %v3296
      %v3298 = vpop.f32.mrf.mxu0
      %v3299 = vpop.f32.mrf.mxu0
      %v3300 = vadd.f32 0.0, %v3299
      %v3301 = vpop.f32.mrf.mxu0
      %3302 = vdwg.mxu0
      %v3303 = vadd.f32 %v2807, %v3185
      %v3304 = vadd.f32 %v2808, %v3188
      %v3305 = vadd.f32 %v2809, %v3193
      %v3306 = vadd.f32 %v2810, %v3196
      %v3307 = vadd.f32 %v2811, %v3201
      %v3308 = vadd.f32 %v2812, %v3204
      %v3309 = vadd.f32 %v2813, %v3209
      %v3310 = vadd.f32 %v2814, %v3212
      %v3311 = vadd.f32 %v2815, %v3217
      %v3312 = vadd.f32 %v2816, %v3220
      %v3313 = vadd.f32 %v2817, %v3225
      %v3314 = vadd.f32 %v2818, %v3228
      %v3315 = vadd.f32 %v2819, %v3233
      %v3316 = vadd.f32 %v2820, %v3236
      %v3317 = vadd.f32 %v2821, %v3241
      %v3318 = vadd.f32 %v2822, %v3244
      %v3319 = vadd.f32 %v2823, %v3249
      %v3320 = vadd.f32 %v2824, %v3252
      %v3321 = vadd.f32 %v2825, %v3257
      %v3322 = vadd.f32 %v2826, %v3260
      %v3323 = vadd.f32 %v2827, %v3265
      %v3324 = vadd.f32 %v2828, %v3268
      %v3325 = vadd.f32 %v2829, %v3273
      %v3326 = vadd.f32 %v2830, %v3276
      %v3327 = vadd.f32 %v2831, %v3281
      %v3328 = vadd.f32 %v2832, %v3284
      %v3329 = vadd.f32 %v2833, %v3289
      %v3330 = vadd.f32 %v2834, %v3292
      %v3331 = vadd.f32 %v2835, %v3297
      %v3332 = vadd.f32 %v2836, %v3300
      %v3333 = vld [vmem:[%s293 + $0x18] sm:$0xe]
      %s3334 = scalar_lea.vmem %s2, 512
      %v3335 = vld [vmem:[%s3334] sm:$0xf]
      %v3336 = vld [vmem:[%s3334 + $0x4] sm:$0xf]
      %v3337 = vld [vmem:[%s3334 + $0x8] sm:$0xf]
      %v3338 = vld [vmem:[%s3334 + $0xc] sm:$0xf]
      %v3339 = vld [vmem:[%s3334 + $0x10] sm:$0xf]
      %v3340 = vld [vmem:[%s3334 + $0x14] sm:$0xf]
      %v3341 = vld [vmem:[%s3334 + $0x18] sm:$0xf]
      %v3342 = vld [vmem:[%s3334 + $0x1c] sm:$0xf]
      %v3343 = vld [vmem:[%s3334 + $0x20] sm:$0xf]
      %v3344 = vld [vmem:[%s3334 + $0x24] sm:$0xf]
      %v3345 = vld [vmem:[%s3334 + $0x28] sm:$0xf]
      %v3346 = vld [vmem:[%s3334 + $0x2c] sm:$0xf]
      %v3347 = vld [vmem:[%s3334 + $0x30] sm:$0xf]
      %v3348 = vld [vmem:[%s3334 + $0x34] sm:$0xf]
      %v3349 = vld [vmem:[%s3334 + $0x38] sm:$0xf]
      %v3350 = vld [vmem:[%s3334 + $0x3c] sm:$0xf]
      %v3352 = vunpack.c.l.b16 %v3333
      %v3353 = vpack.c.b16 %v2917, %v3352
      %v3354 = vrot.slane %v3353, 1
      %v3355 = vrot.slane %v2948, 1
      %v3356 = vsel %vm1029, %v3354, %v3355
      %v3357 = vrot.slane %v2949, 1
      %v3358 = vsel %vm1029, %v3355, %v3357
      %v3359 = vrot.slane %v2950, 1
      %v3360 = vsel %vm1029, %v3357, %v3359
      %v3361 = vrot.slane %v2951, 1
      %v3362 = vsel %vm1029, %v3359, %v3361
      %v3363 = vrot.slane %v2952, 1
      %v3364 = vsel %vm1029, %v3361, %v3363
      %v3365 = vrot.slane %v2953, 1
      %v3366 = vsel %vm1029, %v3363, %v3365
      %v3367 = vrot.slane %v2954, 1
      %v3368 = vsel %vm1029, %v3365, %v3367
      %v3369 = vrot.slane %v2955, 1
      %v3370 = vsel %vm1029, %v3367, %v3369
      %v3371 = vrot.slane %v2956, 1
      %v3372 = vsel %vm1029, %v3369, %v3371
      %v3373 = vrot.slane %v2957, 1
      %v3374 = vsel %vm1029, %v3371, %v3373
      %v3375 = vrot.slane %v2958, 1
      %v3376 = vsel %vm1029, %v3373, %v3375
      %v3377 = vrot.slane %v2959, 1
      %v3378 = vsel %vm1029, %v3375, %v3377
      %v3379 = vrot.slane %v2960, 1
      %v3380 = vsel %vm1029, %v3377, %v3379
      %v3381 = vrot.slane %v2961, 1
      %v3382 = vsel %vm1029, %v3379, %v3381
      %v3383 = vrot.slane %v2962, 1
      %v3384 = vsel %vm1029, %v3381, %v3383
      %v3416 = vunpack.c.l.b16 %v3335
      %v3417 = vunpack.c.l.b16 %v3336
      %v3418 = vunpack.c.l.b16 %v3337
      %v3419 = vunpack.c.l.b16 %v3338
      %v3420 = vunpack.c.l.b16 %v3339
      %v3421 = vunpack.c.l.b16 %v3340
      %v3422 = vunpack.c.l.b16 %v3341
      %v3423 = vunpack.c.l.b16 %v3342
      %v3424 = vunpack.c.l.b16 %v3343
      %v3425 = vunpack.c.l.b16 %v3344
      %v3426 = vunpack.c.l.b16 %v3345
      %v3427 = vunpack.c.l.b16 %v3346
      %v3428 = vunpack.c.l.b16 %v3347
      %v3429 = vunpack.c.l.b16 %v3348
      %v3430 = vunpack.c.l.b16 %v3349
      %v3431 = vunpack.c.l.b16 %v3350
      %v3432 = vpack.c.b16 %v3417, %v3416
      %v3433 = vpack.c.b16 %v3419, %v3418
      %v3434 = vpack.c.b16 %v3421, %v3420
      %v3435 = vpack.c.b16 %v3423, %v3422
      %v3436 = vpack.c.b16 %v3425, %v3424
      %v3437 = vpack.c.b16 %v3427, %v3426
      %v3438 = vpack.c.b16 %v3429, %v3428
      %v3439 = vpack.c.b16 %v3431, %v3430
      %3448 = vmatprep.subr.bf16.mxu0 0
      %3449 = vmatpush1.bf16.msra.mxu0 %v3439
      %3450 = vmatprep.subr.bf16.mxu0 0
      %3451 = vmatpush1.bf16.msra.mxu0 %v3438
      %3452 = vmatprep.subr.bf16.mxu0 0
      %3453 = vmatpush1.bf16.msra.mxu0 %v3437
      %3454 = vmatprep.subr.bf16.mxu0 0
      %3455 = vmatpush1.bf16.msra.mxu0 %v3436
      %3456 = vmatprep.subr.bf16.mxu0 0
      %3457 = vmatpush1.bf16.msra.mxu0 %v3435
      %3458 = vmatprep.subr.bf16.mxu0 0
      %3459 = vmatpush1.bf16.msra.mxu0 %v3434
      %3460 = vmatprep.subr.bf16.mxu0 0
      %3461 = vmatpush1.bf16.msra.mxu0 %v3433
      %3462 = vmatprep.subr.bf16.mxu0 0
      %3463 = vmatpush1.bf16.msra.mxu0 %v3432
      %3464 = vmatprep.subr.bf16.mxu0 0
      %3465 = vmatpush2.bf16.msra.mxu0 0
      %3466 = vmatprep.subr.bf16.mxu0 0
      %3467 = vmatpush2.bf16.msra.mxu0 0
      %3468 = vmatprep.subr.bf16.mxu0 0
      %3469 = vmatpush2.bf16.msra.mxu0 0
      %3470 = vmatprep.subr.bf16.mxu0 0
      %3471 = vmatpush2.bf16.msra.mxu0 0
      %3472 = vmatprep.subr.bf16.mxu0 0
      %3473 = vmatpush2.bf16.msra.mxu0 0
      %3474 = vmatprep.subr.bf16.mxu0 0
      %3475 = vmatpush2.bf16.msra.mxu0 0
      %3476 = vmatprep.subr.bf16.mxu0 0
      %3477 = vmatpush2.bf16.msra.mxu0 0
      %3478 = vmatprep.subr.bf16.mxu0 0
      %3479 = vmatpush2.bf16.msra.mxu0 0
      %3480 = vmatprep.mubr.bf16.mxu0 0
      %3481 = vmatmul.mubr.bf16.gmra.mxu0 %v3356
      %v3482 = vpop.f32.mrf.mxu0
      %v3483 = vadd.f32 0.0, %v3482
      %v3484 = vpop.f32.mrf.mxu0
      %v3485 = vpop.f32.mrf.mxu0
      %v3486 = vadd.f32 0.0, %v3485
      %v3487 = vpop.f32.mrf.mxu0
      %3488 = vmatprep.mubr.bf16.mxu0 0
      %3489 = vmatmul.mubr.bf16.gmra.mxu0 %v3358
      %v3490 = vpop.f32.mrf.mxu0
      %v3491 = vadd.f32 0.0, %v3490
      %v3492 = vpop.f32.mrf.mxu0
      %v3493 = vpop.f32.mrf.mxu0
      %v3494 = vadd.f32 0.0, %v3493
      %v3495 = vpop.f32.mrf.mxu0
      %3496 = vmatprep.mubr.bf16.mxu0 0
      %3497 = vmatmul.mubr.bf16.gmra.mxu0 %v3360
      %v3498 = vpop.f32.mrf.mxu0
      %v3499 = vadd.f32 0.0, %v3498
      %v3500 = vpop.f32.mrf.mxu0
      %v3501 = vpop.f32.mrf.mxu0
      %v3502 = vadd.f32 0.0, %v3501
      %v3503 = vpop.f32.mrf.mxu0
      %3504 = vmatprep.mubr.bf16.mxu0 0
      %3505 = vmatmul.mubr.bf16.gmra.mxu0 %v3362
      %v3506 = vpop.f32.mrf.mxu0
      %v3507 = vadd.f32 0.0, %v3506
      %v3508 = vpop.f32.mrf.mxu0
      %v3509 = vpop.f32.mrf.mxu0
      %v3510 = vadd.f32 0.0, %v3509
      %v3511 = vpop.f32.mrf.mxu0
      %3512 = vmatprep.mubr.bf16.mxu0 0
      %3513 = vmatmul.mubr.bf16.gmra.mxu0 %v3364
      %v3514 = vpop.f32.mrf.mxu0
      %v3515 = vadd.f32 0.0, %v3514
      %v3516 = vpop.f32.mrf.mxu0
      %v3517 = vpop.f32.mrf.mxu0
      %v3518 = vadd.f32 0.0, %v3517
      %v3519 = vpop.f32.mrf.mxu0
      %3520 = vmatprep.mubr.bf16.mxu0 0
      %3521 = vmatmul.mubr.bf16.gmra.mxu0 %v3366
      %v3522 = vpop.f32.mrf.mxu0
      %v3523 = vadd.f32 0.0, %v3522
      %v3524 = vpop.f32.mrf.mxu0
      %v3525 = vpop.f32.mrf.mxu0
      %v3526 = vadd.f32 0.0, %v3525
      %v3527 = vpop.f32.mrf.mxu0
      %3528 = vmatprep.mubr.bf16.mxu0 0
      %3529 = vmatmul.mubr.bf16.gmra.mxu0 %v3368
      %v3530 = vpop.f32.mrf.mxu0
      %v3531 = vadd.f32 0.0, %v3530
      %v3532 = vpop.f32.mrf.mxu0
      %v3533 = vpop.f32.mrf.mxu0
      %v3534 = vadd.f32 0.0, %v3533
      %v3535 = vpop.f32.mrf.mxu0
      %3536 = vmatprep.mubr.bf16.mxu0 0
      %3537 = vmatmul.mubr.bf16.gmra.mxu0 %v3370
      %v3538 = vpop.f32.mrf.mxu0
      %v3539 = vadd.f32 0.0, %v3538
      %v3540 = vpop.f32.mrf.mxu0
      %v3541 = vpop.f32.mrf.mxu0
      %v3542 = vadd.f32 0.0, %v3541
      %v3543 = vpop.f32.mrf.mxu0
      %3544 = vmatprep.mubr.bf16.mxu0 0
      %3545 = vmatmul.mubr.bf16.gmra.mxu0 %v3372
      %v3546 = vpop.f32.mrf.mxu0
      %v3547 = vadd.f32 0.0, %v3546
      %v3548 = vpop.f32.mrf.mxu0
      %v3549 = vpop.f32.mrf.mxu0
      %v3550 = vadd.f32 0.0, %v3549
      %v3551 = vpop.f32.mrf.mxu0
      %3552 = vmatprep.mubr.bf16.mxu0 0
      %3553 = vmatmul.mubr.bf16.gmra.mxu0 %v3374
      %v3554 = vpop.f32.mrf.mxu0
      %v3555 = vadd.f32 0.0, %v3554
      %v3556 = vpop.f32.mrf.mxu0
      %v3557 = vpop.f32.mrf.mxu0
      %v3558 = vadd.f32 0.0, %v3557
      %v3559 = vpop.f32.mrf.mxu0
      %3560 = vmatprep.mubr.bf16.mxu0 0
      %3561 = vmatmul.mubr.bf16.gmra.mxu0 %v3376
      %v3562 = vpop.f32.mrf.mxu0
      %v3563 = vadd.f32 0.0, %v3562
      %v3564 = vpop.f32.mrf.mxu0
      %v3565 = vpop.f32.mrf.mxu0
      %v3566 = vadd.f32 0.0, %v3565
      %v3567 = vpop.f32.mrf.mxu0
      %3568 = vmatprep.mubr.bf16.mxu0 0
      %3569 = vmatmul.mubr.bf16.gmra.mxu0 %v3378
      %v3570 = vpop.f32.mrf.mxu0
      %v3571 = vadd.f32 0.0, %v3570
      %v3572 = vpop.f32.mrf.mxu0
      %v3573 = vpop.f32.mrf.mxu0
      %v3574 = vadd.f32 0.0, %v3573
      %v3575 = vpop.f32.mrf.mxu0
      %3576 = vmatprep.mubr.bf16.mxu0 0
      %3577 = vmatmul.mubr.bf16.gmra.mxu0 %v3380
      %v3578 = vpop.f32.mrf.mxu0
      %v3579 = vadd.f32 0.0, %v3578
      %v3580 = vpop.f32.mrf.mxu0
      %v3581 = vpop.f32.mrf.mxu0
      %v3582 = vadd.f32 0.0, %v3581
      %v3583 = vpop.f32.mrf.mxu0
      %3584 = vmatprep.mubr.bf16.mxu0 0
      %3585 = vmatmul.mubr.bf16.gmra.mxu0 %v3382
      %v3586 = vpop.f32.mrf.mxu0
      %v3587 = vadd.f32 0.0, %v3586
      %v3588 = vpop.f32.mrf.mxu0
      %v3589 = vpop.f32.mrf.mxu0
      %v3590 = vadd.f32 0.0, %v3589
      %v3591 = vpop.f32.mrf.mxu0
      %3592 = vmatprep.mubr.bf16.mxu0 0
      %3593 = vmatmul.mubr.bf16.gmra.mxu0 %v3384
      %v3594 = vpop.f32.mrf.mxu0
      %v3595 = vadd.f32 0.0, %v3594
      %v3596 = vpop.f32.mrf.mxu0
      %v3597 = vpop.f32.mrf.mxu0
      %v3598 = vadd.f32 0.0, %v3597
      %v3599 = vpop.f32.mrf.mxu0
      %3600 = vdwg.mxu0
      %v3601 = vadd.f32 %v3303, %v3483
      %v3602 = vadd.f32 %v3304, %v3486
      %v3603 = vadd.f32 %v3305, %v3491
      %v3604 = vadd.f32 %v3306, %v3494
      %v3605 = vadd.f32 %v3307, %v3499
      %v3606 = vadd.f32 %v3308, %v3502
      %v3607 = vadd.f32 %v3309, %v3507
      %v3608 = vadd.f32 %v3310, %v3510
      %v3609 = vadd.f32 %v3311, %v3515
      %v3610 = vadd.f32 %v3312, %v3518
      %v3611 = vadd.f32 %v3313, %v3523
      %v3612 = vadd.f32 %v3314, %v3526
      %v3613 = vadd.f32 %v3315, %v3531
      %v3614 = vadd.f32 %v3316, %v3534
      %v3615 = vadd.f32 %v3317, %v3539
      %v3616 = vadd.f32 %v3318, %v3542
      %v3617 = vadd.f32 %v3319, %v3547
      %v3618 = vadd.f32 %v3320, %v3550
      %v3619 = vadd.f32 %v3321, %v3555
      %v3620 = vadd.f32 %v3322, %v3558
      %v3621 = vadd.f32 %v3323, %v3563
      %v3622 = vadd.f32 %v3324, %v3566
      %v3623 = vadd.f32 %v3325, %v3571
      %v3624 = vadd.f32 %v3326, %v3574
      %v3625 = vadd.f32 %v3327, %v3579
      %v3626 = vadd.f32 %v3328, %v3582
      %v3627 = vadd.f32 %v3329, %v3587
      %v3628 = vadd.f32 %v3330, %v3590
      %v3629 = vadd.f32 %v3331, %v3595
      %v3630 = vadd.f32 %v3332, %v3598
      %v3631 = vld [vmem:[%s3] sm:$0x1]
      %v3633 = vlaneseq
      %v3634 = vshrl.u32 %v3633, 7
      %v3635 = vsub.s32 0, %v3634
      %v3636 = vrot.slane %v3631, %v3635
      %v3638 = vadd.f32 %v3601, %v3636
      %v3639 = vadd.f32 %v3602, %v3636
      %v3640 = vadd.f32 %v3603, %v3636
      %v3641 = vadd.f32 %v3604, %v3636
      %v3642 = vadd.f32 %v3605, %v3636
      %v3643 = vadd.f32 %v3606, %v3636
      %v3644 = vadd.f32 %v3607, %v3636
      %v3645 = vadd.f32 %v3608, %v3636
      %v3646 = vadd.f32 %v3609, %v3636
      %v3647 = vadd.f32 %v3610, %v3636
      %v3648 = vadd.f32 %v3611, %v3636
      %v3649 = vadd.f32 %v3612, %v3636
      %v3650 = vadd.f32 %v3613, %v3636
      %v3651 = vadd.f32 %v3614, %v3636
      %v3652 = vadd.f32 %v3615, %v3636
      %v3653 = vadd.f32 %v3616, %v3636
      %v3654 = vadd.f32 %v3617, %v3636
      %v3655 = vadd.f32 %v3618, %v3636
      %v3656 = vadd.f32 %v3619, %v3636
      %v3657 = vadd.f32 %v3620, %v3636
      %v3658 = vadd.f32 %v3621, %v3636
      %v3659 = vadd.f32 %v3622, %v3636
      %v3660 = vadd.f32 %v3623, %v3636
      %v3661 = vadd.f32 %v3624, %v3636
      %v3662 = vadd.f32 %v3625, %v3636
      %v3663 = vadd.f32 %v3626, %v3636
      %v3664 = vadd.f32 %v3627, %v3636
      %v3665 = vadd.f32 %v3628, %v3636
      %v3666 = vadd.f32 %v3629, %v3636
      %v3667 = vadd.f32 %v3630, %v3636
      %v3668 = vmax.f32 %v3638, 0.0
      %v3669 = vmax.f32 %v3639, 0.0
      %v3670 = vmax.f32 %v3640, 0.0
      %v3671 = vmax.f32 %v3641, 0.0
      %v3672 = vmax.f32 %v3642, 0.0
      %v3673 = vmax.f32 %v3643, 0.0
      %v3674 = vmax.f32 %v3644, 0.0
      %v3675 = vmax.f32 %v3645, 0.0
      %v3676 = vmax.f32 %v3646, 0.0
      %v3677 = vmax.f32 %v3647, 0.0
      %v3678 = vmax.f32 %v3648, 0.0
      %v3679 = vmax.f32 %v3649, 0.0
      %v3680 = vmax.f32 %v3650, 0.0
      %v3681 = vmax.f32 %v3651, 0.0
      %v3682 = vmax.f32 %v3652, 0.0
      %v3683 = vmax.f32 %v3653, 0.0
      %v3684 = vmax.f32 %v3654, 0.0
      %v3685 = vmax.f32 %v3655, 0.0
      %v3686 = vmax.f32 %v3656, 0.0
      %v3687 = vmax.f32 %v3657, 0.0
      %v3688 = vmax.f32 %v3658, 0.0
      %v3689 = vmax.f32 %v3659, 0.0
      %v3690 = vmax.f32 %v3660, 0.0
      %v3691 = vmax.f32 %v3661, 0.0
      %v3692 = vmax.f32 %v3662, 0.0
      %v3693 = vmax.f32 %v3663, 0.0
      %v3694 = vmax.f32 %v3664, 0.0
      %v3695 = vmax.f32 %v3665, 0.0
      %v3696 = vmax.f32 %v3666, 0.0
      %v3697 = vmax.f32 %v3667, 0.0
      %v3698 = vld [vmem:[%s298] sm:$0xff]
      %v3699 = vld [vmem:[%s298 + $0x8] sm:$0xff]
      %v3700 = vld [vmem:[%s298 + $0x10] sm:$0xff]
      %v3701 = vld [vmem:[%s298 + $0x18] sm:$0xff]
      %v3702 = vld [vmem:[%s298 + $0x20] sm:$0xff]
      %v3703 = vld [vmem:[%s298 + $0x28] sm:$0xff]
      %v3704 = vld [vmem:[%s298 + $0x30] sm:$0xff]
      %v3705 = vld [vmem:[%s298 + $0x38] sm:$0xff]
      %v3706 = vld [vmem:[%s298 + $0x40] sm:$0xff]
      %v3707 = vld [vmem:[%s298 + $0x48] sm:$0xff]
      %v3708 = vld [vmem:[%s298 + $0x50] sm:$0xff]
      %v3709 = vld [vmem:[%s298 + $0x58] sm:$0xff]
      %v3710 = vld [vmem:[%s298 + $0x60] sm:$0xff]
      %v3711 = vld [vmem:[%s298 + $0x68] sm:$0xff]
      %v3712 = vld [vmem:[%s298 + $0x70] sm:$0xff]
      %v3713 = vld [vmem:[%s298 + $0x78] sm:$0xff]
      %v3714 = vld [vmem:[%s298 + $0x80] sm:$0xff]
      %v3715 = vld [vmem:[%s298 + $0x88] sm:$0xff]
      %v3716 = vld [vmem:[%s298 + $0x90] sm:$0xff]
      %v3717 = vld [vmem:[%s298 + $0x98] sm:$0xff]
      %v3718 = vld [vmem:[%s298 + $0xa0] sm:$0xff]
      %v3719 = vld [vmem:[%s298 + $0xa8] sm:$0xff]
      %v3720 = vld [vmem:[%s298 + $0xb0] sm:$0xff]
      %v3721 = vld [vmem:[%s298 + $0xb8] sm:$0xff]
      %v3722 = vld [vmem:[%s298 + $0xc0] sm:$0xff]
      %v3723 = vld [vmem:[%s298 + $0xc8] sm:$0xff]
      %v3724 = vld [vmem:[%s298 + $0xd0] sm:$0xff]
      %v3725 = vld [vmem:[%s298 + $0xd8] sm:$0xff]
      %v3726 = vld [vmem:[%s298 + $0xe0] sm:$0xff]
      %v3727 = vld [vmem:[%s298 + $0xe8] sm:$0xff]
      %3729 = vset.pattern.permute.xlu0 0
      %3730 = vperm.xlu0 %3729, %v3698
      %v3731 = vpop.permute.xlu0 %3730
      %3734 = vset.pattern.permute.xlu0 0
      %3735 = vperm.xlu0 %3734, %v3699
      %v3736 = vpop.permute.xlu0 %3735
      %3739 = vset.pattern.permute.xlu0 0
      %3740 = vperm.xlu0 %3739, %v3700
      %v3741 = vpop.permute.xlu0 %3740
      %3744 = vset.pattern.permute.xlu0 0
      %3745 = vperm.xlu0 %3744, %v3701
      %v3746 = vpop.permute.xlu0 %3745
      %3749 = vset.pattern.permute.xlu0 0
      %3750 = vperm.xlu0 %3749, %v3702
      %v3751 = vpop.permute.xlu0 %3750
      %3754 = vset.pattern.permute.xlu0 0
      %3755 = vperm.xlu0 %3754, %v3703
      %v3756 = vpop.permute.xlu0 %3755
      %3759 = vset.pattern.permute.xlu0 0
      %3760 = vperm.xlu0 %3759, %v3704
      %v3761 = vpop.permute.xlu0 %3760
      %3764 = vset.pattern.permute.xlu0 0
      %3765 = vperm.xlu0 %3764, %v3705
      %v3766 = vpop.permute.xlu0 %3765
      %3769 = vset.pattern.permute.xlu0 0
      %3770 = vperm.xlu0 %3769, %v3706
      %v3771 = vpop.permute.xlu0 %3770
      %3774 = vset.pattern.permute.xlu0 0
      %3775 = vperm.xlu0 %3774, %v3707
      %v3776 = vpop.permute.xlu0 %3775
      %3779 = vset.pattern.permute.xlu0 0
      %3780 = vperm.xlu0 %3779, %v3708
      %v3781 = vpop.permute.xlu0 %3780
      %3784 = vset.pattern.permute.xlu0 0
      %3785 = vperm.xlu0 %3784, %v3709
      %v3786 = vpop.permute.xlu0 %3785
      %3789 = vset.pattern.permute.xlu0 0
      %3790 = vperm.xlu0 %3789, %v3710
      %v3791 = vpop.permute.xlu0 %3790
      %3794 = vset.pattern.permute.xlu0 0
      %3795 = vperm.xlu0 %3794, %v3711
      %v3796 = vpop.permute.xlu0 %3795
      %3799 = vset.pattern.permute.xlu0 0
      %3800 = vperm.xlu0 %3799, %v3712
      %v3801 = vpop.permute.xlu0 %3800
      %3804 = vset.pattern.permute.xlu0 0
      %3805 = vperm.xlu0 %3804, %v3713
      %v3806 = vpop.permute.xlu0 %3805
      %3809 = vset.pattern.permute.xlu0 0
      %3810 = vperm.xlu0 %3809, %v3714
      %v3811 = vpop.permute.xlu0 %3810
      %3814 = vset.pattern.permute.xlu0 0
      %3815 = vperm.xlu0 %3814, %v3715
      %v3816 = vpop.permute.xlu0 %3815
      %3819 = vset.pattern.permute.xlu0 0
      %3820 = vperm.xlu0 %3819, %v3716
      %v3821 = vpop.permute.xlu0 %3820
      %3824 = vset.pattern.permute.xlu0 0
      %3825 = vperm.xlu0 %3824, %v3717
      %v3826 = vpop.permute.xlu0 %3825
      %3829 = vset.pattern.permute.xlu0 0
      %3830 = vperm.xlu0 %3829, %v3718
      %v3831 = vpop.permute.xlu0 %3830
      %3834 = vset.pattern.permute.xlu0 0
      %3835 = vperm.xlu0 %3834, %v3719
      %v3836 = vpop.permute.xlu0 %3835
      %3839 = vset.pattern.permute.xlu0 0
      %3840 = vperm.xlu0 %3839, %v3720
      %v3841 = vpop.permute.xlu0 %3840
      %3844 = vset.pattern.permute.xlu0 0
      %3845 = vperm.xlu0 %3844, %v3721
      %v3846 = vpop.permute.xlu0 %3845
      %3849 = vset.pattern.permute.xlu0 0
      %3850 = vperm.xlu0 %3849, %v3722
      %v3851 = vpop.permute.xlu0 %3850
      %3854 = vset.pattern.permute.xlu0 0
      %3855 = vperm.xlu0 %3854, %v3723
      %v3856 = vpop.permute.xlu0 %3855
      %3859 = vset.pattern.permute.xlu0 0
      %3860 = vperm.xlu0 %3859, %v3724
      %v3861 = vpop.permute.xlu0 %3860
      %3864 = vset.pattern.permute.xlu0 0
      %3865 = vperm.xlu0 %3864, %v3725
      %v3866 = vpop.permute.xlu0 %3865
      %3869 = vset.pattern.permute.xlu0 0
      %3870 = vperm.xlu0 %3869, %v3726
      %v3871 = vpop.permute.xlu0 %3870
      %3874 = vset.pattern.permute.xlu0 0
      %3875 = vperm.xlu0 %3874, %v3727
      %v3876 = vpop.permute.xlu0 %3875
      %v3878 = vmul.f32 %v3668, %v3731
      %v3879 = vmul.f32 %v3669, %v3736
      %v3880 = vmul.f32 %v3670, %v3741
      %v3881 = vmul.f32 %v3671, %v3746
      %v3882 = vmul.f32 %v3672, %v3751
      %v3883 = vmul.f32 %v3673, %v3756
      %v3884 = vmul.f32 %v3674, %v3761
      %v3885 = vmul.f32 %v3675, %v3766
      %v3886 = vmul.f32 %v3676, %v3771
      %v3887 = vmul.f32 %v3677, %v3776
      %v3888 = vmul.f32 %v3678, %v3781
      %v3889 = vmul.f32 %v3679, %v3786
      %v3890 = vmul.f32 %v3680, %v3791
      %v3891 = vmul.f32 %v3681, %v3796
      %v3892 = vmul.f32 %v3682, %v3801
      %v3893 = vmul.f32 %v3683, %v3806
      %v3894 = vmul.f32 %v3684, %v3811
      %v3895 = vmul.f32 %v3685, %v3816
      %v3896 = vmul.f32 %v3686, %v3821
      %v3897 = vmul.f32 %v3687, %v3826
      %v3898 = vmul.f32 %v3688, %v3831
      %v3899 = vmul.f32 %v3689, %v3836
      %v3900 = vmul.f32 %v3690, %v3841
      %v3901 = vmul.f32 %v3691, %v3846
      %v3902 = vmul.f32 %v3692, %v3851
      %v3903 = vmul.f32 %v3693, %v3856
      %v3904 = vmul.f32 %v3694, %v3861
      %v3905 = vmul.f32 %v3695, %v3866
      %v3906 = vmul.f32 %v3696, %v3871
      %v3907 = vmul.f32 %v3697, %v3876
      %v3908 = vpack.c.bf16 %v3879, %v3878
      %v3909 = vpack.c.bf16 %v3881, %v3880
      %v3910 = vpack.c.bf16 %v3883, %v3882
      %v3911 = vpack.c.bf16 %v3885, %v3884
      %v3912 = vpack.c.bf16 %v3887, %v3886
      %v3913 = vpack.c.bf16 %v3889, %v3888
      %v3914 = vpack.c.bf16 %v3891, %v3890
      %v3915 = vpack.c.bf16 %v3893, %v3892
      %v3916 = vpack.c.bf16 %v3895, %v3894
      %v3917 = vpack.c.bf16 %v3897, %v3896
      %v3918 = vpack.c.bf16 %v3899, %v3898
      %v3919 = vpack.c.bf16 %v3901, %v3900
      %v3920 = vpack.c.bf16 %v3903, %v3902
      %v3921 = vpack.c.bf16 %v3905, %v3904
      %v3922 = vpack.c.bf16 %v3907, %v3906
      %v3938 = vunpack.c.l.b16 %v3908
      %v3939 = vunpack.c.h.b16 %v3908
      %v3940 = vunpack.c.l.b16 %v3909
      %v3941 = vunpack.c.h.b16 %v3909
      %v3942 = vunpack.c.l.b16 %v3910
      %v3943 = vunpack.c.h.b16 %v3910
      %v3944 = vunpack.c.l.b16 %v3911
      %v3945 = vunpack.c.h.b16 %v3911
      %v3946 = vunpack.c.l.b16 %v3912
      %v3947 = vunpack.c.h.b16 %v3912
      %v3948 = vunpack.c.l.b16 %v3913
      %v3949 = vunpack.c.h.b16 %v3913
      %v3950 = vunpack.c.l.b16 %v3914
      %v3951 = vunpack.c.h.b16 %v3914
      %v3952 = vunpack.c.l.b16 %v3915
      %v3953 = vunpack.c.h.b16 %v3915
      %v3954 = vunpack.c.l.b16 %v3916
      %v3955 = vunpack.c.h.b16 %v3916
      %v3956 = vunpack.c.l.b16 %v3917
      %v3957 = vunpack.c.h.b16 %v3917
      %v3958 = vunpack.c.l.b16 %v3918
      %v3959 = vunpack.c.h.b16 %v3918
      %v3960 = vunpack.c.l.b16 %v3919
      %v3961 = vunpack.c.h.b16 %v3919
      %v3962 = vunpack.c.l.b16 %v3920
      %v3963 = vunpack.c.h.b16 %v3920
      %v3964 = vunpack.c.l.b16 %v3921
      %v3965 = vunpack.c.h.b16 %v3921
      %v3966 = vunpack.c.l.b16 %v3922
      %v3967 = vunpack.c.h.b16 %v3922
      %v3968 = vpack.c.b16 %v3938, %v3938
      %v3969 = vpack.c.b16 %v3939, %v3939
      %v3970 = vpack.c.b16 %v3940, %v3940
      %v3971 = vpack.c.b16 %v3941, %v3941
      %v3972 = vpack.c.b16 %v3942, %v3942
      %v3973 = vpack.c.b16 %v3943, %v3943
      %v3974 = vpack.c.b16 %v3944, %v3944
      %v3975 = vpack.c.b16 %v3945, %v3945
      %v3976 = vpack.c.b16 %v3946, %v3946
      %v3977 = vpack.c.b16 %v3947, %v3947
      %v3978 = vpack.c.b16 %v3948, %v3948
      %v3979 = vpack.c.b16 %v3949, %v3949
      %v3980 = vpack.c.b16 %v3950, %v3950
      %v3981 = vpack.c.b16 %v3951, %v3951
      %v3982 = vpack.c.b16 %v3952, %v3952
      %v3983 = vpack.c.b16 %v3953, %v3953
      %v3984 = vpack.c.b16 %v3954, %v3954
      %v3985 = vpack.c.b16 %v3955, %v3955
      %v3986 = vpack.c.b16 %v3956, %v3956
      %v3987 = vpack.c.b16 %v3957, %v3957
      %v3988 = vpack.c.b16 %v3958, %v3958
      %v3989 = vpack.c.b16 %v3959, %v3959
      %v3990 = vpack.c.b16 %v3960, %v3960
      %v3991 = vpack.c.b16 %v3961, %v3961
      %v3992 = vpack.c.b16 %v3962, %v3962
      %v3993 = vpack.c.b16 %v3963, %v3963
      %v3994 = vpack.c.b16 %v3964, %v3964
      %v3995 = vpack.c.b16 %v3965, %v3965
      %v3996 = vpack.c.b16 %v3966, %v3966
      %v3997 = vpack.c.b16 %v3967, %v3967
      %4028 = vst [vmem:[#allocation2] sm:$0xf] %v3968
      %4029 = vst [vmem:[#allocation2 + $0x4] sm:$0xf] %v3969
      %4030 = vst [vmem:[#allocation2 + $0x8] sm:$0xf] %v3970
      %4031 = vst [vmem:[#allocation2 + $0xc] sm:$0xf] %v3971
      %4032 = vst [vmem:[#allocation2 + $0x10] sm:$0xf] %v3972
      %4033 = vst [vmem:[#allocation2 + $0x14] sm:$0xf] %v3973
      %4034 = vst [vmem:[#allocation2 + $0x18] sm:$0xf] %v3974
      %4035 = vst [vmem:[#allocation2 + $0x1c] sm:$0xf] %v3975
      %4036 = vst [vmem:[#allocation2 + $0x20] sm:$0xf] %v3976
      %4037 = vst [vmem:[#allocation2 + $0x24] sm:$0xf] %v3977
      %4038 = vst [vmem:[#allocation2 + $0x28] sm:$0xf] %v3978
      %4039 = vst [vmem:[#allocation2 + $0x2c] sm:$0xf] %v3979
      %4040 = vst [vmem:[#allocation2 + $0x30] sm:$0xf] %v3980
      %4041 = vst [vmem:[#allocation2 + $0x34] sm:$0xf] %v3981
      %4042 = vst [vmem:[#allocation2 + $0x38] sm:$0xf] %v3982
      %4043 = vst [vmem:[#allocation2 + $0x3c] sm:$0xf] %v3983
      %4044 = vst [vmem:[#allocation2 + $0x40] sm:$0xf] %v3984
      %4045 = vst [vmem:[#allocation2 + $0x44] sm:$0xf] %v3985
      %4046 = vst [vmem:[#allocation2 + $0x48] sm:$0xf] %v3986
      %4047 = vst [vmem:[#allocation2 + $0x4c] sm:$0xf] %v3987
      %4048 = vst [vmem:[#allocation2 + $0x50] sm:$0xf] %v3988
      %4049 = vst [vmem:[#allocation2 + $0x54] sm:$0xf] %v3989
      %4050 = vst [vmem:[#allocation2 + $0x58] sm:$0xf] %v3990
      %4051 = vst [vmem:[#allocation2 + $0x5c] sm:$0xf] %v3991
      %4052 = vst [vmem:[#allocation2 + $0x60] sm:$0xf] %v3992
      %4053 = vst [vmem:[#allocation2 + $0x64] sm:$0xf] %v3993
      %4054 = vst [vmem:[#allocation2 + $0x68] sm:$0xf] %v3994
      %4055 = vst [vmem:[#allocation2 + $0x6c] sm:$0xf] %v3995
      %4056 = vst [vmem:[#allocation2 + $0x70] sm:$0xf] %v3996
      %4057 = vst [vmem:[#allocation2 + $0x74] sm:$0xf] %v3997
      %4058 = vst [vmem:[#allocation2 + $0x78] sm:$0xf] 0
      %4059 = vst [vmem:[#allocation2 + $0x7c] sm:$0xf] 0
      %4060 = vst [vmem:[#allocation2 + $0x80] sm:$0xf] 0
      %v4061 = vld [vmem:[#allocation2] sm:$0xf]
      %v4062 = vld [vmem:[#allocation2 + $0x4] sm:$0xf]
      %v4063 = vld [vmem:[#allocation2 + $0x8] sm:$0xf]
      %v4064 = vld [vmem:[#allocation2 + $0xc] sm:$0xf]
      %v4065 = vld [vmem:[#allocation2 + $0x10] sm:$0xf]
      %v4066 = vld [vmem:[#allocation2 + $0x14] sm:$0xf]
      %v4067 = vld [vmem:[#allocation2 + $0x18] sm:$0xf]
      %v4068 = vld [vmem:[#allocation2 + $0x1c] sm:$0xf]
      %v4069 = vld [vmem:[#allocation2 + $0x20] sm:$0xf]
      %v4070 = vld [vmem:[#allocation2 + $0x24] sm:$0xf]
      %v4071 = vld [vmem:[#allocation2 + $0x28] sm:$0xf]
      %v4072 = vld [vmem:[#allocation2 + $0x2c] sm:$0xf]
      %v4073 = vld [vmem:[#allocation2 + $0x30] sm:$0xf]
      %v4074 = vld [vmem:[#allocation2 + $0x34] sm:$0xf]
      %v4075 = vld [vmem:[#allocation2 + $0x38] sm:$0xf]
      %v4076 = vld [vmem:[#allocation2 + $0x3c] sm:$0xf]
      %v4077 = vld [vmem:[#allocation2 + $0x40] sm:$0xf]
      %v4078 = vld [vmem:[#allocation2 + $0x44] sm:$0xf]
      %v4079 = vld [vmem:[#allocation2 + $0x48] sm:$0xf]
      %v4080 = vld [vmem:[#allocation2 + $0x4c] sm:$0xf]
      %v4081 = vld [vmem:[#allocation2 + $0x50] sm:$0xf]
      %v4082 = vld [vmem:[#allocation2 + $0x54] sm:$0xf]
      %v4083 = vld [vmem:[#allocation2 + $0x58] sm:$0xf]
      %v4084 = vld [vmem:[#allocation2 + $0x5c] sm:$0xf]
      %v4085 = vld [vmem:[%s4] sm:$0xf]
      %v4086 = vld [vmem:[%s4 + $0x4] sm:$0xf]
      %v4087 = vld [vmem:[%s4 + $0x8] sm:$0xf]
      %v4088 = vld [vmem:[%s4 + $0xc] sm:$0xf]
      %v4089 = vld [vmem:[%s4 + $0x10] sm:$0xf]
      %v4090 = vld [vmem:[%s4 + $0x14] sm:$0xf]
      %v4091 = vld [vmem:[%s4 + $0x18] sm:$0xf]
      %v4092 = vld [vmem:[%s4 + $0x1c] sm:$0xf]
      %v4093 = vld [vmem:[%s4 + $0x20] sm:$0xf]
      %v4094 = vld [vmem:[%s4 + $0x24] sm:$0xf]
      %v4095 = vld [vmem:[%s4 + $0x28] sm:$0xf]
      %v4096 = vld [vmem:[%s4 + $0x2c] sm:$0xf]
      %v4097 = vld [vmem:[%s4 + $0x30] sm:$0xf]
      %v4098 = vld [vmem:[%s4 + $0x34] sm:$0xf]
      %v4099 = vld [vmem:[%s4 + $0x38] sm:$0xf]
      %v4100 = vld [vmem:[%s4 + $0x3c] sm:$0xf]
      %v4101 = vld [vmem:[#allocation2 + $0x60] sm:$0x1]
      %s4102 = scalar_lea.vmem %s4, 64
      %v4103 = vld [vmem:[%s4102] sm:$0xf]
      %v4104 = vld [vmem:[%s4102 + $0x4] sm:$0xf]
      %v4105 = vld [vmem:[%s4102 + $0x8] sm:$0xf]
      %v4106 = vld [vmem:[%s4102 + $0xc] sm:$0xf]
      %v4107 = vld [vmem:[%s4102 + $0x10] sm:$0xf]
      %v4108 = vld [vmem:[%s4102 + $0x14] sm:$0xf]
      %v4109 = vld [vmem:[%s4102 + $0x18] sm:$0xf]
      %v4110 = vld [vmem:[%s4102 + $0x1c] sm:$0xf]
      %v4111 = vld [vmem:[%s4102 + $0x20] sm:$0xf]
      %v4112 = vld [vmem:[%s4102 + $0x24] sm:$0xf]
      %v4113 = vld [vmem:[%s4102 + $0x28] sm:$0xf]
      %v4114 = vld [vmem:[%s4102 + $0x2c] sm:$0xf]
      %v4115 = vld [vmem:[%s4102 + $0x30] sm:$0xf]
      %v4116 = vld [vmem:[%s4102 + $0x34] sm:$0xf]
      %v4117 = vld [vmem:[%s4102 + $0x38] sm:$0xf]
      %v4118 = vld [vmem:[%s4102 + $0x3c] sm:$0xf]
      %v4144 = vunpack.c.l.b16 %v4061
      %v4145 = vunpack.c.l.b16 %v4062
      %v4146 = vunpack.c.l.b16 %v4063
      %v4147 = vunpack.c.l.b16 %v4064
      %v4148 = vunpack.c.l.b16 %v4065
      %v4149 = vunpack.c.l.b16 %v4066
      %v4150 = vunpack.c.l.b16 %v4067
      %v4151 = vunpack.c.l.b16 %v4068
      %v4152 = vunpack.c.l.b16 %v4069
      %v4153 = vunpack.c.l.b16 %v4070
      %v4154 = vunpack.c.l.b16 %v4071
      %v4155 = vunpack.c.l.b16 %v4072
      %v4156 = vunpack.c.l.b16 %v4073
      %v4157 = vunpack.c.l.b16 %v4074
      %v4158 = vunpack.c.l.b16 %v4075
      %v4159 = vunpack.c.l.b16 %v4076
      %v4160 = vunpack.c.l.b16 %v4077
      %v4161 = vunpack.c.l.b16 %v4078
      %v4162 = vunpack.c.l.b16 %v4079
      %v4163 = vunpack.c.l.b16 %v4080
      %v4164 = vunpack.c.l.b16 %v4081
      %v4165 = vunpack.c.l.b16 %v4082
      %v4166 = vunpack.c.l.b16 %v4083
      %v4167 = vunpack.c.l.b16 %v4084
      %v4168 = vunpack.c.l.b16 %v4101
      %v4169 = vpack.c.b16 %v4145, %v4144
      %v4170 = vpack.c.b16 %v4147, %v4146
      %v4171 = vpack.c.b16 %v4149, %v4148
      %v4172 = vpack.c.b16 %v4151, %v4150
      %v4173 = vpack.c.b16 %v4153, %v4152
      %v4174 = vpack.c.b16 %v4155, %v4154
      %v4175 = vpack.c.b16 %v4157, %v4156
      %v4176 = vpack.c.b16 %v4159, %v4158
      %v4177 = vpack.c.b16 %v4161, %v4160
      %v4178 = vpack.c.b16 %v4163, %v4162
      %v4179 = vpack.c.b16 %v4165, %v4164
      %v4180 = vpack.c.b16 %v4167, %v4166
      %v4181 = vpack.c.b16 %v4168, %v4168
      %v4183 = vshrl.u32 %v4169, 16
      %v4185 = vshll.u32 %v4169, 16
      %v4187 = vrot.slane %v4185, 1
      %v4188 = vor.u32 %v4183, %v4187
      %v4190 = vshll.u32 %v4170, 16
      %v4192 = vrot.slane %v4190, 1
      %v4193 = vsel %vm451, %v4188, %v4192
      %v4194 = vshrl.u32 %v4170, 16
      %v4196 = vor.u32 %v4194, %v4192
      %v4198 = vshll.u32 %v4171, 16
      %v4200 = vrot.slane %v4198, 1
      %v4201 = vsel %vm451, %v4196, %v4200
      %v4202 = vshrl.u32 %v4171, 16
      %v4204 = vor.u32 %v4202, %v4200
      %v4206 = vshll.u32 %v4172, 16
      %v4208 = vrot.slane %v4206, 1
      %v4209 = vsel %vm451, %v4204, %v4208
      %v4210 = vshrl.u32 %v4172, 16
      %v4212 = vor.u32 %v4210, %v4208
      %v4214 = vshll.u32 %v4173, 16
      %v4216 = vrot.slane %v4214, 1
      %v4217 = vsel %vm451, %v4212, %v4216
      %v4218 = vshrl.u32 %v4173, 16
      %v4220 = vor.u32 %v4218, %v4216
      %v4222 = vshll.u32 %v4174, 16
      %v4224 = vrot.slane %v4222, 1
      %v4225 = vsel %vm451, %v4220, %v4224
      %v4226 = vshrl.u32 %v4174, 16
      %v4228 = vor.u32 %v4226, %v4224
      %v4230 = vshll.u32 %v4175, 16
      %v4232 = vrot.slane %v4230, 1
      %v4233 = vsel %vm451, %v4228, %v4232
      %v4234 = vshrl.u32 %v4175, 16
      %v4236 = vor.u32 %v4234, %v4232
      %v4238 = vshll.u32 %v4176, 16
      %v4240 = vrot.slane %v4238, 1
      %v4241 = vsel %vm451, %v4236, %v4240
      %v4242 = vshrl.u32 %v4176, 16
      %v4244 = vor.u32 %v4242, %v4240
      %v4246 = vshll.u32 %v4177, 16
      %v4248 = vrot.slane %v4246, 1
      %v4249 = vsel %vm451, %v4244, %v4248
      %v4250 = vshrl.u32 %v4177, 16
      %v4252 = vor.u32 %v4250, %v4248
      %v4254 = vshll.u32 %v4178, 16
      %v4256 = vrot.slane %v4254, 1
      %v4257 = vsel %vm451, %v4252, %v4256
      %v4258 = vshrl.u32 %v4178, 16
      %v4260 = vor.u32 %v4258, %v4256
      %v4262 = vshll.u32 %v4179, 16
      %v4264 = vrot.slane %v4262, 1
      %v4265 = vsel %vm451, %v4260, %v4264
      %v4266 = vshrl.u32 %v4179, 16
      %v4268 = vor.u32 %v4266, %v4264
      %v4270 = vshll.u32 %v4180, 16
      %v4272 = vrot.slane %v4270, 1
      %v4273 = vsel %vm451, %v4268, %v4272
      %v4274 = vshrl.u32 %v4180, 16
      %v4276 = vor.u32 %v4274, %v4272
      %v4278 = vshll.u32 %v4181, 16
      %v4280 = vrot.slane %v4278, 1
      %v4281 = vsel %vm451, %v4276, %v4280
      %v4310 = vunpack.c.l.b16 %v4103
      %v4311 = vunpack.c.l.b16 %v4104
      %v4312 = vunpack.c.l.b16 %v4105
      %v4313 = vunpack.c.l.b16 %v4106
      %v4314 = vunpack.c.l.b16 %v4107
      %v4315 = vunpack.c.l.b16 %v4108
      %v4316 = vunpack.c.l.b16 %v4109
      %v4317 = vunpack.c.l.b16 %v4110
      %v4318 = vunpack.c.l.b16 %v4111
      %v4319 = vunpack.c.l.b16 %v4112
      %v4320 = vunpack.c.l.b16 %v4113
      %v4321 = vunpack.c.l.b16 %v4114
      %v4322 = vunpack.c.l.b16 %v4115
      %v4323 = vunpack.c.l.b16 %v4116
      %v4324 = vunpack.c.l.b16 %v4117
      %v4325 = vunpack.c.l.b16 %v4118
      %v4326 = vpack.c.b16 %v4311, %v4310
      %v4327 = vpack.c.b16 %v4313, %v4312
      %v4328 = vpack.c.b16 %v4315, %v4314
      %v4329 = vpack.c.b16 %v4317, %v4316
      %v4330 = vpack.c.b16 %v4319, %v4318
      %v4331 = vpack.c.b16 %v4321, %v4320
      %v4332 = vpack.c.b16 %v4323, %v4322
      %v4333 = vpack.c.b16 %v4325, %v4324
      %4342 = vmatprep.subr.bf16.mxu0 0
      %4343 = vmatpush1.bf16.msra.mxu0 %v4333
      %4344 = vmatprep.subr.bf16.mxu0 0
      %4345 = vmatpush1.bf16.msra.mxu0 %v4332
      %4346 = vmatprep.subr.bf16.mxu0 0
      %4347 = vmatpush1.bf16.msra.mxu0 %v4331
      %4348 = vmatprep.subr.bf16.mxu0 0
      %4349 = vmatpush1.bf16.msra.mxu0 %v4330
      %4350 = vmatprep.subr.bf16.mxu0 0
      %4351 = vmatpush1.bf16.msra.mxu0 %v4329
      %4352 = vmatprep.subr.bf16.mxu0 0
      %4353 = vmatpush1.bf16.msra.mxu0 %v4328
      %4354 = vmatprep.subr.bf16.mxu0 0
      %4355 = vmatpush1.bf16.msra.mxu0 %v4327
      %4356 = vmatprep.subr.bf16.mxu0 0
      %4357 = vmatpush1.bf16.msra.mxu0 %v4326
      %4358 = vmatprep.subr.bf16.mxu0 0
      %4359 = vmatpush2.bf16.msra.mxu0 0
      %4360 = vmatprep.subr.bf16.mxu0 0
      %4361 = vmatpush2.bf16.msra.mxu0 0
      %4362 = vmatprep.subr.bf16.mxu0 0
      %4363 = vmatpush2.bf16.msra.mxu0 0
      %4364 = vmatprep.subr.bf16.mxu0 0
      %4365 = vmatpush2.bf16.msra.mxu0 0
      %4366 = vmatprep.subr.bf16.mxu0 0
      %4367 = vmatpush2.bf16.msra.mxu0 0
      %4368 = vmatprep.subr.bf16.mxu0 0
      %4369 = vmatpush2.bf16.msra.mxu0 0
      %4370 = vmatprep.subr.bf16.mxu0 0
      %4371 = vmatpush2.bf16.msra.mxu0 0
      %4372 = vmatprep.subr.bf16.mxu0 0
      %4373 = vmatpush2.bf16.msra.mxu0 0
      %4374 = vmatprep.mubr.bf16.mxu0 0
      %4375 = vmatmul.mubr.bf16.gmra.mxu0 %v4193
      %v4376 = vpop.f32.mrf.mxu0
      %v4377 = vadd.f32 0.0, %v4376
      %v4378 = vpop.f32.mrf.mxu0
      %v4379 = vpop.f32.mrf.mxu0
      %v4380 = vadd.f32 0.0, %v4379
      %v4381 = vpop.f32.mrf.mxu0
      %4382 = vmatprep.mubr.bf16.mxu0 0
      %4383 = vmatmul.mubr.bf16.gmra.mxu0 %v4201
      %v4384 = vpop.f32.mrf.mxu0
      %v4385 = vadd.f32 0.0, %v4384
      %v4386 = vpop.f32.mrf.mxu0
      %v4387 = vpop.f32.mrf.mxu0
      %v4388 = vadd.f32 0.0, %v4387
      %v4389 = vpop.f32.mrf.mxu0
      %4390 = vmatprep.mubr.bf16.mxu0 0
      %4391 = vmatmul.mubr.bf16.gmra.mxu0 %v4209
      %v4392 = vpop.f32.mrf.mxu0
      %v4393 = vadd.f32 0.0, %v4392
      %v4394 = vpop.f32.mrf.mxu0
      %v4395 = vpop.f32.mrf.mxu0
      %v4396 = vadd.f32 0.0, %v4395
      %v4397 = vpop.f32.mrf.mxu0
      %4398 = vmatprep.mubr.bf16.mxu0 0
      %4399 = vmatmul.mubr.bf16.gmra.mxu0 %v4217
      %v4400 = vpop.f32.mrf.mxu0
      %v4401 = vadd.f32 0.0, %v4400
      %v4402 = vpop.f32.mrf.mxu0
      %v4403 = vpop.f32.mrf.mxu0
      %v4404 = vadd.f32 0.0, %v4403
      %v4405 = vpop.f32.mrf.mxu0
      %4406 = vmatprep.mubr.bf16.mxu0 0
      %4407 = vmatmul.mubr.bf16.gmra.mxu0 %v4225
      %v4408 = vpop.f32.mrf.mxu0
      %v4409 = vadd.f32 0.0, %v4408
      %v4410 = vpop.f32.mrf.mxu0
      %v4411 = vpop.f32.mrf.mxu0
      %v4412 = vadd.f32 0.0, %v4411
      %v4413 = vpop.f32.mrf.mxu0
      %4414 = vmatprep.mubr.bf16.mxu0 0
      %4415 = vmatmul.mubr.bf16.gmra.mxu0 %v4233
      %v4416 = vpop.f32.mrf.mxu0
      %v4417 = vadd.f32 0.0, %v4416
      %v4418 = vpop.f32.mrf.mxu0
      %v4419 = vpop.f32.mrf.mxu0
      %v4420 = vadd.f32 0.0, %v4419
      %v4421 = vpop.f32.mrf.mxu0
      %4422 = vmatprep.mubr.bf16.mxu0 0
      %4423 = vmatmul.mubr.bf16.gmra.mxu0 %v4241
      %v4424 = vpop.f32.mrf.mxu0
      %v4425 = vadd.f32 0.0, %v4424
      %v4426 = vpop.f32.mrf.mxu0
      %v4427 = vpop.f32.mrf.mxu0
      %v4428 = vadd.f32 0.0, %v4427
      %v4429 = vpop.f32.mrf.mxu0
      %4430 = vmatprep.mubr.bf16.mxu0 0
      %4431 = vmatmul.mubr.bf16.gmra.mxu0 %v4249
      %v4432 = vpop.f32.mrf.mxu0
      %v4433 = vadd.f32 0.0, %v4432
      %v4434 = vpop.f32.mrf.mxu0
      %v4435 = vpop.f32.mrf.mxu0
      %v4436 = vadd.f32 0.0, %v4435
      %v4437 = vpop.f32.mrf.mxu0
      %4438 = vmatprep.mubr.bf16.mxu0 0
      %4439 = vmatmul.mubr.bf16.gmra.mxu0 %v4257
      %v4440 = vpop.f32.mrf.mxu0
      %v4441 = vadd.f32 0.0, %v4440
      %v4442 = vpop.f32.mrf.mxu0
      %v4443 = vpop.f32.mrf.mxu0
      %v4444 = vadd.f32 0.0, %v4443
      %v4445 = vpop.f32.mrf.mxu0
      %4446 = vmatprep.mubr.bf16.mxu0 0
      %4447 = vmatmul.mubr.bf16.gmra.mxu0 %v4265
      %v4448 = vpop.f32.mrf.mxu0
      %v4449 = vadd.f32 0.0, %v4448
      %v4450 = vpop.f32.mrf.mxu0
      %v4451 = vpop.f32.mrf.mxu0
      %v4452 = vadd.f32 0.0, %v4451
      %v4453 = vpop.f32.mrf.mxu0
      %4454 = vmatprep.mubr.bf16.mxu0 0
      %4455 = vmatmul.mubr.bf16.gmra.mxu0 %v4273
      %v4456 = vpop.f32.mrf.mxu0
      %v4457 = vadd.f32 0.0, %v4456
      %v4458 = vpop.f32.mrf.mxu0
      %v4459 = vpop.f32.mrf.mxu0
      %v4460 = vadd.f32 0.0, %v4459
      %v4461 = vpop.f32.mrf.mxu0
      %4462 = vmatprep.mubr.bf16.mxu0 0
      %4463 = vmatmul.mubr.bf16.gmra.mxu0 %v4281
      %v4464 = vpop.f32.mrf.mxu0
      %v4465 = vadd.f32 0.0, %v4464
      %v4466 = vpop.f32.mrf.mxu0
      %v4467 = vpop.f32.mrf.mxu0
      %v4468 = vadd.f32 0.0, %v4467
      %v4469 = vpop.f32.mrf.mxu0
      %4470 = vdwg.mxu0
      %v4499 = vunpack.c.l.b16 %v4085
      %v4500 = vunpack.c.l.b16 %v4086
      %v4501 = vunpack.c.l.b16 %v4087
      %v4502 = vunpack.c.l.b16 %v4088
      %v4503 = vunpack.c.l.b16 %v4089
      %v4504 = vunpack.c.l.b16 %v4090
      %v4505 = vunpack.c.l.b16 %v4091
      %v4506 = vunpack.c.l.b16 %v4092
      %v4507 = vunpack.c.l.b16 %v4093
      %v4508 = vunpack.c.l.b16 %v4094
      %v4509 = vunpack.c.l.b16 %v4095
      %v4510 = vunpack.c.l.b16 %v4096
      %v4511 = vunpack.c.l.b16 %v4097
      %v4512 = vunpack.c.l.b16 %v4098
      %v4513 = vunpack.c.l.b16 %v4099
      %v4514 = vunpack.c.l.b16 %v4100
      %v4515 = vpack.c.b16 %v4500, %v4499
      %v4516 = vpack.c.b16 %v4502, %v4501
      %v4517 = vpack.c.b16 %v4504, %v4503
      %v4518 = vpack.c.b16 %v4506, %v4505
      %v4519 = vpack.c.b16 %v4508, %v4507
      %v4520 = vpack.c.b16 %v4510, %v4509
      %v4521 = vpack.c.b16 %v4512, %v4511
      %v4522 = vpack.c.b16 %v4514, %v4513
      %4531 = vmatprep.subr.bf16.mxu0 0
      %4532 = vmatpush1.bf16.msra.mxu0 %v4522
      %4533 = vmatprep.subr.bf16.mxu0 0
      %4534 = vmatpush1.bf16.msra.mxu0 %v4521
      %4535 = vmatprep.subr.bf16.mxu0 0
      %4536 = vmatpush1.bf16.msra.mxu0 %v4520
      %4537 = vmatprep.subr.bf16.mxu0 0
      %4538 = vmatpush1.bf16.msra.mxu0 %v4519
      %4539 = vmatprep.subr.bf16.mxu0 0
      %4540 = vmatpush1.bf16.msra.mxu0 %v4518
      %4541 = vmatprep.subr.bf16.mxu0 0
      %4542 = vmatpush1.bf16.msra.mxu0 %v4517
      %4543 = vmatprep.subr.bf16.mxu0 0
      %4544 = vmatpush1.bf16.msra.mxu0 %v4516
      %4545 = vmatprep.subr.bf16.mxu0 0
      %4546 = vmatpush1.bf16.msra.mxu0 %v4515
      %4547 = vmatprep.subr.bf16.mxu0 0
      %4548 = vmatpush2.bf16.msra.mxu0 0
      %4549 = vmatprep.subr.bf16.mxu0 0
      %4550 = vmatpush2.bf16.msra.mxu0 0
      %4551 = vmatprep.subr.bf16.mxu0 0
      %4552 = vmatpush2.bf16.msra.mxu0 0
      %4553 = vmatprep.subr.bf16.mxu0 0
      %4554 = vmatpush2.bf16.msra.mxu0 0
      %4555 = vmatprep.subr.bf16.mxu0 0
      %4556 = vmatpush2.bf16.msra.mxu0 0
      %4557 = vmatprep.subr.bf16.mxu0 0
      %4558 = vmatpush2.bf16.msra.mxu0 0
      %4559 = vmatprep.subr.bf16.mxu0 0
      %4560 = vmatpush2.bf16.msra.mxu0 0
      %4561 = vmatprep.subr.bf16.mxu0 0
      %4562 = vmatpush2.bf16.msra.mxu0 0
      %4563 = vmatprep.mubr.bf16.mxu0 0
      %4564 = vmatmul.mubr.bf16.gmra.mxu0 %v4169
      %v4565 = vpop.f32.mrf.mxu0
      %v4566 = vadd.f32 %v4377, %v4565
      %v4567 = vpop.f32.mrf.mxu0
      %v4568 = vpop.f32.mrf.mxu0
      %v4569 = vadd.f32 %v4380, %v4568
      %v4570 = vpop.f32.mrf.mxu0
      %4571 = vmatprep.mubr.bf16.mxu0 0
      %4572 = vmatmul.mubr.bf16.gmra.mxu0 %v4170
      %v4573 = vpop.f32.mrf.mxu0
      %v4574 = vadd.f32 %v4385, %v4573
      %v4575 = vpop.f32.mrf.mxu0
      %v4576 = vpop.f32.mrf.mxu0
      %v4577 = vadd.f32 %v4388, %v4576
      %v4578 = vpop.f32.mrf.mxu0
      %4579 = vmatprep.mubr.bf16.mxu0 0
      %4580 = vmatmul.mubr.bf16.gmra.mxu0 %v4171
      %v4581 = vpop.f32.mrf.mxu0
      %v4582 = vadd.f32 %v4393, %v4581
      %v4583 = vpop.f32.mrf.mxu0
      %v4584 = vpop.f32.mrf.mxu0
      %v4585 = vadd.f32 %v4396, %v4584
      %v4586 = vpop.f32.mrf.mxu0
      %4587 = vmatprep.mubr.bf16.mxu0 0
      %4588 = vmatmul.mubr.bf16.gmra.mxu0 %v4172
      %v4589 = vpop.f32.mrf.mxu0
      %v4590 = vadd.f32 %v4401, %v4589
      %v4591 = vpop.f32.mrf.mxu0
      %v4592 = vpop.f32.mrf.mxu0
      %v4593 = vadd.f32 %v4404, %v4592
      %v4594 = vpop.f32.mrf.mxu0
      %4595 = vmatprep.mubr.bf16.mxu0 0
      %4596 = vmatmul.mubr.bf16.gmra.mxu0 %v4173
      %v4597 = vpop.f32.mrf.mxu0
      %v4598 = vadd.f32 %v4409, %v4597
      %v4599 = vpop.f32.mrf.mxu0
      %v4600 = vpop.f32.mrf.mxu0
      %v4601 = vadd.f32 %v4412, %v4600
      %v4602 = vpop.f32.mrf.mxu0
      %4603 = vmatprep.mubr.bf16.mxu0 0
      %4604 = vmatmul.mubr.bf16.gmra.mxu0 %v4174
      %v4605 = vpop.f32.mrf.mxu0
      %v4606 = vadd.f32 %v4417, %v4605
      %v4607 = vpop.f32.mrf.mxu0
      %v4608 = vpop.f32.mrf.mxu0
      %v4609 = vadd.f32 %v4420, %v4608
      %v4610 = vpop.f32.mrf.mxu0
      %4611 = vmatprep.mubr.bf16.mxu0 0
      %4612 = vmatmul.mubr.bf16.gmra.mxu0 %v4175
      %v4613 = vpop.f32.mrf.mxu0
      %v4614 = vadd.f32 %v4425, %v4613
      %v4615 = vpop.f32.mrf.mxu0
      %v4616 = vpop.f32.mrf.mxu0
      %v4617 = vadd.f32 %v4428, %v4616
      %v4618 = vpop.f32.mrf.mxu0
      %4619 = vmatprep.mubr.bf16.mxu0 0
      %4620 = vmatmul.mubr.bf16.gmra.mxu0 %v4176
      %v4621 = vpop.f32.mrf.mxu0
      %v4622 = vadd.f32 %v4433, %v4621
      %v4623 = vpop.f32.mrf.mxu0
      %v4624 = vpop.f32.mrf.mxu0
      %v4625 = vadd.f32 %v4436, %v4624
      %v4626 = vpop.f32.mrf.mxu0
      %4627 = vmatprep.mubr.bf16.mxu0 0
      %4628 = vmatmul.mubr.bf16.gmra.mxu0 %v4177
      %v4629 = vpop.f32.mrf.mxu0
      %v4630 = vadd.f32 %v4441, %v4629
      %v4631 = vpop.f32.mrf.mxu0
      %v4632 = vpop.f32.mrf.mxu0
      %v4633 = vadd.f32 %v4444, %v4632
      %v4634 = vpop.f32.mrf.mxu0
      %4635 = vmatprep.mubr.bf16.mxu0 0
      %4636 = vmatmul.mubr.bf16.gmra.mxu0 %v4178
      %v4637 = vpop.f32.mrf.mxu0
      %v4638 = vadd.f32 %v4449, %v4637
      %v4639 = vpop.f32.mrf.mxu0
      %v4640 = vpop.f32.mrf.mxu0
      %v4641 = vadd.f32 %v4452, %v4640
      %v4642 = vpop.f32.mrf.mxu0
      %4643 = vmatprep.mubr.bf16.mxu0 0
      %4644 = vmatmul.mubr.bf16.gmra.mxu0 %v4179
      %v4645 = vpop.f32.mrf.mxu0
      %v4646 = vadd.f32 %v4457, %v4645
      %v4647 = vpop.f32.mrf.mxu0
      %v4648 = vpop.f32.mrf.mxu0
      %v4649 = vadd.f32 %v4460, %v4648
      %v4650 = vpop.f32.mrf.mxu0
      %4651 = vmatprep.mubr.bf16.mxu0 0
      %4652 = vmatmul.mubr.bf16.gmra.mxu0 %v4180
      %v4653 = vpop.f32.mrf.mxu0
      %v4654 = vadd.f32 %v4465, %v4653
      %v4655 = vpop.f32.mrf.mxu0
      %v4656 = vpop.f32.mrf.mxu0
      %v4657 = vadd.f32 %v4468, %v4656
      %v4658 = vpop.f32.mrf.mxu0
      %4659 = vdwg.mxu0
      %v4660 = vld [vmem:[#allocation2] sm:$0xe]
      %s4661 = scalar_lea.vmem %s4, 128
      %v4662 = vld [vmem:[%s4661] sm:$0xf]
      %v4663 = vld [vmem:[%s4661 + $0x4] sm:$0xf]
      %v4664 = vld [vmem:[%s4661 + $0x8] sm:$0xf]
      %v4665 = vld [vmem:[%s4661 + $0xc] sm:$0xf]
      %v4666 = vld [vmem:[%s4661 + $0x10] sm:$0xf]
      %v4667 = vld [vmem:[%s4661 + $0x14] sm:$0xf]
      %v4668 = vld [vmem:[%s4661 + $0x18] sm:$0xf]
      %v4669 = vld [vmem:[%s4661 + $0x1c] sm:$0xf]
      %v4670 = vld [vmem:[%s4661 + $0x20] sm:$0xf]
      %v4671 = vld [vmem:[%s4661 + $0x24] sm:$0xf]
      %v4672 = vld [vmem:[%s4661 + $0x28] sm:$0xf]
      %v4673 = vld [vmem:[%s4661 + $0x2c] sm:$0xf]
      %v4674 = vld [vmem:[%s4661 + $0x30] sm:$0xf]
      %v4675 = vld [vmem:[%s4661 + $0x34] sm:$0xf]
      %v4676 = vld [vmem:[%s4661 + $0x38] sm:$0xf]
      %v4677 = vld [vmem:[%s4661 + $0x3c] sm:$0xf]
      %v4679 = vunpack.c.l.b16 %v4660
      %v4680 = vpack.c.b16 %v4145, %v4679
      %v4681 = vrot.slane %v4680, 1
      %v4682 = vrot.slane %v4170, 1
      %v4683 = vsel %vm1029, %v4681, %v4682
      %v4684 = vrot.slane %v4171, 1
      %v4685 = vsel %vm1029, %v4682, %v4684
      %v4686 = vrot.slane %v4172, 1
      %v4687 = vsel %vm1029, %v4684, %v4686
      %v4688 = vrot.slane %v4173, 1
      %v4689 = vsel %vm1029, %v4686, %v4688
      %v4690 = vrot.slane %v4174, 1
      %v4691 = vsel %vm1029, %v4688, %v4690
      %v4692 = vrot.slane %v4175, 1
      %v4693 = vsel %vm1029, %v4690, %v4692
      %v4694 = vrot.slane %v4176, 1
      %v4695 = vsel %vm1029, %v4692, %v4694
      %v4696 = vrot.slane %v4177, 1
      %v4697 = vsel %vm1029, %v4694, %v4696
      %v4698 = vrot.slane %v4178, 1
      %v4699 = vsel %vm1029, %v4696, %v4698
      %v4700 = vrot.slane %v4179, 1
      %v4701 = vsel %vm1029, %v4698, %v4700
      %v4702 = vrot.slane %v4180, 1
      %v4703 = vsel %vm1029, %v4700, %v4702
      %v4704 = vrot.slane %v4181, 1
      %v4705 = vsel %vm1029, %v4702, %v4704
      %v4734 = vunpack.c.l.b16 %v4662
      %v4735 = vunpack.c.l.b16 %v4663
      %v4736 = vunpack.c.l.b16 %v4664
      %v4737 = vunpack.c.l.b16 %v4665
      %v4738 = vunpack.c.l.b16 %v4666
      %v4739 = vunpack.c.l.b16 %v4667
      %v4740 = vunpack.c.l.b16 %v4668
      %v4741 = vunpack.c.l.b16 %v4669
      %v4742 = vunpack.c.l.b16 %v4670
      %v4743 = vunpack.c.l.b16 %v4671
      %v4744 = vunpack.c.l.b16 %v4672
      %v4745 = vunpack.c.l.b16 %v4673
      %v4746 = vunpack.c.l.b16 %v4674
      %v4747 = vunpack.c.l.b16 %v4675
      %v4748 = vunpack.c.l.b16 %v4676
      %v4749 = vunpack.c.l.b16 %v4677
      %v4750 = vpack.c.b16 %v4735, %v4734
      %v4751 = vpack.c.b16 %v4737, %v4736
      %v4752 = vpack.c.b16 %v4739, %v4738
      %v4753 = vpack.c.b16 %v4741, %v4740
      %v4754 = vpack.c.b16 %v4743, %v4742
      %v4755 = vpack.c.b16 %v4745, %v4744
      %v4756 = vpack.c.b16 %v4747, %v4746
      %v4757 = vpack.c.b16 %v4749, %v4748
      %4766 = vmatprep.subr.bf16.mxu0 0
      %4767 = vmatpush1.bf16.msra.mxu0 %v4757
      %4768 = vmatprep.subr.bf16.mxu0 0
      %4769 = vmatpush1.bf16.msra.mxu0 %v4756
      %4770 = vmatprep.subr.bf16.mxu0 0
      %4771 = vmatpush1.bf16.msra.mxu0 %v4755
      %4772 = vmatprep.subr.bf16.mxu0 0
      %4773 = vmatpush1.bf16.msra.mxu0 %v4754
      %4774 = vmatprep.subr.bf16.mxu0 0
      %4775 = vmatpush1.bf16.msra.mxu0 %v4753
      %4776 = vmatprep.subr.bf16.mxu0 0
      %4777 = vmatpush1.bf16.msra.mxu0 %v4752
      %4778 = vmatprep.subr.bf16.mxu0 0
      %4779 = vmatpush1.bf16.msra.mxu0 %v4751
      %4780 = vmatprep.subr.bf16.mxu0 0
      %4781 = vmatpush1.bf16.msra.mxu0 %v4750
      %4782 = vmatprep.subr.bf16.mxu0 0
      %4783 = vmatpush2.bf16.msra.mxu0 0
      %4784 = vmatprep.subr.bf16.mxu0 0
      %4785 = vmatpush2.bf16.msra.mxu0 0
      %4786 = vmatprep.subr.bf16.mxu0 0
      %4787 = vmatpush2.bf16.msra.mxu0 0
      %4788 = vmatprep.subr.bf16.mxu0 0
      %4789 = vmatpush2.bf16.msra.mxu0 0
      %4790 = vmatprep.subr.bf16.mxu0 0
      %4791 = vmatpush2.bf16.msra.mxu0 0
      %4792 = vmatprep.subr.bf16.mxu0 0
      %4793 = vmatpush2.bf16.msra.mxu0 0
      %4794 = vmatprep.subr.bf16.mxu0 0
      %4795 = vmatpush2.bf16.msra.mxu0 0
      %4796 = vmatprep.subr.bf16.mxu0 0
      %4797 = vmatpush2.bf16.msra.mxu0 0
      %4798 = vmatprep.mubr.bf16.mxu0 0
      %4799 = vmatmul.mubr.bf16.gmra.mxu0 %v4683
      %v4800 = vpop.f32.mrf.mxu0
      %v4801 = vadd.f32 0.0, %v4800
      %v4802 = vpop.f32.mrf.mxu0
      %v4803 = vpop.f32.mrf.mxu0
      %v4804 = vadd.f32 0.0, %v4803
      %v4805 = vpop.f32.mrf.mxu0
      %4806 = vmatprep.mubr.bf16.mxu0 0
      %4807 = vmatmul.mubr.bf16.gmra.mxu0 %v4685
      %v4808 = vpop.f32.mrf.mxu0
      %v4809 = vadd.f32 0.0, %v4808
      %v4810 = vpop.f32.mrf.mxu0
      %v4811 = vpop.f32.mrf.mxu0
      %v4812 = vadd.f32 0.0, %v4811
      %v4813 = vpop.f32.mrf.mxu0
      %4814 = vmatprep.mubr.bf16.mxu0 0
      %4815 = vmatmul.mubr.bf16.gmra.mxu0 %v4687
      %v4816 = vpop.f32.mrf.mxu0
      %v4817 = vadd.f32 0.0, %v4816
      %v4818 = vpop.f32.mrf.mxu0
      %v4819 = vpop.f32.mrf.mxu0
      %v4820 = vadd.f32 0.0, %v4819
      %v4821 = vpop.f32.mrf.mxu0
      %4822 = vmatprep.mubr.bf16.mxu0 0
      %4823 = vmatmul.mubr.bf16.gmra.mxu0 %v4689
      %v4824 = vpop.f32.mrf.mxu0
      %v4825 = vadd.f32 0.0, %v4824
      %v4826 = vpop.f32.mrf.mxu0
      %v4827 = vpop.f32.mrf.mxu0
      %v4828 = vadd.f32 0.0, %v4827
      %v4829 = vpop.f32.mrf.mxu0
      %4830 = vmatprep.mubr.bf16.mxu0 0
      %4831 = vmatmul.mubr.bf16.gmra.mxu0 %v4691
      %v4832 = vpop.f32.mrf.mxu0
      %v4833 = vadd.f32 0.0, %v4832
      %v4834 = vpop.f32.mrf.mxu0
      %v4835 = vpop.f32.mrf.mxu0
      %v4836 = vadd.f32 0.0, %v4835
      %v4837 = vpop.f32.mrf.mxu0
      %4838 = vmatprep.mubr.bf16.mxu0 0
      %4839 = vmatmul.mubr.bf16.gmra.mxu0 %v4693
      %v4840 = vpop.f32.mrf.mxu0
      %v4841 = vadd.f32 0.0, %v4840
      %v4842 = vpop.f32.mrf.mxu0
      %v4843 = vpop.f32.mrf.mxu0
      %v4844 = vadd.f32 0.0, %v4843
      %v4845 = vpop.f32.mrf.mxu0
      %4846 = vmatprep.mubr.bf16.mxu0 0
      %4847 = vmatmul.mubr.bf16.gmra.mxu0 %v4695
      %v4848 = vpop.f32.mrf.mxu0
      %v4849 = vadd.f32 0.0, %v4848
      %v4850 = vpop.f32.mrf.mxu0
      %v4851 = vpop.f32.mrf.mxu0
      %v4852 = vadd.f32 0.0, %v4851
      %v4853 = vpop.f32.mrf.mxu0
      %4854 = vmatprep.mubr.bf16.mxu0 0
      %4855 = vmatmul.mubr.bf16.gmra.mxu0 %v4697
      %v4856 = vpop.f32.mrf.mxu0
      %v4857 = vadd.f32 0.0, %v4856
      %v4858 = vpop.f32.mrf.mxu0
      %v4859 = vpop.f32.mrf.mxu0
      %v4860 = vadd.f32 0.0, %v4859
      %v4861 = vpop.f32.mrf.mxu0
      %4862 = vmatprep.mubr.bf16.mxu0 0
      %4863 = vmatmul.mubr.bf16.gmra.mxu0 %v4699
      %v4864 = vpop.f32.mrf.mxu0
      %v4865 = vadd.f32 0.0, %v4864
      %v4866 = vpop.f32.mrf.mxu0
      %v4867 = vpop.f32.mrf.mxu0
      %v4868 = vadd.f32 0.0, %v4867
      %v4869 = vpop.f32.mrf.mxu0
      %4870 = vmatprep.mubr.bf16.mxu0 0
      %4871 = vmatmul.mubr.bf16.gmra.mxu0 %v4701
      %v4872 = vpop.f32.mrf.mxu0
      %v4873 = vadd.f32 0.0, %v4872
      %v4874 = vpop.f32.mrf.mxu0
      %v4875 = vpop.f32.mrf.mxu0
      %v4876 = vadd.f32 0.0, %v4875
      %v4877 = vpop.f32.mrf.mxu0
      %4878 = vmatprep.mubr.bf16.mxu0 0
      %4879 = vmatmul.mubr.bf16.gmra.mxu0 %v4703
      %v4880 = vpop.f32.mrf.mxu0
      %v4881 = vadd.f32 0.0, %v4880
      %v4882 = vpop.f32.mrf.mxu0
      %v4883 = vpop.f32.mrf.mxu0
      %v4884 = vadd.f32 0.0, %v4883
      %v4885 = vpop.f32.mrf.mxu0
      %4886 = vmatprep.mubr.bf16.mxu0 0
      %4887 = vmatmul.mubr.bf16.gmra.mxu0 %v4705
      %v4888 = vpop.f32.mrf.mxu0
      %v4889 = vadd.f32 0.0, %v4888
      %v4890 = vpop.f32.mrf.mxu0
      %v4891 = vpop.f32.mrf.mxu0
      %v4892 = vadd.f32 0.0, %v4891
      %v4893 = vpop.f32.mrf.mxu0
      %4894 = vdwg.mxu0
      %v4895 = vadd.f32 %v4566, %v4801
      %v4896 = vadd.f32 %v4569, %v4804
      %v4897 = vadd.f32 %v4574, %v4809
      %v4898 = vadd.f32 %v4577, %v4812
      %v4899 = vadd.f32 %v4582, %v4817
      %v4900 = vadd.f32 %v4585, %v4820
      %v4901 = vadd.f32 %v4590, %v4825
      %v4902 = vadd.f32 %v4593, %v4828
      %v4903 = vadd.f32 %v4598, %v4833
      %v4904 = vadd.f32 %v4601, %v4836
      %v4905 = vadd.f32 %v4606, %v4841
      %v4906 = vadd.f32 %v4609, %v4844
      %v4907 = vadd.f32 %v4614, %v4849
      %v4908 = vadd.f32 %v4617, %v4852
      %v4909 = vadd.f32 %v4622, %v4857
      %v4910 = vadd.f32 %v4625, %v4860
      %v4911 = vadd.f32 %v4630, %v4865
      %v4912 = vadd.f32 %v4633, %v4868
      %v4913 = vadd.f32 %v4638, %v4873
      %v4914 = vadd.f32 %v4641, %v4876
      %v4915 = vadd.f32 %v4646, %v4881
      %v4916 = vadd.f32 %v4649, %v4884
      %v4917 = vadd.f32 %v4654, %v4889
      %v4918 = vadd.f32 %v4657, %v4892
      %v4919 = vld [vmem:[#allocation2 + $0xc] sm:$0xf]
      %v4920 = vld [vmem:[#allocation2 + $0x10] sm:$0xf]
      %v4921 = vld [vmem:[#allocation2 + $0x14] sm:$0xf]
      %v4922 = vld [vmem:[#allocation2 + $0x18] sm:$0xf]
      %v4923 = vld [vmem:[#allocation2 + $0x1c] sm:$0xf]
      %v4924 = vld [vmem:[#allocation2 + $0x20] sm:$0xf]
      %v4925 = vld [vmem:[#allocation2 + $0x24] sm:$0xf]
      %v4926 = vld [vmem:[#allocation2 + $0x28] sm:$0xf]
      %v4927 = vld [vmem:[#allocation2 + $0x2c] sm:$0xf]
      %v4928 = vld [vmem:[#allocation2 + $0x30] sm:$0xf]
      %v4929 = vld [vmem:[#allocation2 + $0x34] sm:$0xf]
      %v4930 = vld [vmem:[#allocation2 + $0x38] sm:$0xf]
      %v4931 = vld [vmem:[#allocation2 + $0x3c] sm:$0xf]
      %v4932 = vld [vmem:[#allocation2 + $0x40] sm:$0xf]
      %v4933 = vld [vmem:[#allocation2 + $0x44] sm:$0xf]
      %v4934 = vld [vmem:[#allocation2 + $0x48] sm:$0xf]
      %v4935 = vld [vmem:[#allocation2 + $0x4c] sm:$0xf]
      %v4936 = vld [vmem:[#allocation2 + $0x50] sm:$0xf]
      %v4937 = vld [vmem:[#allocation2 + $0x54] sm:$0xf]
      %v4938 = vld [vmem:[#allocation2 + $0x58] sm:$0xf]
      %v4939 = vld [vmem:[#allocation2 + $0x5c] sm:$0xf]
      %v4940 = vld [vmem:[#allocation2 + $0x60] sm:$0xf]
      %v4941 = vld [vmem:[#allocation2 + $0x64] sm:$0xf]
      %v4942 = vld [vmem:[#allocation2 + $0x68] sm:$0xf]
      %s4943 = scalar_lea.vmem %s4, 192
      %v4944 = vld [vmem:[%s4943] sm:$0xf]
      %v4945 = vld [vmem:[%s4943 + $0x4] sm:$0xf]
      %v4946 = vld [vmem:[%s4943 + $0x8] sm:$0xf]
      %v4947 = vld [vmem:[%s4943 + $0xc] sm:$0xf]
      %v4948 = vld [vmem:[%s4943 + $0x10] sm:$0xf]
      %v4949 = vld [vmem:[%s4943 + $0x14] sm:$0xf]
      %v4950 = vld [vmem:[%s4943 + $0x18] sm:$0xf]
      %v4951 = vld [vmem:[%s4943 + $0x1c] sm:$0xf]
      %v4952 = vld [vmem:[%s4943 + $0x20] sm:$0xf]
      %v4953 = vld [vmem:[%s4943 + $0x24] sm:$0xf]
      %v4954 = vld [vmem:[%s4943 + $0x28] sm:$0xf]
      %v4955 = vld [vmem:[%s4943 + $0x2c] sm:$0xf]
      %v4956 = vld [vmem:[%s4943 + $0x30] sm:$0xf]
      %v4957 = vld [vmem:[%s4943 + $0x34] sm:$0xf]
      %v4958 = vld [vmem:[%s4943 + $0x38] sm:$0xf]
      %v4959 = vld [vmem:[%s4943 + $0x3c] sm:$0xf]
      %v4984 = vunpack.c.l.b16 %v4919
      %v4985 = vunpack.c.l.b16 %v4920
      %v4986 = vunpack.c.l.b16 %v4921
      %v4987 = vunpack.c.l.b16 %v4922
      %v4988 = vunpack.c.l.b16 %v4923
      %v4989 = vunpack.c.l.b16 %v4924
      %v4990 = vunpack.c.l.b16 %v4925
      %v4991 = vunpack.c.l.b16 %v4926
      %v4992 = vunpack.c.l.b16 %v4927
      %v4993 = vunpack.c.l.b16 %v4928
      %v4994 = vunpack.c.l.b16 %v4929
      %v4995 = vunpack.c.l.b16 %v4930
      %v4996 = vunpack.c.l.b16 %v4931
      %v4997 = vunpack.c.l.b16 %v4932
      %v4998 = vunpack.c.l.b16 %v4933
      %v4999 = vunpack.c.l.b16 %v4934
      %v5000 = vunpack.c.l.b16 %v4935
      %v5001 = vunpack.c.l.b16 %v4936
      %v5002 = vunpack.c.l.b16 %v4937
      %v5003 = vunpack.c.l.b16 %v4938
      %v5004 = vunpack.c.l.b16 %v4939
      %v5005 = vunpack.c.l.b16 %v4940
      %v5006 = vunpack.c.l.b16 %v4941
      %v5007 = vunpack.c.l.b16 %v4942
      %v5008 = vpack.c.b16 %v4985, %v4984
      %v5009 = vpack.c.b16 %v4987, %v4986
      %v5010 = vpack.c.b16 %v4989, %v4988
      %v5011 = vpack.c.b16 %v4991, %v4990
      %v5012 = vpack.c.b16 %v4993, %v4992
      %v5013 = vpack.c.b16 %v4995, %v4994
      %v5014 = vpack.c.b16 %v4997, %v4996
      %v5015 = vpack.c.b16 %v4999, %v4998
      %v5016 = vpack.c.b16 %v5001, %v5000
      %v5017 = vpack.c.b16 %v5003, %v5002
      %v5018 = vpack.c.b16 %v5005, %v5004
      %v5019 = vpack.c.b16 %v5007, %v5006
      %v5048 = vunpack.c.l.b16 %v4944
      %v5049 = vunpack.c.l.b16 %v4945
      %v5050 = vunpack.c.l.b16 %v4946
      %v5051 = vunpack.c.l.b16 %v4947
      %v5052 = vunpack.c.l.b16 %v4948
      %v5053 = vunpack.c.l.b16 %v4949
      %v5054 = vunpack.c.l.b16 %v4950
      %v5055 = vunpack.c.l.b16 %v4951
      %v5056 = vunpack.c.l.b16 %v4952
      %v5057 = vunpack.c.l.b16 %v4953
      %v5058 = vunpack.c.l.b16 %v4954
      %v5059 = vunpack.c.l.b16 %v4955
      %v5060 = vunpack.c.l.b16 %v4956
      %v5061 = vunpack.c.l.b16 %v4957
      %v5062 = vunpack.c.l.b16 %v4958
      %v5063 = vunpack.c.l.b16 %v4959
      %v5064 = vpack.c.b16 %v5049, %v5048
      %v5065 = vpack.c.b16 %v5051, %v5050
      %v5066 = vpack.c.b16 %v5053, %v5052
      %v5067 = vpack.c.b16 %v5055, %v5054
      %v5068 = vpack.c.b16 %v5057, %v5056
      %v5069 = vpack.c.b16 %v5059, %v5058
      %v5070 = vpack.c.b16 %v5061, %v5060
      %v5071 = vpack.c.b16 %v5063, %v5062
      %5080 = vmatprep.subr.bf16.mxu0 0
      %5081 = vmatpush1.bf16.msra.mxu0 %v5071
      %5082 = vmatprep.subr.bf16.mxu0 0
      %5083 = vmatpush1.bf16.msra.mxu0 %v5070
      %5084 = vmatprep.subr.bf16.mxu0 0
      %5085 = vmatpush1.bf16.msra.mxu0 %v5069
      %5086 = vmatprep.subr.bf16.mxu0 0
      %5087 = vmatpush1.bf16.msra.mxu0 %v5068
      %5088 = vmatprep.subr.bf16.mxu0 0
      %5089 = vmatpush1.bf16.msra.mxu0 %v5067
      %5090 = vmatprep.subr.bf16.mxu0 0
      %5091 = vmatpush1.bf16.msra.mxu0 %v5066
      %5092 = vmatprep.subr.bf16.mxu0 0
      %5093 = vmatpush1.bf16.msra.mxu0 %v5065
      %5094 = vmatprep.subr.bf16.mxu0 0
      %5095 = vmatpush1.bf16.msra.mxu0 %v5064
      %5096 = vmatprep.subr.bf16.mxu0 0
      %5097 = vmatpush2.bf16.msra.mxu0 0
      %5098 = vmatprep.subr.bf16.mxu0 0
      %5099 = vmatpush2.bf16.msra.mxu0 0
      %5100 = vmatprep.subr.bf16.mxu0 0
      %5101 = vmatpush2.bf16.msra.mxu0 0
      %5102 = vmatprep.subr.bf16.mxu0 0
      %5103 = vmatpush2.bf16.msra.mxu0 0
      %5104 = vmatprep.subr.bf16.mxu0 0
      %5105 = vmatpush2.bf16.msra.mxu0 0
      %5106 = vmatprep.subr.bf16.mxu0 0
      %5107 = vmatpush2.bf16.msra.mxu0 0
      %5108 = vmatprep.subr.bf16.mxu0 0
      %5109 = vmatpush2.bf16.msra.mxu0 0
      %5110 = vmatprep.subr.bf16.mxu0 0
      %5111 = vmatpush2.bf16.msra.mxu0 0
      %5112 = vmatprep.mubr.bf16.mxu0 0
      %5113 = vmatmul.mubr.bf16.gmra.mxu0 %v5008
      %v5114 = vpop.f32.mrf.mxu0
      %v5115 = vadd.f32 0.0, %v5114
      %v5116 = vpop.f32.mrf.mxu0
      %v5117 = vpop.f32.mrf.mxu0
      %v5118 = vadd.f32 0.0, %v5117
      %v5119 = vpop.f32.mrf.mxu0
      %5120 = vmatprep.mubr.bf16.mxu0 0
      %5121 = vmatmul.mubr.bf16.gmra.mxu0 %v5009
      %v5122 = vpop.f32.mrf.mxu0
      %v5123 = vadd.f32 0.0, %v5122
      %v5124 = vpop.f32.mrf.mxu0
      %v5125 = vpop.f32.mrf.mxu0
      %v5126 = vadd.f32 0.0, %v5125
      %v5127 = vpop.f32.mrf.mxu0
      %5128 = vmatprep.mubr.bf16.mxu0 0
      %5129 = vmatmul.mubr.bf16.gmra.mxu0 %v5010
      %v5130 = vpop.f32.mrf.mxu0
      %v5131 = vadd.f32 0.0, %v5130
      %v5132 = vpop.f32.mrf.mxu0
      %v5133 = vpop.f32.mrf.mxu0
      %v5134 = vadd.f32 0.0, %v5133
      %v5135 = vpop.f32.mrf.mxu0
      %5136 = vmatprep.mubr.bf16.mxu0 0
      %5137 = vmatmul.mubr.bf16.gmra.mxu0 %v5011
      %v5138 = vpop.f32.mrf.mxu0
      %v5139 = vadd.f32 0.0, %v5138
      %v5140 = vpop.f32.mrf.mxu0
      %v5141 = vpop.f32.mrf.mxu0
      %v5142 = vadd.f32 0.0, %v5141
      %v5143 = vpop.f32.mrf.mxu0
      %5144 = vmatprep.mubr.bf16.mxu0 0
      %5145 = vmatmul.mubr.bf16.gmra.mxu0 %v5012
      %v5146 = vpop.f32.mrf.mxu0
      %v5147 = vadd.f32 0.0, %v5146
      %v5148 = vpop.f32.mrf.mxu0
      %v5149 = vpop.f32.mrf.mxu0
      %v5150 = vadd.f32 0.0, %v5149
      %v5151 = vpop.f32.mrf.mxu0
      %5152 = vmatprep.mubr.bf16.mxu0 0
      %5153 = vmatmul.mubr.bf16.gmra.mxu0 %v5013
      %v5154 = vpop.f32.mrf.mxu0
      %v5155 = vadd.f32 0.0, %v5154
      %v5156 = vpop.f32.mrf.mxu0
      %v5157 = vpop.f32.mrf.mxu0
      %v5158 = vadd.f32 0.0, %v5157
      %v5159 = vpop.f32.mrf.mxu0
      %5160 = vmatprep.mubr.bf16.mxu0 0
      %5161 = vmatmul.mubr.bf16.gmra.mxu0 %v5014
      %v5162 = vpop.f32.mrf.mxu0
      %v5163 = vadd.f32 0.0, %v5162
      %v5164 = vpop.f32.mrf.mxu0
      %v5165 = vpop.f32.mrf.mxu0
      %v5166 = vadd.f32 0.0, %v5165
      %v5167 = vpop.f32.mrf.mxu0
      %5168 = vmatprep.mubr.bf16.mxu0 0
      %5169 = vmatmul.mubr.bf16.gmra.mxu0 %v5015
      %v5170 = vpop.f32.mrf.mxu0
      %v5171 = vadd.f32 0.0, %v5170
      %v5172 = vpop.f32.mrf.mxu0
      %v5173 = vpop.f32.mrf.mxu0
      %v5174 = vadd.f32 0.0, %v5173
      %v5175 = vpop.f32.mrf.mxu0
      %5176 = vmatprep.mubr.bf16.mxu0 0
      %5177 = vmatmul.mubr.bf16.gmra.mxu0 %v5016
      %v5178 = vpop.f32.mrf.mxu0
      %v5179 = vadd.f32 0.0, %v5178
      %v5180 = vpop.f32.mrf.mxu0
      %v5181 = vpop.f32.mrf.mxu0
      %v5182 = vadd.f32 0.0, %v5181
      %v5183 = vpop.f32.mrf.mxu0
      %5184 = vmatprep.mubr.bf16.mxu0 0
      %5185 = vmatmul.mubr.bf16.gmra.mxu0 %v5017
      %v5186 = vpop.f32.mrf.mxu0
      %v5187 = vadd.f32 0.0, %v5186
      %v5188 = vpop.f32.mrf.mxu0
      %v5189 = vpop.f32.mrf.mxu0
      %v5190 = vadd.f32 0.0, %v5189
      %v5191 = vpop.f32.mrf.mxu0
      %5192 = vmatprep.mubr.bf16.mxu0 0
      %5193 = vmatmul.mubr.bf16.gmra.mxu0 %v5018
      %v5194 = vpop.f32.mrf.mxu0
      %v5195 = vadd.f32 0.0, %v5194
      %v5196 = vpop.f32.mrf.mxu0
      %v5197 = vpop.f32.mrf.mxu0
      %v5198 = vadd.f32 0.0, %v5197
      %v5199 = vpop.f32.mrf.mxu0
      %5200 = vmatprep.mubr.bf16.mxu0 0
      %5201 = vmatmul.mubr.bf16.gmra.mxu0 %v5019
      %v5202 = vpop.f32.mrf.mxu0
      %v5203 = vadd.f32 0.0, %v5202
      %v5204 = vpop.f32.mrf.mxu0
      %v5205 = vpop.f32.mrf.mxu0
      %v5206 = vadd.f32 0.0, %v5205
      %v5207 = vpop.f32.mrf.mxu0
      %5208 = vdwg.mxu0
      %v5209 = vadd.f32 %v4895, %v5115
      %v5210 = vadd.f32 %v4896, %v5118
      %v5211 = vadd.f32 %v4897, %v5123
      %v5212 = vadd.f32 %v4898, %v5126
      %v5213 = vadd.f32 %v4899, %v5131
      %v5214 = vadd.f32 %v4900, %v5134
      %v5215 = vadd.f32 %v4901, %v5139
      %v5216 = vadd.f32 %v4902, %v5142
      %v5217 = vadd.f32 %v4903, %v5147
      %v5218 = vadd.f32 %v4904, %v5150
      %v5219 = vadd.f32 %v4905, %v5155
      %v5220 = vadd.f32 %v4906, %v5158
      %v5221 = vadd.f32 %v4907, %v5163
      %v5222 = vadd.f32 %v4908, %v5166
      %v5223 = vadd.f32 %v4909, %v5171
      %v5224 = vadd.f32 %v4910, %v5174
      %v5225 = vadd.f32 %v4911, %v5179
      %v5226 = vadd.f32 %v4912, %v5182
      %v5227 = vadd.f32 %v4913, %v5187
      %v5228 = vadd.f32 %v4914, %v5190
      %v5229 = vadd.f32 %v4915, %v5195
      %v5230 = vadd.f32 %v4916, %v5198
      %v5231 = vadd.f32 %v4917, %v5203
      %v5232 = vadd.f32 %v4918, %v5206
      %v5233 = vld [vmem:[#allocation2 + $0xc] sm:$0xf]
      %v5234 = vld [vmem:[#allocation2 + $0x10] sm:$0xf]
      %v5235 = vld [vmem:[#allocation2 + $0x14] sm:$0xf]
      %v5236 = vld [vmem:[#allocation2 + $0x18] sm:$0xf]
      %v5237 = vld [vmem:[#allocation2 + $0x1c] sm:$0xf]
      %v5238 = vld [vmem:[#allocation2 + $0x20] sm:$0xf]
      %v5239 = vld [vmem:[#allocation2 + $0x24] sm:$0xf]
      %v5240 = vld [vmem:[#allocation2 + $0x28] sm:$0xf]
      %v5241 = vld [vmem:[#allocation2 + $0x2c] sm:$0xf]
      %v5242 = vld [vmem:[#allocation2 + $0x30] sm:$0xf]
      %v5243 = vld [vmem:[#allocation2 + $0x34] sm:$0xf]
      %v5244 = vld [vmem:[#allocation2 + $0x38] sm:$0xf]
      %v5245 = vld [vmem:[#allocation2 + $0x3c] sm:$0xf]
      %v5246 = vld [vmem:[#allocation2 + $0x40] sm:$0xf]
      %v5247 = vld [vmem:[#allocation2 + $0x44] sm:$0xf]
      %v5248 = vld [vmem:[#allocation2 + $0x48] sm:$0xf]
      %v5249 = vld [vmem:[#allocation2 + $0x4c] sm:$0xf]
      %v5250 = vld [vmem:[#allocation2 + $0x50] sm:$0xf]
      %v5251 = vld [vmem:[#allocation2 + $0x54] sm:$0xf]
      %v5252 = vld [vmem:[#allocation2 + $0x58] sm:$0xf]
      %v5253 = vld [vmem:[#allocation2 + $0x5c] sm:$0xf]
      %v5254 = vld [vmem:[#allocation2 + $0x60] sm:$0xf]
      %v5255 = vld [vmem:[#allocation2 + $0x64] sm:$0xf]
      %v5256 = vld [vmem:[#allocation2 + $0x68] sm:$0xf]
      %v5257 = vld [vmem:[#allocation2 + $0x6c] sm:$0x1]
      %s5258 = scalar_lea.vmem %s4, 256
      %v5259 = vld [vmem:[%s5258] sm:$0xf]
      %v5260 = vld [vmem:[%s5258 + $0x4] sm:$0xf]
      %v5261 = vld [vmem:[%s5258 + $0x8] sm:$0xf]
      %v5262 = vld [vmem:[%s5258 + $0xc] sm:$0xf]
      %v5263 = vld [vmem:[%s5258 + $0x10] sm:$0xf]
      %v5264 = vld [vmem:[%s5258 + $0x14] sm:$0xf]
      %v5265 = vld [vmem:[%s5258 + $0x18] sm:$0xf]
      %v5266 = vld [vmem:[%s5258 + $0x1c] sm:$0xf]
      %v5267 = vld [vmem:[%s5258 + $0x20] sm:$0xf]
      %v5268 = vld [vmem:[%s5258 + $0x24] sm:$0xf]
      %v5269 = vld [vmem:[%s5258 + $0x28] sm:$0xf]
      %v5270 = vld [vmem:[%s5258 + $0x2c] sm:$0xf]
      %v5271 = vld [vmem:[%s5258 + $0x30] sm:$0xf]
      %v5272 = vld [vmem:[%s5258 + $0x34] sm:$0xf]
      %v5273 = vld [vmem:[%s5258 + $0x38] sm:$0xf]
      %v5274 = vld [vmem:[%s5258 + $0x3c] sm:$0xf]
      %v5300 = vunpack.c.l.b16 %v5233
      %v5301 = vunpack.c.l.b16 %v5234
      %v5302 = vunpack.c.l.b16 %v5235
      %v5303 = vunpack.c.l.b16 %v5236
      %v5304 = vunpack.c.l.b16 %v5237
      %v5305 = vunpack.c.l.b16 %v5238
      %v5306 = vunpack.c.l.b16 %v5239
      %v5307 = vunpack.c.l.b16 %v5240
      %v5308 = vunpack.c.l.b16 %v5241
      %v5309 = vunpack.c.l.b16 %v5242
      %v5310 = vunpack.c.l.b16 %v5243
      %v5311 = vunpack.c.l.b16 %v5244
      %v5312 = vunpack.c.l.b16 %v5245
      %v5313 = vunpack.c.l.b16 %v5246
      %v5314 = vunpack.c.l.b16 %v5247
      %v5315 = vunpack.c.l.b16 %v5248
      %v5316 = vunpack.c.l.b16 %v5249
      %v5317 = vunpack.c.l.b16 %v5250
      %v5318 = vunpack.c.l.b16 %v5251
      %v5319 = vunpack.c.l.b16 %v5252
      %v5320 = vunpack.c.l.b16 %v5253
      %v5321 = vunpack.c.l.b16 %v5254
      %v5322 = vunpack.c.l.b16 %v5255
      %v5323 = vunpack.c.l.b16 %v5256
      %v5324 = vunpack.c.l.b16 %v5257
      %v5325 = vpack.c.b16 %v5301, %v5300
      %v5326 = vpack.c.b16 %v5303, %v5302
      %v5327 = vpack.c.b16 %v5305, %v5304
      %v5328 = vpack.c.b16 %v5307, %v5306
      %v5329 = vpack.c.b16 %v5309, %v5308
      %v5330 = vpack.c.b16 %v5311, %v5310
      %v5331 = vpack.c.b16 %v5313, %v5312
      %v5332 = vpack.c.b16 %v5315, %v5314
      %v5333 = vpack.c.b16 %v5317, %v5316
      %v5334 = vpack.c.b16 %v5319, %v5318
      %v5335 = vpack.c.b16 %v5321, %v5320
      %v5336 = vpack.c.b16 %v5323, %v5322
      %v5337 = vpack.c.b16 %v5324, %v5324
      %v5339 = vshrl.u32 %v5325, 16
      %v5341 = vshll.u32 %v5325, 16
      %v5343 = vrot.slane %v5341, 1
      %v5344 = vor.u32 %v5339, %v5343
      %v5346 = vshll.u32 %v5326, 16
      %v5348 = vrot.slane %v5346, 1
      %v5349 = vsel %vm451, %v5344, %v5348
      %v5350 = vshrl.u32 %v5326, 16
      %v5352 = vor.u32 %v5350, %v5348
      %v5354 = vshll.u32 %v5327, 16
      %v5356 = vrot.slane %v5354, 1
      %v5357 = vsel %vm451, %v5352, %v5356
      %v5358 = vshrl.u32 %v5327, 16
      %v5360 = vor.u32 %v5358, %v5356
      %v5362 = vshll.u32 %v5328, 16
      %v5364 = vrot.slane %v5362, 1
      %v5365 = vsel %vm451, %v5360, %v5364
      %v5366 = vshrl.u32 %v5328, 16
      %v5368 = vor.u32 %v5366, %v5364
      %v5370 = vshll.u32 %v5329, 16
      %v5372 = vrot.slane %v5370, 1
      %v5373 = vsel %vm451, %v5368, %v5372
      %v5374 = vshrl.u32 %v5329, 16
      %v5376 = vor.u32 %v5374, %v5372
      %v5378 = vshll.u32 %v5330, 16
      %v5380 = vrot.slane %v5378, 1
      %v5381 = vsel %vm451, %v5376, %v5380
      %v5382 = vshrl.u32 %v5330, 16
      %v5384 = vor.u32 %v5382, %v5380
      %v5386 = vshll.u32 %v5331, 16
      %v5388 = vrot.slane %v5386, 1
      %v5389 = vsel %vm451, %v5384, %v5388
      %v5390 = vshrl.u32 %v5331, 16
      %v5392 = vor.u32 %v5390, %v5388
      %v5394 = vshll.u32 %v5332, 16
      %v5396 = vrot.slane %v5394, 1
      %v5397 = vsel %vm451, %v5392, %v5396
      %v5398 = vshrl.u32 %v5332, 16
      %v5400 = vor.u32 %v5398, %v5396
      %v5402 = vshll.u32 %v5333, 16
      %v5404 = vrot.slane %v5402, 1
      %v5405 = vsel %vm451, %v5400, %v5404
      %v5406 = vshrl.u32 %v5333, 16
      %v5408 = vor.u32 %v5406, %v5404
      %v5410 = vshll.u32 %v5334, 16
      %v5412 = vrot.slane %v5410, 1
      %v5413 = vsel %vm451, %v5408, %v5412
      %v5414 = vshrl.u32 %v5334, 16
      %v5416 = vor.u32 %v5414, %v5412
      %v5418 = vshll.u32 %v5335, 16
      %v5420 = vrot.slane %v5418, 1
      %v5421 = vsel %vm451, %v5416, %v5420
      %v5422 = vshrl.u32 %v5335, 16
      %v5424 = vor.u32 %v5422, %v5420
      %v5426 = vshll.u32 %v5336, 16
      %v5428 = vrot.slane %v5426, 1
      %v5429 = vsel %vm451, %v5424, %v5428
      %v5430 = vshrl.u32 %v5336, 16
      %v5432 = vor.u32 %v5430, %v5428
      %v5434 = vshll.u32 %v5337, 16
      %v5436 = vrot.slane %v5434, 1
      %v5437 = vsel %vm451, %v5432, %v5436
      %v5466 = vunpack.c.l.b16 %v5259
      %v5467 = vunpack.c.l.b16 %v5260
      %v5468 = vunpack.c.l.b16 %v5261
      %v5469 = vunpack.c.l.b16 %v5262
      %v5470 = vunpack.c.l.b16 %v5263
      %v5471 = vunpack.c.l.b16 %v5264
      %v5472 = vunpack.c.l.b16 %v5265
      %v5473 = vunpack.c.l.b16 %v5266
      %v5474 = vunpack.c.l.b16 %v5267
      %v5475 = vunpack.c.l.b16 %v5268
      %v5476 = vunpack.c.l.b16 %v5269
      %v5477 = vunpack.c.l.b16 %v5270
      %v5478 = vunpack.c.l.b16 %v5271
      %v5479 = vunpack.c.l.b16 %v5272
      %v5480 = vunpack.c.l.b16 %v5273
      %v5481 = vunpack.c.l.b16 %v5274
      %v5482 = vpack.c.b16 %v5467, %v5466
      %v5483 = vpack.c.b16 %v5469, %v5468
      %v5484 = vpack.c.b16 %v5471, %v5470
      %v5485 = vpack.c.b16 %v5473, %v5472
      %v5486 = vpack.c.b16 %v5475, %v5474
      %v5487 = vpack.c.b16 %v5477, %v5476
      %v5488 = vpack.c.b16 %v5479, %v5478
      %v5489 = vpack.c.b16 %v5481, %v5480
      %5498 = vmatprep.subr.bf16.mxu0 0
      %5499 = vmatpush1.bf16.msra.mxu0 %v5489
      %5500 = vmatprep.subr.bf16.mxu0 0
      %5501 = vmatpush1.bf16.msra.mxu0 %v5488
      %5502 = vmatprep.subr.bf16.mxu0 0
      %5503 = vmatpush1.bf16.msra.mxu0 %v5487
      %5504 = vmatprep.subr.bf16.mxu0 0
      %5505 = vmatpush1.bf16.msra.mxu0 %v5486
      %5506 = vmatprep.subr.bf16.mxu0 0
      %5507 = vmatpush1.bf16.msra.mxu0 %v5485
      %5508 = vmatprep.subr.bf16.mxu0 0
      %5509 = vmatpush1.bf16.msra.mxu0 %v5484
      %5510 = vmatprep.subr.bf16.mxu0 0
      %5511 = vmatpush1.bf16.msra.mxu0 %v5483
      %5512 = vmatprep.subr.bf16.mxu0 0
      %5513 = vmatpush1.bf16.msra.mxu0 %v5482
      %5514 = vmatprep.subr.bf16.mxu0 0
      %5515 = vmatpush2.bf16.msra.mxu0 0
      %5516 = vmatprep.subr.bf16.mxu0 0
      %5517 = vmatpush2.bf16.msra.mxu0 0
      %5518 = vmatprep.subr.bf16.mxu0 0
      %5519 = vmatpush2.bf16.msra.mxu0 0
      %5520 = vmatprep.subr.bf16.mxu0 0
      %5521 = vmatpush2.bf16.msra.mxu0 0
      %5522 = vmatprep.subr.bf16.mxu0 0
      %5523 = vmatpush2.bf16.msra.mxu0 0
      %5524 = vmatprep.subr.bf16.mxu0 0
      %5525 = vmatpush2.bf16.msra.mxu0 0
      %5526 = vmatprep.subr.bf16.mxu0 0
      %5527 = vmatpush2.bf16.msra.mxu0 0
      %5528 = vmatprep.subr.bf16.mxu0 0
      %5529 = vmatpush2.bf16.msra.mxu0 0
      %5530 = vmatprep.mubr.bf16.mxu0 0
      %5531 = vmatmul.mubr.bf16.gmra.mxu0 %v5349
      %v5532 = vpop.f32.mrf.mxu0
      %v5533 = vadd.f32 0.0, %v5532
      %v5534 = vpop.f32.mrf.mxu0
      %v5535 = vpop.f32.mrf.mxu0
      %v5536 = vadd.f32 0.0, %v5535
      %v5537 = vpop.f32.mrf.mxu0
      %5538 = vmatprep.mubr.bf16.mxu0 0
      %5539 = vmatmul.mubr.bf16.gmra.mxu0 %v5357
      %v5540 = vpop.f32.mrf.mxu0
      %v5541 = vadd.f32 0.0, %v5540
      %v5542 = vpop.f32.mrf.mxu0
      %v5543 = vpop.f32.mrf.mxu0
      %v5544 = vadd.f32 0.0, %v5543
      %v5545 = vpop.f32.mrf.mxu0
      %5546 = vmatprep.mubr.bf16.mxu0 0
      %5547 = vmatmul.mubr.bf16.gmra.mxu0 %v5365
      %v5548 = vpop.f32.mrf.mxu0
      %v5549 = vadd.f32 0.0, %v5548
      %v5550 = vpop.f32.mrf.mxu0
      %v5551 = vpop.f32.mrf.mxu0
      %v5552 = vadd.f32 0.0, %v5551
      %v5553 = vpop.f32.mrf.mxu0
      %5554 = vmatprep.mubr.bf16.mxu0 0
      %5555 = vmatmul.mubr.bf16.gmra.mxu0 %v5373
      %v5556 = vpop.f32.mrf.mxu0
      %v5557 = vadd.f32 0.0, %v5556
      %v5558 = vpop.f32.mrf.mxu0
      %v5559 = vpop.f32.mrf.mxu0
      %v5560 = vadd.f32 0.0, %v5559
      %v5561 = vpop.f32.mrf.mxu0
      %5562 = vmatprep.mubr.bf16.mxu0 0
      %5563 = vmatmul.mubr.bf16.gmra.mxu0 %v5381
      %v5564 = vpop.f32.mrf.mxu0
      %v5565 = vadd.f32 0.0, %v5564
      %v5566 = vpop.f32.mrf.mxu0
      %v5567 = vpop.f32.mrf.mxu0
      %v5568 = vadd.f32 0.0, %v5567
      %v5569 = vpop.f32.mrf.mxu0
      %5570 = vmatprep.mubr.bf16.mxu0 0
      %5571 = vmatmul.mubr.bf16.gmra.mxu0 %v5389
      %v5572 = vpop.f32.mrf.mxu0
      %v5573 = vadd.f32 0.0, %v5572
      %v5574 = vpop.f32.mrf.mxu0
      %v5575 = vpop.f32.mrf.mxu0
      %v5576 = vadd.f32 0.0, %v5575
      %v5577 = vpop.f32.mrf.mxu0
      %5578 = vmatprep.mubr.bf16.mxu0 0
      %5579 = vmatmul.mubr.bf16.gmra.mxu0 %v5397
      %v5580 = vpop.f32.mrf.mxu0
      %v5581 = vadd.f32 0.0, %v5580
      %v5582 = vpop.f32.mrf.mxu0
      %v5583 = vpop.f32.mrf.mxu0
      %v5584 = vadd.f32 0.0, %v5583
      %v5585 = vpop.f32.mrf.mxu0
      %5586 = vmatprep.mubr.bf16.mxu0 0
      %5587 = vmatmul.mubr.bf16.gmra.mxu0 %v5405
      %v5588 = vpop.f32.mrf.mxu0
      %v5589 = vadd.f32 0.0, %v5588
      %v5590 = vpop.f32.mrf.mxu0
      %v5591 = vpop.f32.mrf.mxu0
      %v5592 = vadd.f32 0.0, %v5591
      %v5593 = vpop.f32.mrf.mxu0
      %5594 = vmatprep.mubr.bf16.mxu0 0
      %5595 = vmatmul.mubr.bf16.gmra.mxu0 %v5413
      %v5596 = vpop.f32.mrf.mxu0
      %v5597 = vadd.f32 0.0, %v5596
      %v5598 = vpop.f32.mrf.mxu0
      %v5599 = vpop.f32.mrf.mxu0
      %v5600 = vadd.f32 0.0, %v5599
      %v5601 = vpop.f32.mrf.mxu0
      %5602 = vmatprep.mubr.bf16.mxu0 0
      %5603 = vmatmul.mubr.bf16.gmra.mxu0 %v5421
      %v5604 = vpop.f32.mrf.mxu0
      %v5605 = vadd.f32 0.0, %v5604
      %v5606 = vpop.f32.mrf.mxu0
      %v5607 = vpop.f32.mrf.mxu0
      %v5608 = vadd.f32 0.0, %v5607
      %v5609 = vpop.f32.mrf.mxu0
      %5610 = vmatprep.mubr.bf16.mxu0 0
      %5611 = vmatmul.mubr.bf16.gmra.mxu0 %v5429
      %v5612 = vpop.f32.mrf.mxu0
      %v5613 = vadd.f32 0.0, %v5612
      %v5614 = vpop.f32.mrf.mxu0
      %v5615 = vpop.f32.mrf.mxu0
      %v5616 = vadd.f32 0.0, %v5615
      %v5617 = vpop.f32.mrf.mxu0
      %5618 = vmatprep.mubr.bf16.mxu0 0
      %5619 = vmatmul.mubr.bf16.gmra.mxu0 %v5437
      %v5620 = vpop.f32.mrf.mxu0
      %v5621 = vadd.f32 0.0, %v5620
      %v5622 = vpop.f32.mrf.mxu0
      %v5623 = vpop.f32.mrf.mxu0
      %v5624 = vadd.f32 0.0, %v5623
      %v5625 = vpop.f32.mrf.mxu0
      %5626 = vdwg.mxu0
      %v5627 = vadd.f32 %v5209, %v5533
      %v5628 = vadd.f32 %v5210, %v5536
      %v5629 = vadd.f32 %v5211, %v5541
      %v5630 = vadd.f32 %v5212, %v5544
      %v5631 = vadd.f32 %v5213, %v5549
      %v5632 = vadd.f32 %v5214, %v5552
      %v5633 = vadd.f32 %v5215, %v5557
      %v5634 = vadd.f32 %v5216, %v5560
      %v5635 = vadd.f32 %v5217, %v5565
      %v5636 = vadd.f32 %v5218, %v5568
      %v5637 = vadd.f32 %v5219, %v5573
      %v5638 = vadd.f32 %v5220, %v5576
      %v5639 = vadd.f32 %v5221, %v5581
      %v5640 = vadd.f32 %v5222, %v5584
      %v5641 = vadd.f32 %v5223, %v5589
      %v5642 = vadd.f32 %v5224, %v5592
      %v5643 = vadd.f32 %v5225, %v5597
      %v5644 = vadd.f32 %v5226, %v5600
      %v5645 = vadd.f32 %v5227, %v5605
      %v5646 = vadd.f32 %v5228, %v5608
      %v5647 = vadd.f32 %v5229, %v5613
      %v5648 = vadd.f32 %v5230, %v5616
      %v5649 = vadd.f32 %v5231, %v5621
      %v5650 = vadd.f32 %v5232, %v5624
      %v5651 = vld [vmem:[#allocation2 + $0xc] sm:$0xe]
      %s5652 = scalar_lea.vmem %s4, 320
      %v5653 = vld [vmem:[%s5652] sm:$0xf]
      %v5654 = vld [vmem:[%s5652 + $0x4] sm:$0xf]
      %v5655 = vld [vmem:[%s5652 + $0x8] sm:$0xf]
      %v5656 = vld [vmem:[%s5652 + $0xc] sm:$0xf]
      %v5657 = vld [vmem:[%s5652 + $0x10] sm:$0xf]
      %v5658 = vld [vmem:[%s5652 + $0x14] sm:$0xf]
      %v5659 = vld [vmem:[%s5652 + $0x18] sm:$0xf]
      %v5660 = vld [vmem:[%s5652 + $0x1c] sm:$0xf]
      %v5661 = vld [vmem:[%s5652 + $0x20] sm:$0xf]
      %v5662 = vld [vmem:[%s5652 + $0x24] sm:$0xf]
      %v5663 = vld [vmem:[%s5652 + $0x28] sm:$0xf]
      %v5664 = vld [vmem:[%s5652 + $0x2c] sm:$0xf]
      %v5665 = vld [vmem:[%s5652 + $0x30] sm:$0xf]
      %v5666 = vld [vmem:[%s5652 + $0x34] sm:$0xf]
      %v5667 = vld [vmem:[%s5652 + $0x38] sm:$0xf]
      %v5668 = vld [vmem:[%s5652 + $0x3c] sm:$0xf]
      %v5670 = vunpack.c.l.b16 %v5651
      %v5671 = vpack.c.b16 %v5301, %v5670
      %v5672 = vrot.slane %v5671, 1
      %v5673 = vrot.slane %v5326, 1
      %v5674 = vsel %vm1029, %v5672, %v5673
      %v5675 = vrot.slane %v5327, 1
      %v5676 = vsel %vm1029, %v5673, %v5675
      %v5677 = vrot.slane %v5328, 1
      %v5678 = vsel %vm1029, %v5675, %v5677
      %v5679 = vrot.slane %v5329, 1
      %v5680 = vsel %vm1029, %v5677, %v5679
      %v5681 = vrot.slane %v5330, 1
      %v5682 = vsel %vm1029, %v5679, %v5681
      %v5683 = vrot.slane %v5331, 1
      %v5684 = vsel %vm1029, %v5681, %v5683
      %v5685 = vrot.slane %v5332, 1
      %v5686 = vsel %vm1029, %v5683, %v5685
      %v5687 = vrot.slane %v5333, 1
      %v5688 = vsel %vm1029, %v5685, %v5687
      %v5689 = vrot.slane %v5334, 1
      %v5690 = vsel %vm1029, %v5687, %v5689
      %v5691 = vrot.slane %v5335, 1
      %v5692 = vsel %vm1029, %v5689, %v5691
      %v5693 = vrot.slane %v5336, 1
      %v5694 = vsel %vm1029, %v5691, %v5693
      %v5695 = vrot.slane %v5337, 1
      %v5696 = vsel %vm1029, %v5693, %v5695
      %v5725 = vunpack.c.l.b16 %v5653
      %v5726 = vunpack.c.l.b16 %v5654
      %v5727 = vunpack.c.l.b16 %v5655
      %v5728 = vunpack.c.l.b16 %v5656
      %v5729 = vunpack.c.l.b16 %v5657
      %v5730 = vunpack.c.l.b16 %v5658
      %v5731 = vunpack.c.l.b16 %v5659
      %v5732 = vunpack.c.l.b16 %v5660
      %v5733 = vunpack.c.l.b16 %v5661
      %v5734 = vunpack.c.l.b16 %v5662
      %v5735 = vunpack.c.l.b16 %v5663
      %v5736 = vunpack.c.l.b16 %v5664
      %v5737 = vunpack.c.l.b16 %v5665
      %v5738 = vunpack.c.l.b16 %v5666
      %v5739 = vunpack.c.l.b16 %v5667
      %v5740 = vunpack.c.l.b16 %v5668
      %v5741 = vpack.c.b16 %v5726, %v5725
      %v5742 = vpack.c.b16 %v5728, %v5727
      %v5743 = vpack.c.b16 %v5730, %v5729
      %v5744 = vpack.c.b16 %v5732, %v5731
      %v5745 = vpack.c.b16 %v5734, %v5733
      %v5746 = vpack.c.b16 %v5736, %v5735
      %v5747 = vpack.c.b16 %v5738, %v5737
      %v5748 = vpack.c.b16 %v5740, %v5739
      %5757 = vmatprep.subr.bf16.mxu0 0
      %5758 = vmatpush1.bf16.msra.mxu0 %v5748
      %5759 = vmatprep.subr.bf16.mxu0 0
      %5760 = vmatpush1.bf16.msra.mxu0 %v5747
      %5761 = vmatprep.subr.bf16.mxu0 0
      %5762 = vmatpush1.bf16.msra.mxu0 %v5746
      %5763 = vmatprep.subr.bf16.mxu0 0
      %5764 = vmatpush1.bf16.msra.mxu0 %v5745
      %5765 = vmatprep.subr.bf16.mxu0 0
      %5766 = vmatpush1.bf16.msra.mxu0 %v5744
      %5767 = vmatprep.subr.bf16.mxu0 0
      %5768 = vmatpush1.bf16.msra.mxu0 %v5743
      %5769 = vmatprep.subr.bf16.mxu0 0
      %5770 = vmatpush1.bf16.msra.mxu0 %v5742
      %5771 = vmatprep.subr.bf16.mxu0 0
      %5772 = vmatpush1.bf16.msra.mxu0 %v5741
      %5773 = vmatprep.subr.bf16.mxu0 0
      %5774 = vmatpush2.bf16.msra.mxu0 0
      %5775 = vmatprep.subr.bf16.mxu0 0
      %5776 = vmatpush2.bf16.msra.mxu0 0
      %5777 = vmatprep.subr.bf16.mxu0 0
      %5778 = vmatpush2.bf16.msra.mxu0 0
      %5779 = vmatprep.subr.bf16.mxu0 0
      %5780 = vmatpush2.bf16.msra.mxu0 0
      %5781 = vmatprep.subr.bf16.mxu0 0
      %5782 = vmatpush2.bf16.msra.mxu0 0
      %5783 = vmatprep.subr.bf16.mxu0 0
      %5784 = vmatpush2.bf16.msra.mxu0 0
      %5785 = vmatprep.subr.bf16.mxu0 0
      %5786 = vmatpush2.bf16.msra.mxu0 0
      %5787 = vmatprep.subr.bf16.mxu0 0
      %5788 = vmatpush2.bf16.msra.mxu0 0
      %5789 = vmatprep.mubr.bf16.mxu0 0
      %5790 = vmatmul.mubr.bf16.gmra.mxu0 %v5674
      %v5791 = vpop.f32.mrf.mxu0
      %v5792 = vadd.f32 0.0, %v5791
      %v5793 = vpop.f32.mrf.mxu0
      %v5794 = vpop.f32.mrf.mxu0
      %v5795 = vadd.f32 0.0, %v5794
      %v5796 = vpop.f32.mrf.mxu0
      %5797 = vmatprep.mubr.bf16.mxu0 0
      %5798 = vmatmul.mubr.bf16.gmra.mxu0 %v5676
      %v5799 = vpop.f32.mrf.mxu0
      %v5800 = vadd.f32 0.0, %v5799
      %v5801 = vpop.f32.mrf.mxu0
      %v5802 = vpop.f32.mrf.mxu0
      %v5803 = vadd.f32 0.0, %v5802
      %v5804 = vpop.f32.mrf.mxu0
      %5805 = vmatprep.mubr.bf16.mxu0 0
      %5806 = vmatmul.mubr.bf16.gmra.mxu0 %v5678
      %v5807 = vpop.f32.mrf.mxu0
      %v5808 = vadd.f32 0.0, %v5807
      %v5809 = vpop.f32.mrf.mxu0
      %v5810 = vpop.f32.mrf.mxu0
      %v5811 = vadd.f32 0.0, %v5810
      %v5812 = vpop.f32.mrf.mxu0
      %5813 = vmatprep.mubr.bf16.mxu0 0
      %5814 = vmatmul.mubr.bf16.gmra.mxu0 %v5680
      %v5815 = vpop.f32.mrf.mxu0
      %v5816 = vadd.f32 0.0, %v5815
      %v5817 = vpop.f32.mrf.mxu0
      %v5818 = vpop.f32.mrf.mxu0
      %v5819 = vadd.f32 0.0, %v5818
      %v5820 = vpop.f32.mrf.mxu0
      %5821 = vmatprep.mubr.bf16.mxu0 0
      %5822 = vmatmul.mubr.bf16.gmra.mxu0 %v5682
      %v5823 = vpop.f32.mrf.mxu0
      %v5824 = vadd.f32 0.0, %v5823
      %v5825 = vpop.f32.mrf.mxu0
      %v5826 = vpop.f32.mrf.mxu0
      %v5827 = vadd.f32 0.0, %v5826
      %v5828 = vpop.f32.mrf.mxu0
      %5829 = vmatprep.mubr.bf16.mxu0 0
      %5830 = vmatmul.mubr.bf16.gmra.mxu0 %v5684
      %v5831 = vpop.f32.mrf.mxu0
      %v5832 = vadd.f32 0.0, %v5831
      %v5833 = vpop.f32.mrf.mxu0
      %v5834 = vpop.f32.mrf.mxu0
      %v5835 = vadd.f32 0.0, %v5834
      %v5836 = vpop.f32.mrf.mxu0
      %5837 = vmatprep.mubr.bf16.mxu0 0
      %5838 = vmatmul.mubr.bf16.gmra.mxu0 %v5686
      %v5839 = vpop.f32.mrf.mxu0
      %v5840 = vadd.f32 0.0, %v5839
      %v5841 = vpop.f32.mrf.mxu0
      %v5842 = vpop.f32.mrf.mxu0
      %v5843 = vadd.f32 0.0, %v5842
      %v5844 = vpop.f32.mrf.mxu0
      %5845 = vmatprep.mubr.bf16.mxu0 0
      %5846 = vmatmul.mubr.bf16.gmra.mxu0 %v5688
      %v5847 = vpop.f32.mrf.mxu0
      %v5848 = vadd.f32 0.0, %v5847
      %v5849 = vpop.f32.mrf.mxu0
      %v5850 = vpop.f32.mrf.mxu0
      %v5851 = vadd.f32 0.0, %v5850
      %v5852 = vpop.f32.mrf.mxu0
      %5853 = vmatprep.mubr.bf16.mxu0 0
      %5854 = vmatmul.mubr.bf16.gmra.mxu0 %v5690
      %v5855 = vpop.f32.mrf.mxu0
      %v5856 = vadd.f32 0.0, %v5855
      %v5857 = vpop.f32.mrf.mxu0
      %v5858 = vpop.f32.mrf.mxu0
      %v5859 = vadd.f32 0.0, %v5858
      %v5860 = vpop.f32.mrf.mxu0
      %5861 = vmatprep.mubr.bf16.mxu0 0
      %5862 = vmatmul.mubr.bf16.gmra.mxu0 %v5692
      %v5863 = vpop.f32.mrf.mxu0
      %v5864 = vadd.f32 0.0, %v5863
      %v5865 = vpop.f32.mrf.mxu0
      %v5866 = vpop.f32.mrf.mxu0
      %v5867 = vadd.f32 0.0, %v5866
      %v5868 = vpop.f32.mrf.mxu0
      %5869 = vmatprep.mubr.bf16.mxu0 0
      %5870 = vmatmul.mubr.bf16.gmra.mxu0 %v5694
      %v5871 = vpop.f32.mrf.mxu0
      %v5872 = vadd.f32 0.0, %v5871
      %v5873 = vpop.f32.mrf.mxu0
      %v5874 = vpop.f32.mrf.mxu0
      %v5875 = vadd.f32 0.0, %v5874
      %v5876 = vpop.f32.mrf.mxu0
      %5877 = vmatprep.mubr.bf16.mxu0 0
      %5878 = vmatmul.mubr.bf16.gmra.mxu0 %v5696
      %v5879 = vpop.f32.mrf.mxu0
      %v5880 = vadd.f32 0.0, %v5879
      %v5881 = vpop.f32.mrf.mxu0
      %v5882 = vpop.f32.mrf.mxu0
      %v5883 = vadd.f32 0.0, %v5882
      %v5884 = vpop.f32.mrf.mxu0
      %5885 = vdwg.mxu0
      %v5886 = vadd.f32 %v5627, %v5792
      %v5887 = vadd.f32 %v5628, %v5795
      %v5888 = vadd.f32 %v5629, %v5800
      %v5889 = vadd.f32 %v5630, %v5803
      %v5890 = vadd.f32 %v5631, %v5808
      %v5891 = vadd.f32 %v5632, %v5811
      %v5892 = vadd.f32 %v5633, %v5816
      %v5893 = vadd.f32 %v5634, %v5819
      %v5894 = vadd.f32 %v5635, %v5824
      %v5895 = vadd.f32 %v5636, %v5827
      %v5896 = vadd.f32 %v5637, %v5832
      %v5897 = vadd.f32 %v5638, %v5835
      %v5898 = vadd.f32 %v5639, %v5840
      %v5899 = vadd.f32 %v5640, %v5843
      %v5900 = vadd.f32 %v5641, %v5848
      %v5901 = vadd.f32 %v5642, %v5851
      %v5902 = vadd.f32 %v5643, %v5856
      %v5903 = vadd.f32 %v5644, %v5859
      %v5904 = vadd.f32 %v5645, %v5864
      %v5905 = vadd.f32 %v5646, %v5867
      %v5906 = vadd.f32 %v5647, %v5872
      %v5907 = vadd.f32 %v5648, %v5875
      %v5908 = vadd.f32 %v5649, %v5880
      %v5909 = vadd.f32 %v5650, %v5883
      %v5910 = vld [vmem:[#allocation2 + $0x18] sm:$0xf]
      %v5911 = vld [vmem:[#allocation2 + $0x1c] sm:$0xf]
      %v5912 = vld [vmem:[#allocation2 + $0x20] sm:$0xf]
      %v5913 = vld [vmem:[#allocation2 + $0x24] sm:$0xf]
      %v5914 = vld [vmem:[#allocation2 + $0x28] sm:$0xf]
      %v5915 = vld [vmem:[#allocation2 + $0x2c] sm:$0xf]
      %v5916 = vld [vmem:[#allocation2 + $0x30] sm:$0xf]
      %v5917 = vld [vmem:[#allocation2 + $0x34] sm:$0xf]
      %v5918 = vld [vmem:[#allocation2 + $0x38] sm:$0xf]
      %v5919 = vld [vmem:[#allocation2 + $0x3c] sm:$0xf]
      %v5920 = vld [vmem:[#allocation2 + $0x40] sm:$0xf]
      %v5921 = vld [vmem:[#allocation2 + $0x44] sm:$0xf]
      %v5922 = vld [vmem:[#allocation2 + $0x48] sm:$0xf]
      %v5923 = vld [vmem:[#allocation2 + $0x4c] sm:$0xf]
      %v5924 = vld [vmem:[#allocation2 + $0x50] sm:$0xf]
      %v5925 = vld [vmem:[#allocation2 + $0x54] sm:$0xf]
      %v5926 = vld [vmem:[#allocation2 + $0x58] sm:$0xf]
      %v5927 = vld [vmem:[#allocation2 + $0x5c] sm:$0xf]
      %v5928 = vld [vmem:[#allocation2 + $0x60] sm:$0xf]
      %v5929 = vld [vmem:[#allocation2 + $0x64] sm:$0xf]
      %v5930 = vld [vmem:[#allocation2 + $0x68] sm:$0xf]
      %v5931 = vld [vmem:[#allocation2 + $0x6c] sm:$0xf]
      %v5932 = vld [vmem:[#allocation2 + $0x70] sm:$0xf]
      %v5933 = vld [vmem:[#allocation2 + $0x74] sm:$0xf]
      %s5934 = scalar_lea.vmem %s4, 384
      %v5935 = vld [vmem:[%s5934] sm:$0xf]
      %v5936 = vld [vmem:[%s5934 + $0x4] sm:$0xf]
      %v5937 = vld [vmem:[%s5934 + $0x8] sm:$0xf]
      %v5938 = vld [vmem:[%s5934 + $0xc] sm:$0xf]
      %v5939 = vld [vmem:[%s5934 + $0x10] sm:$0xf]
      %v5940 = vld [vmem:[%s5934 + $0x14] sm:$0xf]
      %v5941 = vld [vmem:[%s5934 + $0x18] sm:$0xf]
      %v5942 = vld [vmem:[%s5934 + $0x1c] sm:$0xf]
      %v5943 = vld [vmem:[%s5934 + $0x20] sm:$0xf]
      %v5944 = vld [vmem:[%s5934 + $0x24] sm:$0xf]
      %v5945 = vld [vmem:[%s5934 + $0x28] sm:$0xf]
      %v5946 = vld [vmem:[%s5934 + $0x2c] sm:$0xf]
      %v5947 = vld [vmem:[%s5934 + $0x30] sm:$0xf]
      %v5948 = vld [vmem:[%s5934 + $0x34] sm:$0xf]
      %v5949 = vld [vmem:[%s5934 + $0x38] sm:$0xf]
      %v5950 = vld [vmem:[%s5934 + $0x3c] sm:$0xf]
      %v5975 = vunpack.c.l.b16 %v5910
      %v5976 = vunpack.c.l.b16 %v5911
      %v5977 = vunpack.c.l.b16 %v5912
      %v5978 = vunpack.c.l.b16 %v5913
      %v5979 = vunpack.c.l.b16 %v5914
      %v5980 = vunpack.c.l.b16 %v5915
      %v5981 = vunpack.c.l.b16 %v5916
      %v5982 = vunpack.c.l.b16 %v5917
      %v5983 = vunpack.c.l.b16 %v5918
      %v5984 = vunpack.c.l.b16 %v5919
      %v5985 = vunpack.c.l.b16 %v5920
      %v5986 = vunpack.c.l.b16 %v5921
      %v5987 = vunpack.c.l.b16 %v5922
      %v5988 = vunpack.c.l.b16 %v5923
      %v5989 = vunpack.c.l.b16 %v5924
      %v5990 = vunpack.c.l.b16 %v5925
      %v5991 = vunpack.c.l.b16 %v5926
      %v5992 = vunpack.c.l.b16 %v5927
      %v5993 = vunpack.c.l.b16 %v5928
      %v5994 = vunpack.c.l.b16 %v5929
      %v5995 = vunpack.c.l.b16 %v5930
      %v5996 = vunpack.c.l.b16 %v5931
      %v5997 = vunpack.c.l.b16 %v5932
      %v5998 = vunpack.c.l.b16 %v5933
      %v5999 = vpack.c.b16 %v5976, %v5975
      %v6000 = vpack.c.b16 %v5978, %v5977
      %v6001 = vpack.c.b16 %v5980, %v5979
      %v6002 = vpack.c.b16 %v5982, %v5981
      %v6003 = vpack.c.b16 %v5984, %v5983
      %v6004 = vpack.c.b16 %v5986, %v5985
      %v6005 = vpack.c.b16 %v5988, %v5987
      %v6006 = vpack.c.b16 %v5990, %v5989
      %v6007 = vpack.c.b16 %v5992, %v5991
      %v6008 = vpack.c.b16 %v5994, %v5993
      %v6009 = vpack.c.b16 %v5996, %v5995
      %v6010 = vpack.c.b16 %v5998, %v5997
      %v6039 = vunpack.c.l.b16 %v5935
      %v6040 = vunpack.c.l.b16 %v5936
      %v6041 = vunpack.c.l.b16 %v5937
      %v6042 = vunpack.c.l.b16 %v5938
      %v6043 = vunpack.c.l.b16 %v5939
      %v6044 = vunpack.c.l.b16 %v5940
      %v6045 = vunpack.c.l.b16 %v5941
      %v6046 = vunpack.c.l.b16 %v5942
      %v6047 = vunpack.c.l.b16 %v5943
      %v6048 = vunpack.c.l.b16 %v5944
      %v6049 = vunpack.c.l.b16 %v5945
      %v6050 = vunpack.c.l.b16 %v5946
      %v6051 = vunpack.c.l.b16 %v5947
      %v6052 = vunpack.c.l.b16 %v5948
      %v6053 = vunpack.c.l.b16 %v5949
      %v6054 = vunpack.c.l.b16 %v5950
      %v6055 = vpack.c.b16 %v6040, %v6039
      %v6056 = vpack.c.b16 %v6042, %v6041
      %v6057 = vpack.c.b16 %v6044, %v6043
      %v6058 = vpack.c.b16 %v6046, %v6045
      %v6059 = vpack.c.b16 %v6048, %v6047
      %v6060 = vpack.c.b16 %v6050, %v6049
      %v6061 = vpack.c.b16 %v6052, %v6051
      %v6062 = vpack.c.b16 %v6054, %v6053
      %6071 = vmatprep.subr.bf16.mxu0 0
      %6072 = vmatpush1.bf16.msra.mxu0 %v6062
      %6073 = vmatprep.subr.bf16.mxu0 0
      %6074 = vmatpush1.bf16.msra.mxu0 %v6061
      %6075 = vmatprep.subr.bf16.mxu0 0
      %6076 = vmatpush1.bf16.msra.mxu0 %v6060
      %6077 = vmatprep.subr.bf16.mxu0 0
      %6078 = vmatpush1.bf16.msra.mxu0 %v6059
      %6079 = vmatprep.subr.bf16.mxu0 0
      %6080 = vmatpush1.bf16.msra.mxu0 %v6058
      %6081 = vmatprep.subr.bf16.mxu0 0
      %6082 = vmatpush1.bf16.msra.mxu0 %v6057
      %6083 = vmatprep.subr.bf16.mxu0 0
      %6084 = vmatpush1.bf16.msra.mxu0 %v6056
      %6085 = vmatprep.subr.bf16.mxu0 0
      %6086 = vmatpush1.bf16.msra.mxu0 %v6055
      %6087 = vmatprep.subr.bf16.mxu0 0
      %6088 = vmatpush2.bf16.msra.mxu0 0
      %6089 = vmatprep.subr.bf16.mxu0 0
      %6090 = vmatpush2.bf16.msra.mxu0 0
      %6091 = vmatprep.subr.bf16.mxu0 0
      %6092 = vmatpush2.bf16.msra.mxu0 0
      %6093 = vmatprep.subr.bf16.mxu0 0
      %6094 = vmatpush2.bf16.msra.mxu0 0
      %6095 = vmatprep.subr.bf16.mxu0 0
      %6096 = vmatpush2.bf16.msra.mxu0 0
      %6097 = vmatprep.subr.bf16.mxu0 0
      %6098 = vmatpush2.bf16.msra.mxu0 0
      %6099 = vmatprep.subr.bf16.mxu0 0
      %6100 = vmatpush2.bf16.msra.mxu0 0
      %6101 = vmatprep.subr.bf16.mxu0 0
      %6102 = vmatpush2.bf16.msra.mxu0 0
      %6103 = vmatprep.mubr.bf16.mxu0 0
      %6104 = vmatmul.mubr.bf16.gmra.mxu0 %v5999
      %v6105 = vpop.f32.mrf.mxu0
      %v6106 = vadd.f32 0.0, %v6105
      %v6107 = vpop.f32.mrf.mxu0
      %v6108 = vpop.f32.mrf.mxu0
      %v6109 = vadd.f32 0.0, %v6108
      %v6110 = vpop.f32.mrf.mxu0
      %6111 = vmatprep.mubr.bf16.mxu0 0
      %6112 = vmatmul.mubr.bf16.gmra.mxu0 %v6000
      %v6113 = vpop.f32.mrf.mxu0
      %v6114 = vadd.f32 0.0, %v6113
      %v6115 = vpop.f32.mrf.mxu0
      %v6116 = vpop.f32.mrf.mxu0
      %v6117 = vadd.f32 0.0, %v6116
      %v6118 = vpop.f32.mrf.mxu0
      %6119 = vmatprep.mubr.bf16.mxu0 0
      %6120 = vmatmul.mubr.bf16.gmra.mxu0 %v6001
      %v6121 = vpop.f32.mrf.mxu0
      %v6122 = vadd.f32 0.0, %v6121
      %v6123 = vpop.f32.mrf.mxu0
      %v6124 = vpop.f32.mrf.mxu0
      %v6125 = vadd.f32 0.0, %v6124
      %v6126 = vpop.f32.mrf.mxu0
      %6127 = vmatprep.mubr.bf16.mxu0 0
      %6128 = vmatmul.mubr.bf16.gmra.mxu0 %v6002
      %v6129 = vpop.f32.mrf.mxu0
      %v6130 = vadd.f32 0.0, %v6129
      %v6131 = vpop.f32.mrf.mxu0
      %v6132 = vpop.f32.mrf.mxu0
      %v6133 = vadd.f32 0.0, %v6132
      %v6134 = vpop.f32.mrf.mxu0
      %6135 = vmatprep.mubr.bf16.mxu0 0
      %6136 = vmatmul.mubr.bf16.gmra.mxu0 %v6003
      %v6137 = vpop.f32.mrf.mxu0
      %v6138 = vadd.f32 0.0, %v6137
      %v6139 = vpop.f32.mrf.mxu0
      %v6140 = vpop.f32.mrf.mxu0
      %v6141 = vadd.f32 0.0, %v6140
      %v6142 = vpop.f32.mrf.mxu0
      %6143 = vmatprep.mubr.bf16.mxu0 0
      %6144 = vmatmul.mubr.bf16.gmra.mxu0 %v6004
      %v6145 = vpop.f32.mrf.mxu0
      %v6146 = vadd.f32 0.0, %v6145
      %v6147 = vpop.f32.mrf.mxu0
      %v6148 = vpop.f32.mrf.mxu0
      %v6149 = vadd.f32 0.0, %v6148
      %v6150 = vpop.f32.mrf.mxu0
      %6151 = vmatprep.mubr.bf16.mxu0 0
      %6152 = vmatmul.mubr.bf16.gmra.mxu0 %v6005
      %v6153 = vpop.f32.mrf.mxu0
      %v6154 = vadd.f32 0.0, %v6153
      %v6155 = vpop.f32.mrf.mxu0
      %v6156 = vpop.f32.mrf.mxu0
      %v6157 = vadd.f32 0.0, %v6156
      %v6158 = vpop.f32.mrf.mxu0
      %6159 = vmatprep.mubr.bf16.mxu0 0
      %6160 = vmatmul.mubr.bf16.gmra.mxu0 %v6006
      %v6161 = vpop.f32.mrf.mxu0
      %v6162 = vadd.f32 0.0, %v6161
      %v6163 = vpop.f32.mrf.mxu0
      %v6164 = vpop.f32.mrf.mxu0
      %v6165 = vadd.f32 0.0, %v6164
      %v6166 = vpop.f32.mrf.mxu0
      %6167 = vmatprep.mubr.bf16.mxu0 0
      %6168 = vmatmul.mubr.bf16.gmra.mxu0 %v6007
      %v6169 = vpop.f32.mrf.mxu0
      %v6170 = vadd.f32 0.0, %v6169
      %v6171 = vpop.f32.mrf.mxu0
      %v6172 = vpop.f32.mrf.mxu0
      %v6173 = vadd.f32 0.0, %v6172
      %v6174 = vpop.f32.mrf.mxu0
      %6175 = vmatprep.mubr.bf16.mxu0 0
      %6176 = vmatmul.mubr.bf16.gmra.mxu0 %v6008
      %v6177 = vpop.f32.mrf.mxu0
      %v6178 = vadd.f32 0.0, %v6177
      %v6179 = vpop.f32.mrf.mxu0
      %v6180 = vpop.f32.mrf.mxu0
      %v6181 = vadd.f32 0.0, %v6180
      %v6182 = vpop.f32.mrf.mxu0
      %6183 = vmatprep.mubr.bf16.mxu0 0
      %6184 = vmatmul.mubr.bf16.gmra.mxu0 %v6009
      %v6185 = vpop.f32.mrf.mxu0
      %v6186 = vadd.f32 0.0, %v6185
      %v6187 = vpop.f32.mrf.mxu0
      %v6188 = vpop.f32.mrf.mxu0
      %v6189 = vadd.f32 0.0, %v6188
      %v6190 = vpop.f32.mrf.mxu0
      %6191 = vmatprep.mubr.bf16.mxu0 0
      %6192 = vmatmul.mubr.bf16.gmra.mxu0 %v6010
      %v6193 = vpop.f32.mrf.mxu0
      %v6194 = vadd.f32 0.0, %v6193
      %v6195 = vpop.f32.mrf.mxu0
      %v6196 = vpop.f32.mrf.mxu0
      %v6197 = vadd.f32 0.0, %v6196
      %v6198 = vpop.f32.mrf.mxu0
      %6199 = vdwg.mxu0
      %v6200 = vadd.f32 %v5886, %v6106
      %v6201 = vadd.f32 %v5887, %v6109
      %v6202 = vadd.f32 %v5888, %v6114
      %v6203 = vadd.f32 %v5889, %v6117
      %v6204 = vadd.f32 %v5890, %v6122
      %v6205 = vadd.f32 %v5891, %v6125
      %v6206 = vadd.f32 %v5892, %v6130
      %v6207 = vadd.f32 %v5893, %v6133
      %v6208 = vadd.f32 %v5894, %v6138
      %v6209 = vadd.f32 %v5895, %v6141
      %v6210 = vadd.f32 %v5896, %v6146
      %v6211 = vadd.f32 %v5897, %v6149
      %v6212 = vadd.f32 %v5898, %v6154
      %v6213 = vadd.f32 %v5899, %v6157
      %v6214 = vadd.f32 %v5900, %v6162
      %v6215 = vadd.f32 %v5901, %v6165
      %v6216 = vadd.f32 %v5902, %v6170
      %v6217 = vadd.f32 %v5903, %v6173
      %v6218 = vadd.f32 %v5904, %v6178
      %v6219 = vadd.f32 %v5905, %v6181
      %v6220 = vadd.f32 %v5906, %v6186
      %v6221 = vadd.f32 %v5907, %v6189
      %v6222 = vadd.f32 %v5908, %v6194
      %v6223 = vadd.f32 %v5909, %v6197
      %v6224 = vld [vmem:[#allocation2 + $0x18] sm:$0xf]
      %v6225 = vld [vmem:[#allocation2 + $0x1c] sm:$0xf]
      %v6226 = vld [vmem:[#allocation2 + $0x20] sm:$0xf]
      %v6227 = vld [vmem:[#allocation2 + $0x24] sm:$0xf]
      %v6228 = vld [vmem:[#allocation2 + $0x28] sm:$0xf]
      %v6229 = vld [vmem:[#allocation2 + $0x2c] sm:$0xf]
      %v6230 = vld [vmem:[#allocation2 + $0x30] sm:$0xf]
      %v6231 = vld [vmem:[#allocation2 + $0x34] sm:$0xf]
      %v6232 = vld [vmem:[#allocation2 + $0x38] sm:$0xf]
      %v6233 = vld [vmem:[#allocation2 + $0x3c] sm:$0xf]
      %v6234 = vld [vmem:[#allocation2 + $0x40] sm:$0xf]
      %v6235 = vld [vmem:[#allocation2 + $0x44] sm:$0xf]
      %v6236 = vld [vmem:[#allocation2 + $0x48] sm:$0xf]
      %v6237 = vld [vmem:[#allocation2 + $0x4c] sm:$0xf]
      %v6238 = vld [vmem:[#allocation2 + $0x50] sm:$0xf]
      %v6239 = vld [vmem:[#allocation2 + $0x54] sm:$0xf]
      %v6240 = vld [vmem:[#allocation2 + $0x58] sm:$0xf]
      %v6241 = vld [vmem:[#allocation2 + $0x5c] sm:$0xf]
      %v6242 = vld [vmem:[#allocation2 + $0x60] sm:$0xf]
      %v6243 = vld [vmem:[#allocation2 + $0x64] sm:$0xf]
      %v6244 = vld [vmem:[#allocation2 + $0x68] sm:$0xf]
      %v6245 = vld [vmem:[#allocation2 + $0x6c] sm:$0xf]
      %v6246 = vld [vmem:[#allocation2 + $0x70] sm:$0xf]
      %v6247 = vld [vmem:[#allocation2 + $0x74] sm:$0xf]
      %v6248 = vld [vmem:[#allocation2 + $0x78] sm:$0x1]
      %s6249 = scalar_lea.vmem %s4, 448
      %v6250 = vld [vmem:[%s6249] sm:$0xf]
      %v6251 = vld [vmem:[%s6249 + $0x4] sm:$0xf]
      %v6252 = vld [vmem:[%s6249 + $0x8] sm:$0xf]
      %v6253 = vld [vmem:[%s6249 + $0xc] sm:$0xf]
      %v6254 = vld [vmem:[%s6249 + $0x10] sm:$0xf]
      %v6255 = vld [vmem:[%s6249 + $0x14] sm:$0xf]
      %v6256 = vld [vmem:[%s6249 + $0x18] sm:$0xf]
      %v6257 = vld [vmem:[%s6249 + $0x1c] sm:$0xf]
      %v6258 = vld [vmem:[%s6249 + $0x20] sm:$0xf]
      %v6259 = vld [vmem:[%s6249 + $0x24] sm:$0xf]
      %v6260 = vld [vmem:[%s6249 + $0x28] sm:$0xf]
      %v6261 = vld [vmem:[%s6249 + $0x2c] sm:$0xf]
      %v6262 = vld [vmem:[%s6249 + $0x30] sm:$0xf]
      %v6263 = vld [vmem:[%s6249 + $0x34] sm:$0xf]
      %v6264 = vld [vmem:[%s6249 + $0x38] sm:$0xf]
      %v6265 = vld [vmem:[%s6249 + $0x3c] sm:$0xf]
      %v6291 = vunpack.c.l.b16 %v6224
      %v6292 = vunpack.c.l.b16 %v6225
      %v6293 = vunpack.c.l.b16 %v6226
      %v6294 = vunpack.c.l.b16 %v6227
      %v6295 = vunpack.c.l.b16 %v6228
      %v6296 = vunpack.c.l.b16 %v6229
      %v6297 = vunpack.c.l.b16 %v6230
      %v6298 = vunpack.c.l.b16 %v6231
      %v6299 = vunpack.c.l.b16 %v6232
      %v6300 = vunpack.c.l.b16 %v6233
      %v6301 = vunpack.c.l.b16 %v6234
      %v6302 = vunpack.c.l.b16 %v6235
      %v6303 = vunpack.c.l.b16 %v6236
      %v6304 = vunpack.c.l.b16 %v6237
      %v6305 = vunpack.c.l.b16 %v6238
      %v6306 = vunpack.c.l.b16 %v6239
      %v6307 = vunpack.c.l.b16 %v6240
      %v6308 = vunpack.c.l.b16 %v6241
      %v6309 = vunpack.c.l.b16 %v6242
      %v6310 = vunpack.c.l.b16 %v6243
      %v6311 = vunpack.c.l.b16 %v6244
      %v6312 = vunpack.c.l.b16 %v6245
      %v6313 = vunpack.c.l.b16 %v6246
      %v6314 = vunpack.c.l.b16 %v6247
      %v6315 = vunpack.c.l.b16 %v6248
      %v6316 = vpack.c.b16 %v6292, %v6291
      %v6317 = vpack.c.b16 %v6294, %v6293
      %v6318 = vpack.c.b16 %v6296, %v6295
      %v6319 = vpack.c.b16 %v6298, %v6297
      %v6320 = vpack.c.b16 %v6300, %v6299
      %v6321 = vpack.c.b16 %v6302, %v6301
      %v6322 = vpack.c.b16 %v6304, %v6303
      %v6323 = vpack.c.b16 %v6306, %v6305
      %v6324 = vpack.c.b16 %v6308, %v6307
      %v6325 = vpack.c.b16 %v6310, %v6309
      %v6326 = vpack.c.b16 %v6312, %v6311
      %v6327 = vpack.c.b16 %v6314, %v6313
      %v6328 = vpack.c.b16 %v6315, %v6315
      %v6330 = vshrl.u32 %v6316, 16
      %v6332 = vshll.u32 %v6316, 16
      %v6334 = vrot.slane %v6332, 1
      %v6335 = vor.u32 %v6330, %v6334
      %v6337 = vshll.u32 %v6317, 16
      %v6339 = vrot.slane %v6337, 1
      %v6340 = vsel %vm451, %v6335, %v6339
      %v6341 = vshrl.u32 %v6317, 16
      %v6343 = vor.u32 %v6341, %v6339
      %v6345 = vshll.u32 %v6318, 16
      %v6347 = vrot.slane %v6345, 1
      %v6348 = vsel %vm451, %v6343, %v6347
      %v6349 = vshrl.u32 %v6318, 16
      %v6351 = vor.u32 %v6349, %v6347
      %v6353 = vshll.u32 %v6319, 16
      %v6355 = vrot.slane %v6353, 1
      %v6356 = vsel %vm451, %v6351, %v6355
      %v6357 = vshrl.u32 %v6319, 16
      %v6359 = vor.u32 %v6357, %v6355
      %v6361 = vshll.u32 %v6320, 16
      %v6363 = vrot.slane %v6361, 1
      %v6364 = vsel %vm451, %v6359, %v6363
      %v6365 = vshrl.u32 %v6320, 16
      %v6367 = vor.u32 %v6365, %v6363
      %v6369 = vshll.u32 %v6321, 16
      %v6371 = vrot.slane %v6369, 1
      %v6372 = vsel %vm451, %v6367, %v6371
      %v6373 = vshrl.u32 %v6321, 16
      %v6375 = vor.u32 %v6373, %v6371
      %v6377 = vshll.u32 %v6322, 16
      %v6379 = vrot.slane %v6377, 1
      %v6380 = vsel %vm451, %v6375, %v6379
      %v6381 = vshrl.u32 %v6322, 16
      %v6383 = vor.u32 %v6381, %v6379
      %v6385 = vshll.u32 %v6323, 16
      %v6387 = vrot.slane %v6385, 1
      %v6388 = vsel %vm451, %v6383, %v6387
      %v6389 = vshrl.u32 %v6323, 16
      %v6391 = vor.u32 %v6389, %v6387
      %v6393 = vshll.u32 %v6324, 16
      %v6395 = vrot.slane %v6393, 1
      %v6396 = vsel %vm451, %v6391, %v6395
      %v6397 = vshrl.u32 %v6324, 16
      %v6399 = vor.u32 %v6397, %v6395
      %v6401 = vshll.u32 %v6325, 16
      %v6403 = vrot.slane %v6401, 1
      %v6404 = vsel %vm451, %v6399, %v6403
      %v6405 = vshrl.u32 %v6325, 16
      %v6407 = vor.u32 %v6405, %v6403
      %v6409 = vshll.u32 %v6326, 16
      %v6411 = vrot.slane %v6409, 1
      %v6412 = vsel %vm451, %v6407, %v6411
      %v6413 = vshrl.u32 %v6326, 16
      %v6415 = vor.u32 %v6413, %v6411
      %v6417 = vshll.u32 %v6327, 16
      %v6419 = vrot.slane %v6417, 1
      %v6420 = vsel %vm451, %v6415, %v6419
      %v6421 = vshrl.u32 %v6327, 16
      %v6423 = vor.u32 %v6421, %v6419
      %v6425 = vshll.u32 %v6328, 16
      %v6427 = vrot.slane %v6425, 1
      %v6428 = vsel %vm451, %v6423, %v6427
      %v6457 = vunpack.c.l.b16 %v6250
      %v6458 = vunpack.c.l.b16 %v6251
      %v6459 = vunpack.c.l.b16 %v6252
      %v6460 = vunpack.c.l.b16 %v6253
      %v6461 = vunpack.c.l.b16 %v6254
      %v6462 = vunpack.c.l.b16 %v6255
      %v6463 = vunpack.c.l.b16 %v6256
      %v6464 = vunpack.c.l.b16 %v6257
      %v6465 = vunpack.c.l.b16 %v6258
      %v6466 = vunpack.c.l.b16 %v6259
      %v6467 = vunpack.c.l.b16 %v6260
      %v6468 = vunpack.c.l.b16 %v6261
      %v6469 = vunpack.c.l.b16 %v6262
      %v6470 = vunpack.c.l.b16 %v6263
      %v6471 = vunpack.c.l.b16 %v6264
      %v6472 = vunpack.c.l.b16 %v6265
      %v6473 = vpack.c.b16 %v6458, %v6457
      %v6474 = vpack.c.b16 %v6460, %v6459
      %v6475 = vpack.c.b16 %v6462, %v6461
      %v6476 = vpack.c.b16 %v6464, %v6463
      %v6477 = vpack.c.b16 %v6466, %v6465
      %v6478 = vpack.c.b16 %v6468, %v6467
      %v6479 = vpack.c.b16 %v6470, %v6469
      %v6480 = vpack.c.b16 %v6472, %v6471
      %6489 = vmatprep.subr.bf16.mxu0 0
      %6490 = vmatpush1.bf16.msra.mxu0 %v6480
      %6491 = vmatprep.subr.bf16.mxu0 0
      %6492 = vmatpush1.bf16.msra.mxu0 %v6479
      %6493 = vmatprep.subr.bf16.mxu0 0
      %6494 = vmatpush1.bf16.msra.mxu0 %v6478
      %6495 = vmatprep.subr.bf16.mxu0 0
      %6496 = vmatpush1.bf16.msra.mxu0 %v6477
      %6497 = vmatprep.subr.bf16.mxu0 0
      %6498 = vmatpush1.bf16.msra.mxu0 %v6476
      %6499 = vmatprep.subr.bf16.mxu0 0
      %6500 = vmatpush1.bf16.msra.mxu0 %v6475
      %6501 = vmatprep.subr.bf16.mxu0 0
      %6502 = vmatpush1.bf16.msra.mxu0 %v6474
      %6503 = vmatprep.subr.bf16.mxu0 0
      %6504 = vmatpush1.bf16.msra.mxu0 %v6473
      %6505 = vmatprep.subr.bf16.mxu0 0
      %6506 = vmatpush2.bf16.msra.mxu0 0
      %6507 = vmatprep.subr.bf16.mxu0 0
      %6508 = vmatpush2.bf16.msra.mxu0 0
      %6509 = vmatprep.subr.bf16.mxu0 0
      %6510 = vmatpush2.bf16.msra.mxu0 0
      %6511 = vmatprep.subr.bf16.mxu0 0
      %6512 = vmatpush2.bf16.msra.mxu0 0
      %6513 = vmatprep.subr.bf16.mxu0 0
      %6514 = vmatpush2.bf16.msra.mxu0 0
      %6515 = vmatprep.subr.bf16.mxu0 0
      %6516 = vmatpush2.bf16.msra.mxu0 0
      %6517 = vmatprep.subr.bf16.mxu0 0
      %6518 = vmatpush2.bf16.msra.mxu0 0
      %6519 = vmatprep.subr.bf16.mxu0 0
      %6520 = vmatpush2.bf16.msra.mxu0 0
      %6521 = vmatprep.mubr.bf16.mxu0 0
      %6522 = vmatmul.mubr.bf16.gmra.mxu0 %v6340
      %v6523 = vpop.f32.mrf.mxu0
      %v6524 = vadd.f32 0.0, %v6523
      %v6525 = vpop.f32.mrf.mxu0
      %v6526 = vpop.f32.mrf.mxu0
      %v6527 = vadd.f32 0.0, %v6526
      %v6528 = vpop.f32.mrf.mxu0
      %6529 = vmatprep.mubr.bf16.mxu0 0
      %6530 = vmatmul.mubr.bf16.gmra.mxu0 %v6348
      %v6531 = vpop.f32.mrf.mxu0
      %v6532 = vadd.f32 0.0, %v6531
      %v6533 = vpop.f32.mrf.mxu0
      %v6534 = vpop.f32.mrf.mxu0
      %v6535 = vadd.f32 0.0, %v6534
      %v6536 = vpop.f32.mrf.mxu0
      %6537 = vmatprep.mubr.bf16.mxu0 0
      %6538 = vmatmul.mubr.bf16.gmra.mxu0 %v6356
      %v6539 = vpop.f32.mrf.mxu0
      %v6540 = vadd.f32 0.0, %v6539
      %v6541 = vpop.f32.mrf.mxu0
      %v6542 = vpop.f32.mrf.mxu0
      %v6543 = vadd.f32 0.0, %v6542
      %v6544 = vpop.f32.mrf.mxu0
      %6545 = vmatprep.mubr.bf16.mxu0 0
      %6546 = vmatmul.mubr.bf16.gmra.mxu0 %v6364
      %v6547 = vpop.f32.mrf.mxu0
      %v6548 = vadd.f32 0.0, %v6547
      %v6549 = vpop.f32.mrf.mxu0
      %v6550 = vpop.f32.mrf.mxu0
      %v6551 = vadd.f32 0.0, %v6550
      %v6552 = vpop.f32.mrf.mxu0
      %6553 = vmatprep.mubr.bf16.mxu0 0
      %6554 = vmatmul.mubr.bf16.gmra.mxu0 %v6372
      %v6555 = vpop.f32.mrf.mxu0
      %v6556 = vadd.f32 0.0, %v6555
      %v6557 = vpop.f32.mrf.mxu0
      %v6558 = vpop.f32.mrf.mxu0
      %v6559 = vadd.f32 0.0, %v6558
      %v6560 = vpop.f32.mrf.mxu0
      %6561 = vmatprep.mubr.bf16.mxu0 0
      %6562 = vmatmul.mubr.bf16.gmra.mxu0 %v6380
      %v6563 = vpop.f32.mrf.mxu0
      %v6564 = vadd.f32 0.0, %v6563
      %v6565 = vpop.f32.mrf.mxu0
      %v6566 = vpop.f32.mrf.mxu0
      %v6567 = vadd.f32 0.0, %v6566
      %v6568 = vpop.f32.mrf.mxu0
      %6569 = vmatprep.mubr.bf16.mxu0 0
      %6570 = vmatmul.mubr.bf16.gmra.mxu0 %v6388
      %v6571 = vpop.f32.mrf.mxu0
      %v6572 = vadd.f32 0.0, %v6571
      %v6573 = vpop.f32.mrf.mxu0
      %v6574 = vpop.f32.mrf.mxu0
      %v6575 = vadd.f32 0.0, %v6574
      %v6576 = vpop.f32.mrf.mxu0
      %6577 = vmatprep.mubr.bf16.mxu0 0
      %6578 = vmatmul.mubr.bf16.gmra.mxu0 %v6396
      %v6579 = vpop.f32.mrf.mxu0
      %v6580 = vadd.f32 0.0, %v6579
      %v6581 = vpop.f32.mrf.mxu0
      %v6582 = vpop.f32.mrf.mxu0
      %v6583 = vadd.f32 0.0, %v6582
      %v6584 = vpop.f32.mrf.mxu0
      %6585 = vmatprep.mubr.bf16.mxu0 0
      %6586 = vmatmul.mubr.bf16.gmra.mxu0 %v6404
      %v6587 = vpop.f32.mrf.mxu0
      %v6588 = vadd.f32 0.0, %v6587
      %v6589 = vpop.f32.mrf.mxu0
      %v6590 = vpop.f32.mrf.mxu0
      %v6591 = vadd.f32 0.0, %v6590
      %v6592 = vpop.f32.mrf.mxu0
      %6593 = vmatprep.mubr.bf16.mxu0 0
      %6594 = vmatmul.mubr.bf16.gmra.mxu0 %v6412
      %v6595 = vpop.f32.mrf.mxu0
      %v6596 = vadd.f32 0.0, %v6595
      %v6597 = vpop.f32.mrf.mxu0
      %v6598 = vpop.f32.mrf.mxu0
      %v6599 = vadd.f32 0.0, %v6598
      %v6600 = vpop.f32.mrf.mxu0
      %6601 = vmatprep.mubr.bf16.mxu0 0
      %6602 = vmatmul.mubr.bf16.gmra.mxu0 %v6420
      %v6603 = vpop.f32.mrf.mxu0
      %v6604 = vadd.f32 0.0, %v6603
      %v6605 = vpop.f32.mrf.mxu0
      %v6606 = vpop.f32.mrf.mxu0
      %v6607 = vadd.f32 0.0, %v6606
      %v6608 = vpop.f32.mrf.mxu0
      %6609 = vmatprep.mubr.bf16.mxu0 0
      %6610 = vmatmul.mubr.bf16.gmra.mxu0 %v6428
      %v6611 = vpop.f32.mrf.mxu0
      %v6612 = vadd.f32 0.0, %v6611
      %v6613 = vpop.f32.mrf.mxu0
      %v6614 = vpop.f32.mrf.mxu0
      %v6615 = vadd.f32 0.0, %v6614
      %v6616 = vpop.f32.mrf.mxu0
      %6617 = vdwg.mxu0
      %v6618 = vadd.f32 %v6200, %v6524
      %v6619 = vadd.f32 %v6201, %v6527
      %v6620 = vadd.f32 %v6202, %v6532
      %v6621 = vadd.f32 %v6203, %v6535
      %v6622 = vadd.f32 %v6204, %v6540
      %v6623 = vadd.f32 %v6205, %v6543
      %v6624 = vadd.f32 %v6206, %v6548
      %v6625 = vadd.f32 %v6207, %v6551
      %v6626 = vadd.f32 %v6208, %v6556
      %v6627 = vadd.f32 %v6209, %v6559
      %v6628 = vadd.f32 %v6210, %v6564
      %v6629 = vadd.f32 %v6211, %v6567
      %v6630 = vadd.f32 %v6212, %v6572
      %v6631 = vadd.f32 %v6213, %v6575
      %v6632 = vadd.f32 %v6214, %v6580
      %v6633 = vadd.f32 %v6215, %v6583
      %v6634 = vadd.f32 %v6216, %v6588
      %v6635 = vadd.f32 %v6217, %v6591
      %v6636 = vadd.f32 %v6218, %v6596
      %v6637 = vadd.f32 %v6219, %v6599
      %v6638 = vadd.f32 %v6220, %v6604
      %v6639 = vadd.f32 %v6221, %v6607
      %v6640 = vadd.f32 %v6222, %v6612
      %v6641 = vadd.f32 %v6223, %v6615
      %v6642 = vld [vmem:[#allocation2 + $0x18] sm:$0xe]
      %s6643 = scalar_lea.vmem %s4, 512
      %v6644 = vld [vmem:[%s6643] sm:$0xf]
      %v6645 = vld [vmem:[%s6643 + $0x4] sm:$0xf]
      %v6646 = vld [vmem:[%s6643 + $0x8] sm:$0xf]
      %v6647 = vld [vmem:[%s6643 + $0xc] sm:$0xf]
      %v6648 = vld [vmem:[%s6643 + $0x10] sm:$0xf]
      %v6649 = vld [vmem:[%s6643 + $0x14] sm:$0xf]
      %v6650 = vld [vmem:[%s6643 + $0x18] sm:$0xf]
      %v6651 = vld [vmem:[%s6643 + $0x1c] sm:$0xf]
      %v6652 = vld [vmem:[%s6643 + $0x20] sm:$0xf]
      %v6653 = vld [vmem:[%s6643 + $0x24] sm:$0xf]
      %v6654 = vld [vmem:[%s6643 + $0x28] sm:$0xf]
      %v6655 = vld [vmem:[%s6643 + $0x2c] sm:$0xf]
      %v6656 = vld [vmem:[%s6643 + $0x30] sm:$0xf]
      %v6657 = vld [vmem:[%s6643 + $0x34] sm:$0xf]
      %v6658 = vld [vmem:[%s6643 + $0x38] sm:$0xf]
      %v6659 = vld [vmem:[%s6643 + $0x3c] sm:$0xf]
      %v6661 = vunpack.c.l.b16 %v6642
      %v6662 = vpack.c.b16 %v6292, %v6661
      %v6663 = vrot.slane %v6662, 1
      %v6664 = vrot.slane %v6317, 1
      %v6665 = vsel %vm1029, %v6663, %v6664
      %v6666 = vrot.slane %v6318, 1
      %v6667 = vsel %vm1029, %v6664, %v6666
      %v6668 = vrot.slane %v6319, 1
      %v6669 = vsel %vm1029, %v6666, %v6668
      %v6670 = vrot.slane %v6320, 1
      %v6671 = vsel %vm1029, %v6668, %v6670
      %v6672 = vrot.slane %v6321, 1
      %v6673 = vsel %vm1029, %v6670, %v6672
      %v6674 = vrot.slane %v6322, 1
      %v6675 = vsel %vm1029, %v6672, %v6674
      %v6676 = vrot.slane %v6323, 1
      %v6677 = vsel %vm1029, %v6674, %v6676
      %v6678 = vrot.slane %v6324, 1
      %v6679 = vsel %vm1029, %v6676, %v6678
      %v6680 = vrot.slane %v6325, 1
      %v6681 = vsel %vm1029, %v6678, %v6680
      %v6682 = vrot.slane %v6326, 1
      %v6683 = vsel %vm1029, %v6680, %v6682
      %v6684 = vrot.slane %v6327, 1
      %v6685 = vsel %vm1029, %v6682, %v6684
      %v6686 = vrot.slane %v6328, 1
      %v6687 = vsel %vm1029, %v6684, %v6686
      %v6716 = vunpack.c.l.b16 %v6644
      %v6717 = vunpack.c.l.b16 %v6645
      %v6718 = vunpack.c.l.b16 %v6646
      %v6719 = vunpack.c.l.b16 %v6647
      %v6720 = vunpack.c.l.b16 %v6648
      %v6721 = vunpack.c.l.b16 %v6649
      %v6722 = vunpack.c.l.b16 %v6650
      %v6723 = vunpack.c.l.b16 %v6651
      %v6724 = vunpack.c.l.b16 %v6652
      %v6725 = vunpack.c.l.b16 %v6653
      %v6726 = vunpack.c.l.b16 %v6654
      %v6727 = vunpack.c.l.b16 %v6655
      %v6728 = vunpack.c.l.b16 %v6656
      %v6729 = vunpack.c.l.b16 %v6657
      %v6730 = vunpack.c.l.b16 %v6658
      %v6731 = vunpack.c.l.b16 %v6659
      %v6732 = vpack.c.b16 %v6717, %v6716
      %v6733 = vpack.c.b16 %v6719, %v6718
      %v6734 = vpack.c.b16 %v6721, %v6720
      %v6735 = vpack.c.b16 %v6723, %v6722
      %v6736 = vpack.c.b16 %v6725, %v6724
      %v6737 = vpack.c.b16 %v6727, %v6726
      %v6738 = vpack.c.b16 %v6729, %v6728
      %v6739 = vpack.c.b16 %v6731, %v6730
      %6748 = vmatprep.subr.bf16.mxu0 0
      %6749 = vmatpush1.bf16.msra.mxu0 %v6739
      %6750 = vmatprep.subr.bf16.mxu0 0
      %6751 = vmatpush1.bf16.msra.mxu0 %v6738
      %6752 = vmatprep.subr.bf16.mxu0 0
      %6753 = vmatpush1.bf16.msra.mxu0 %v6737
      %6754 = vmatprep.subr.bf16.mxu0 0
      %6755 = vmatpush1.bf16.msra.mxu0 %v6736
      %6756 = vmatprep.subr.bf16.mxu0 0
      %6757 = vmatpush1.bf16.msra.mxu0 %v6735
      %6758 = vmatprep.subr.bf16.mxu0 0
      %6759 = vmatpush1.bf16.msra.mxu0 %v6734
      %6760 = vmatprep.subr.bf16.mxu0 0
      %6761 = vmatpush1.bf16.msra.mxu0 %v6733
      %6762 = vmatprep.subr.bf16.mxu0 0
      %6763 = vmatpush1.bf16.msra.mxu0 %v6732
      %6764 = vmatprep.subr.bf16.mxu0 0
      %6765 = vmatpush2.bf16.msra.mxu0 0
      %6766 = vmatprep.subr.bf16.mxu0 0
      %6767 = vmatpush2.bf16.msra.mxu0 0
      %6768 = vmatprep.subr.bf16.mxu0 0
      %6769 = vmatpush2.bf16.msra.mxu0 0
      %6770 = vmatprep.subr.bf16.mxu0 0
      %6771 = vmatpush2.bf16.msra.mxu0 0
      %6772 = vmatprep.subr.bf16.mxu0 0
      %6773 = vmatpush2.bf16.msra.mxu0 0
      %6774 = vmatprep.subr.bf16.mxu0 0
      %6775 = vmatpush2.bf16.msra.mxu0 0
      %6776 = vmatprep.subr.bf16.mxu0 0
      %6777 = vmatpush2.bf16.msra.mxu0 0
      %6778 = vmatprep.subr.bf16.mxu0 0
      %6779 = vmatpush2.bf16.msra.mxu0 0
      %6780 = vmatprep.mubr.bf16.mxu0 0
      %6781 = vmatmul.mubr.bf16.gmra.mxu0 %v6665
      %v6782 = vpop.f32.mrf.mxu0
      %v6783 = vadd.f32 0.0, %v6782
      %v6784 = vpop.f32.mrf.mxu0
      %v6785 = vpop.f32.mrf.mxu0
      %v6786 = vadd.f32 0.0, %v6785
      %v6787 = vpop.f32.mrf.mxu0
      %6788 = vmatprep.mubr.bf16.mxu0 0
      %6789 = vmatmul.mubr.bf16.gmra.mxu0 %v6667
      %v6790 = vpop.f32.mrf.mxu0
      %v6791 = vadd.f32 0.0, %v6790
      %v6792 = vpop.f32.mrf.mxu0
      %v6793 = vpop.f32.mrf.mxu0
      %v6794 = vadd.f32 0.0, %v6793
      %v6795 = vpop.f32.mrf.mxu0
      %6796 = vmatprep.mubr.bf16.mxu0 0
      %6797 = vmatmul.mubr.bf16.gmra.mxu0 %v6669
      %v6798 = vpop.f32.mrf.mxu0
      %v6799 = vadd.f32 0.0, %v6798
      %v6800 = vpop.f32.mrf.mxu0
      %v6801 = vpop.f32.mrf.mxu0
      %v6802 = vadd.f32 0.0, %v6801
      %v6803 = vpop.f32.mrf.mxu0
      %6804 = vmatprep.mubr.bf16.mxu0 0
      %6805 = vmatmul.mubr.bf16.gmra.mxu0 %v6671
      %v6806 = vpop.f32.mrf.mxu0
      %v6807 = vadd.f32 0.0, %v6806
      %v6808 = vpop.f32.mrf.mxu0
      %v6809 = vpop.f32.mrf.mxu0
      %v6810 = vadd.f32 0.0, %v6809
      %v6811 = vpop.f32.mrf.mxu0
      %6812 = vmatprep.mubr.bf16.mxu0 0
      %6813 = vmatmul.mubr.bf16.gmra.mxu0 %v6673
      %v6814 = vpop.f32.mrf.mxu0
      %v6815 = vadd.f32 0.0, %v6814
      %v6816 = vpop.f32.mrf.mxu0
      %v6817 = vpop.f32.mrf.mxu0
      %v6818 = vadd.f32 0.0, %v6817
      %v6819 = vpop.f32.mrf.mxu0
      %6820 = vmatprep.mubr.bf16.mxu0 0
      %6821 = vmatmul.mubr.bf16.gmra.mxu0 %v6675
      %v6822 = vpop.f32.mrf.mxu0
      %v6823 = vadd.f32 0.0, %v6822
      %v6824 = vpop.f32.mrf.mxu0
      %v6825 = vpop.f32.mrf.mxu0
      %v6826 = vadd.f32 0.0, %v6825
      %v6827 = vpop.f32.mrf.mxu0
      %6828 = vmatprep.mubr.bf16.mxu0 0
      %6829 = vmatmul.mubr.bf16.gmra.mxu0 %v6677
      %v6830 = vpop.f32.mrf.mxu0
      %v6831 = vadd.f32 0.0, %v6830
      %v6832 = vpop.f32.mrf.mxu0
      %v6833 = vpop.f32.mrf.mxu0
      %v6834 = vadd.f32 0.0, %v6833
      %v6835 = vpop.f32.mrf.mxu0
      %6836 = vmatprep.mubr.bf16.mxu0 0
      %6837 = vmatmul.mubr.bf16.gmra.mxu0 %v6679
      %v6838 = vpop.f32.mrf.mxu0
      %v6839 = vadd.f32 0.0, %v6838
      %v6840 = vpop.f32.mrf.mxu0
      %v6841 = vpop.f32.mrf.mxu0
      %v6842 = vadd.f32 0.0, %v6841
      %v6843 = vpop.f32.mrf.mxu0
      %6844 = vmatprep.mubr.bf16.mxu0 0
      %6845 = vmatmul.mubr.bf16.gmra.mxu0 %v6681
      %v6846 = vpop.f32.mrf.mxu0
      %v6847 = vadd.f32 0.0, %v6846
      %v6848 = vpop.f32.mrf.mxu0
      %v6849 = vpop.f32.mrf.mxu0
      %v6850 = vadd.f32 0.0, %v6849
      %v6851 = vpop.f32.mrf.mxu0
      %6852 = vmatprep.mubr.bf16.mxu0 0
      %6853 = vmatmul.mubr.bf16.gmra.mxu0 %v6683
      %v6854 = vpop.f32.mrf.mxu0
      %v6855 = vadd.f32 0.0, %v6854
      %v6856 = vpop.f32.mrf.mxu0
      %v6857 = vpop.f32.mrf.mxu0
      %v6858 = vadd.f32 0.0, %v6857
      %v6859 = vpop.f32.mrf.mxu0
      %6860 = vmatprep.mubr.bf16.mxu0 0
      %6861 = vmatmul.mubr.bf16.gmra.mxu0 %v6685
      %v6862 = vpop.f32.mrf.mxu0
      %v6863 = vadd.f32 0.0, %v6862
      %v6864 = vpop.f32.mrf.mxu0
      %v6865 = vpop.f32.mrf.mxu0
      %v6866 = vadd.f32 0.0, %v6865
      %v6867 = vpop.f32.mrf.mxu0
      %6868 = vmatprep.mubr.bf16.mxu0 0
      %6869 = vmatmul.mubr.bf16.gmra.mxu0 %v6687
      %v6870 = vpop.f32.mrf.mxu0
      %v6871 = vadd.f32 0.0, %v6870
      %v6872 = vpop.f32.mrf.mxu0
      %v6873 = vpop.f32.mrf.mxu0
      %v6874 = vadd.f32 0.0, %v6873
      %v6875 = vpop.f32.mrf.mxu0
      %6876 = vdwg.mxu0
      %v6877 = vadd.f32 %v6618, %v6783
      %v6878 = vadd.f32 %v6619, %v6786
      %v6879 = vadd.f32 %v6620, %v6791
      %v6880 = vadd.f32 %v6621, %v6794
      %v6881 = vadd.f32 %v6622, %v6799
      %v6882 = vadd.f32 %v6623, %v6802
      %v6883 = vadd.f32 %v6624, %v6807
      %v6884 = vadd.f32 %v6625, %v6810
      %v6885 = vadd.f32 %v6626, %v6815
      %v6886 = vadd.f32 %v6627, %v6818
      %v6887 = vadd.f32 %v6628, %v6823
      %v6888 = vadd.f32 %v6629, %v6826
      %v6889 = vadd.f32 %v6630, %v6831
      %v6890 = vadd.f32 %v6631, %v6834
      %v6891 = vadd.f32 %v6632, %v6839
      %v6892 = vadd.f32 %v6633, %v6842
      %v6893 = vadd.f32 %v6634, %v6847
      %v6894 = vadd.f32 %v6635, %v6850
      %v6895 = vadd.f32 %v6636, %v6855
      %v6896 = vadd.f32 %v6637, %v6858
      %v6897 = vadd.f32 %v6638, %v6863
      %v6898 = vadd.f32 %v6639, %v6866
      %v6899 = vadd.f32 %v6640, %v6871
      %v6900 = vadd.f32 %v6641, %v6874
      %v6901 = vld [vmem:[%s5] sm:$0x1]
      %v6903 = vlaneseq
      %v6904 = vshrl.u32 %v6903, 7
      %v6905 = vsub.s32 0, %v6904
      %v6906 = vrot.slane %v6901, %v6905
      %v6908 = vadd.f32 %v6877, %v6906
      %v6909 = vadd.f32 %v6878, %v6906
      %v6910 = vadd.f32 %v6879, %v6906
      %v6911 = vadd.f32 %v6880, %v6906
      %v6912 = vadd.f32 %v6881, %v6906
      %v6913 = vadd.f32 %v6882, %v6906
      %v6914 = vadd.f32 %v6883, %v6906
      %v6915 = vadd.f32 %v6884, %v6906
      %v6916 = vadd.f32 %v6885, %v6906
      %v6917 = vadd.f32 %v6886, %v6906
      %v6918 = vadd.f32 %v6887, %v6906
      %v6919 = vadd.f32 %v6888, %v6906
      %v6920 = vadd.f32 %v6889, %v6906
      %v6921 = vadd.f32 %v6890, %v6906
      %v6922 = vadd.f32 %v6891, %v6906
      %v6923 = vadd.f32 %v6892, %v6906
      %v6924 = vadd.f32 %v6893, %v6906
      %v6925 = vadd.f32 %v6894, %v6906
      %v6926 = vadd.f32 %v6895, %v6906
      %v6927 = vadd.f32 %v6896, %v6906
      %v6928 = vadd.f32 %v6897, %v6906
      %v6929 = vadd.f32 %v6898, %v6906
      %v6930 = vadd.f32 %v6899, %v6906
      %v6931 = vadd.f32 %v6900, %v6906
      %v6932 = vmax.f32 %v6908, 0.0
      %v6933 = vmax.f32 %v6909, 0.0
      %v6934 = vmax.f32 %v6910, 0.0
      %v6935 = vmax.f32 %v6911, 0.0
      %v6936 = vmax.f32 %v6912, 0.0
      %v6937 = vmax.f32 %v6913, 0.0
      %v6938 = vmax.f32 %v6914, 0.0
      %v6939 = vmax.f32 %v6915, 0.0
      %v6940 = vmax.f32 %v6916, 0.0
      %v6941 = vmax.f32 %v6917, 0.0
      %v6942 = vmax.f32 %v6918, 0.0
      %v6943 = vmax.f32 %v6919, 0.0
      %v6944 = vmax.f32 %v6920, 0.0
      %v6945 = vmax.f32 %v6921, 0.0
      %v6946 = vmax.f32 %v6922, 0.0
      %v6947 = vmax.f32 %v6923, 0.0
      %v6948 = vmax.f32 %v6924, 0.0
      %v6949 = vmax.f32 %v6925, 0.0
      %v6950 = vmax.f32 %v6926, 0.0
      %v6951 = vmax.f32 %v6927, 0.0
      %v6952 = vmax.f32 %v6928, 0.0
      %v6953 = vmax.f32 %v6929, 0.0
      %v6954 = vmax.f32 %v6930, 0.0
      %v6955 = vmax.f32 %v6931, 0.0
      %6956 = vst [vmem:[%s307] sm:$0xff] %v6932
      %6957 = vst [vmem:[%s307 + $0x8] sm:$0xff] %v6933
      %6958 = vst [vmem:[%s307 + $0x10] sm:$0xff] %v6934
      %6959 = vst [vmem:[%s307 + $0x18] sm:$0xff] %v6935
      %6960 = vst [vmem:[%s307 + $0x20] sm:$0xff] %v6936
      %6961 = vst [vmem:[%s307 + $0x28] sm:$0xff] %v6937
      %6962 = vst [vmem:[%s307 + $0x30] sm:$0xff] %v6938
      %6963 = vst [vmem:[%s307 + $0x38] sm:$0xff] %v6939
      %6964 = vst [vmem:[%s307 + $0x40] sm:$0xff] %v6940
      %6965 = vst [vmem:[%s307 + $0x48] sm:$0xff] %v6941
      %6966 = vst [vmem:[%s307 + $0x50] sm:$0xff] %v6942
      %6967 = vst [vmem:[%s307 + $0x58] sm:$0xff] %v6943
      %6968 = vst [vmem:[%s307 + $0x60] sm:$0xff] %v6944
      %6969 = vst [vmem:[%s307 + $0x68] sm:$0xff] %v6945
      %6970 = vst [vmem:[%s307 + $0x70] sm:$0xff] %v6946
      %6971 = vst [vmem:[%s307 + $0x78] sm:$0xff] %v6947
      %6972 = vst [vmem:[%s307 + $0x80] sm:$0xff] %v6948
      %6973 = vst [vmem:[%s307 + $0x88] sm:$0xff] %v6949
      %6974 = vst [vmem:[%s307 + $0x90] sm:$0xff] %v6950
      %6975 = vst [vmem:[%s307 + $0x98] sm:$0xff] %v6951
      %6976 = vst [vmem:[%s307 + $0xa0] sm:$0xff] %v6952
      %6977 = vst [vmem:[%s307 + $0xa8] sm:$0xff] %v6953
      %6978 = vst [vmem:[%s307 + $0xb0] sm:$0xff] %v6954
      %6979 = vst [vmem:[%s307 + $0xb8] sm:$0xff] %v6955
      %p6980 = scmp.lt.s32.totalorder %s21, 1
      %s6981 = scalar_select %p6980, %s21, 1
      %p6982 = scmp.lt.s32.totalorder %s22, 1
      %s6983 = scalar_select %p6982, %s22, 1
      %s6984 = smul.addr %s6983, 24
      %s6985 = smul.addr %s6981, 48
      %s6986 = sadd.s32 %s6984, %s6985
      %s6987 = smul.addr %s6986, 8
      %s6988 = scalar_lea.vmem %s6, %s6987
      // Predicated region
      $region45: #{_lambda_.1} parent=43 // pred_check
        %p6989 = pneg %p187
      $region46: #{_lambda_.1} parent=43 // pred_check_branch
        %6991 = sbr.rel (%p6989) target = $region48
      $region47: #{_lambda_.1} parent=43 // pred_region
        _
      $region48: #{_lambda_.1} parent=43 // pred_fallthru
        _
    $region44: #{_lambda_.1} parent=5 // pred_fallthru
      _
    %p6992 = scmp.le.s32.totalorder 2, %s12
    // Predicated region
    $region49: #{_lambda_.1} parent=5 // pred_check
      %p6993 = pneg %p6992
    $region50: #{_lambda_.1} parent=5 // pred_check_branch
      %6995 = sbr.rel (%p6993) target = $region52
    $region51: #{_lambda_.1} parent=5 // pred_region
      %s6996 = ssub.s32 %s12, 2
      // Predicated region
      $region53: #{_lambda_.1} parent=51 // pred_check
        %p6997 = pneg %p193
      $region54: #{_lambda_.1} parent=51 // pred_check_branch
        %6999 = sbr.rel (%p6997) target = $region56
      $region55: #{_lambda_.1} parent=51 // pred_region
        %p7000 = scmp.lt.s32.totalorder %s23, 1
        %s7001 = scalar_select %p7000, %s23, 1
        %p7002 = scmp.lt.s32.totalorder %s24, 1
        %s7003 = scalar_select %p7002, %s24, 1
        %s7004 = smul.addr %s7003, 24
        %s7005 = smul.addr %s7001, 48
        %s7006 = sadd.s32 %s7004, %s7005
        %s7007 = smul.addr %s7006, 8
        %s7008 = scalar_lea.vmem %s6, %s7007
      $region56: #{_lambda_.1} parent=51 // pred_fallthru
        _
    $region52: #{_lambda_.1} parent=5 // pred_fallthru
      _
  $region6: #{_lambda_.1} parent=0 // loop_footer
    %s16 = sadd.s32 1, %s12
  $region7: #{_lambda_.1} parent=0 // loop_footer_branch
    %11 = sbr.rel target = $region3
  $region8: #{_lambda_.1} parent=0 // loop_exit
    _

</llo_original>
